<compile_context>
chip_gen: v7x
topology: tpu7x:2x2x1
jax: 0.10.0
libtpu: 0.0.40
codegen_flags: <defaults>
</compile_context>

<pallas_src>
import jax
import jax.numpy as jnp
import numpy as np
from jax.experimental import pallas as pl
from jax.experimental.pallas import tpu as pltpu


# ----------------------------------------------------------------------------
# Chip-aware sizing helpers
# ----------------------------------------------------------------------------
def _tpu_vmem_capacity_bytes():
    try:
        cap = int(pltpu.get_tpu_info().vmem_capacity_bytes)
        if cap > 0:
            return cap
    except Exception:
        pass
    return 64 * 1024 * 1024          # conservative fallback == v7x per-TC VMEM


def _use_bf16_exp():
    # bf16 EUP exists on v6e / v7x; keep the exp stream f32 on v5e (no bf16 EUP/VPU).
    try:
        dk = jax.devices()[0].device_kind.lower()
    except Exception:
        return False
    return ("v5" not in dk) and any(t in dk for t in ("v6", "v7", "7x"))


def _attn_vmem_bytes(tb, S, C, H, Tk):
    """Conservative per-grid-step VMEM estimate for the fused attention kernel."""
    per_row = (
        2 * (C * 2)          # pair-in block, bf16, double-buffered
        + 2 * (C * 2)        # out block, bf16, double-buffered
        + (4 * C) * 4        # fused q|k|v|g projection result, f32
        + 4 * (C * 2)        # q / k / v / g bf16 copies
        + C * 4              # f32 output accumulator
        + C * 6              # gated bf16 + epilogue staging
        + 3 * (Tk * 4)       # per-key-chunk logits / exp / staging, f32
    )
    resident = (
        2 * (H * S * S * 2)      # pair bias bf16 (default double-buffer accounted)
        + 2 * (C * 4 * C * 2)    # fused projection weights
        + 2 * (C * C * 2)        # output projection weights
    )
    return tb * S * per_row + resident + (1 << 20)   # + slack


def _pick_tb(S1, fits):
    """Largest divisor of S1 fitting the VMEM budget; prefer an even grid >= 2 (v7x 2 TCs)."""
    divs = [d for d in range(S1, 0, -1) if S1 % d == 0]
    for pref in (lambda d: fits(d) and (S1 // d) >= 2 and (S1 // d) % 2 == 0,
                 lambda d: fits(d) and (S1 // d) >= 2,
                 lambda d: fits(d)):
        for d in divs:
            if pref(d):
                return d
    return 1


def _pick_key_chunk(S2):
    if S2 <= 512:
        return S2
    for t in (512, 384, 256, 128):
        if S2 % t == 0:
            return t
    return S2


# ----------------------------------------------------------------------------
# Fused kernel: projection + per-head key-chunked softmax + gating + output proj
# ----------------------------------------------------------------------------
def _make_attn_kernel(H, D, Tk, nkc, use_bf16_exp):
    f32 = jnp.float32
    bf16 = jnp.bfloat16

    def kernel(x_ref, wcat_ref, bias_ref, mask_ref, wo_ref, out_ref):
        TB, S, C = x_ref.shape

        # ---- fused q|k|v|gate projection: one MXU matmul vs. resident (C, 4C) weights ----
        xf = x_ref[...].reshape(TB * S, C)
        y = jnp.dot(xf, wcat_ref[...], preferred_element_type=f32)      # (TB*S, 4C) f32
        q = y[:, 0 * C:1 * C].astype(bf16).reshape(TB, S, C)            # 1/sqrt(D) folded in
        k = y[:, 1 * C:2 * C].astype(bf16).reshape(TB, S, C)
        v = y[:, 2 * C:3 * C].astype(bf16).reshape(TB, S, C)
        g = y[:, 3 * C:4 * C].astype(bf16).reshape(TB, S, C)

        # ---- hoisted key-mask additive term: one select, reused by every head / chunk ----
        mask_add = jnp.where(mask_ref[...].astype(f32) > 0.0,
                             jnp.float32(0.0), jnp.float32(-1e9))        # (TB, 1, S)

        wo = wo_ref[...]                                                 # (C, C) bf16 resident
        out_acc = jnp.zeros((TB * S, C), dtype=f32)

        for h in range(H):                                               # static head unroll
            lo, hi = h * D, (h + 1) * D
            qh = q[:, :, lo:hi]

            def logits_chunk(kc, _qh=qh, _lo=lo, _hi=hi, _h=h):
                ks = slice(kc * Tk, (kc + 1) * Tk)
                s = jnp.einsum('bqd,bkd->bqk', _qh, k[:, ks, _lo:_hi],
                               preferred_element_type=f32)               # (TB, S, Tk)
                s = (s + bias_ref[_h, :, ks].astype(f32)[None, :, :]
                       + mask_add[:, :, ks])
                return s, v[:, ks, _lo:_hi]

            # ---- flash-style online softmax over key chunks ----
            s0, v0 = logits_chunk(0)
            m = jnp.max(s0, axis=-1, keepdims=True)
            e0 = s0 - m
            p0 = jnp.exp(e0.astype(bf16)) if use_bf16_exp else jnp.exp(e0)
            l = jnp.sum(p0.astype(f32), axis=-1, keepdims=True)
            acc = jnp.einsum('bqk,bkd->bqd', p0.astype(bf16), v0,
                             preferred_element_type=f32)                 # (TB, S, D) f32
            for kc in range(1, nkc):
                sc, vc = logits_chunk(kc)
                m_new = jnp.maximum(m, jnp.max(sc, axis=-1, keepdims=True))
                alpha = jnp.exp(m - m_new)
                ec = sc - m_new
                pc = jnp.exp(ec.astype(bf16)) if use_bf16_exp else jnp.exp(ec)
                l = alpha * l + jnp.sum(pc.astype(f32), axis=-1, keepdims=True)
                acc = alpha * acc + jnp.einsum('bqk,bkd->bqd', pc.astype(bf16), vc,
                                               preferred_element_type=f32)
                m = m_new

            inv = pl.reciprocal(l, approx=True)                          # EUP slot, ~free
            gate_h = jax.nn.sigmoid(g[:, :, lo:hi].astype(f32))
            wa_h = (acc * inv * gate_h).reshape(TB * S, D).astype(bf16)
            # Per-head gated epilogue accumulate: no cross-lane concat, bounded live ranges.
            out_acc = out_acc + jnp.dot(wa_h, wo[lo:hi, :],
                                        preferred_element_type=f32)

        out_ref[...] = out_acc.reshape(TB, S, C).astype(out_ref.dtype)

    return kernel


def grid_self_attention(pair, mask, wq, wk, wv, wb, wg, wo, *, num_head):
    """pair: (S, S, C); mask: (S, S) with 1 = keep key; weights in torch (out, in) layout."""
    S1, S2, C = pair.shape
    assert S1 == S2, "pair-bias broadcast (bias[h,q,k] added to logits[b,q,k]) assumes S1 == S2"
    H = num_head
    D = C // H
    dt = jnp.bfloat16
    f32 = jnp.float32

    # Fused projection RHS: [wq * 1/sqrt(D) | wk | wv | wg]  -> (C, 4C) bf16, VMEM-resident.
    scale = 1.0 / (D ** 0.5)
    w_cat = jnp.concatenate(
        [wq.astype(f32).T * scale, wk.astype(f32).T, wv.astype(f32).T, wg.astype(f32).T],
        axis=1).astype(dt)
    wo_t = wo.astype(dt).T                                               # (C, C)

    # Pair-bias projection: tiny (<<1% of flops).  Plain XLA writes (H, S, S) directly;
    # no 128-lane padded HBM write and no separate relayout pass.
    bias = jnp.einsum('qkc,hc->hqk', pair.astype(dt), wb.astype(dt),
                      preferred_element_type=f32).astype(dt)             # (H, S1, S2)

    pair_b = pair.astype(dt)
    mask3 = mask.reshape(S1, 1, S2)            # (S,1,S) keeps any TB legal for (8,128) rule

    # Chip-aware tiling.
    cap = _tpu_vmem_capacity_bytes()
    budget = int(cap * 0.55)
    Tk = _pick_key_chunk(S2)
    nkc = S2 // Tk
    TB = _pick_tb(S1, lambda d: _attn_vmem_bytes(d, S2, C, H, Tk) <= budget)
    vmem_limit = int(min(cap * 0.8,
                         max(_attn_vmem_bytes(TB, S2, C, H, Tk) * 1.3, 32 * 1024 * 1024)))

    kernel = _make_attn_kernel(H=H, D=D, Tk=Tk, nkc=nkc, use_bf16_exp=_use_bf16_exp())

    out = pl.pallas_call(
        kernel,
        grid=(S1 // TB,),
        in_specs=[
            pl.BlockSpec((TB, S2, C), lambda i: (i, 0, 0)),    # pair rows (read once)
            pl.BlockSpec((C, 4 * C), lambda i: (0, 0)),        # fused qkvg weights, resident
            pl.BlockSpec((H, S1, S2), lambda i: (0, 0, 0)),    # pair bias, resident
            pl.BlockSpec((TB, 1, S2), lambda i: (i, 0, 0)),    # key-mask rows
            pl.BlockSpec((C, C), lambda i: (0, 0)),            # wo^T, resident
        ],
        out_specs=pl.BlockSpec((TB, S2, C), lambda i: (i, 0, 0)),
        out_shape=jax.ShapeDtypeStruct((S1, S2, C), dt),
        compiler_params=pltpu.CompilerParams(
            dimension_semantics=("parallel",),
            vmem_limit_bytes=vmem_limit),
    )(pair_b, w_cat, bias, mask3, wo_t)
    return out


# ----------------------------------------------------------------------------
# Pure-JAX reference (mirrors the module's math; bf16 projection round-trip,
# f32 attention math -- same precision policy as the kernel)
# ----------------------------------------------------------------------------
def reference(pair, mask, wq, wk, wv, wb, wg, wo, *, num_head):
    S1, S2, C = pair.shape
    H = num_head
    D = C // H
    f32 = jnp.float32
    x = pair.astype(f32)

    def proj(w):
        return (x @ w.astype(f32).T).astype(jnp.bfloat16).astype(f32)

    q, k, v, g = proj(wq), proj(wk), proj(wv), proj(wg)
    bias = proj(wb).transpose(2, 0, 1)                                   # (H, S, S)

    def heads(t):
        return t.reshape(S1, S2, H, D).transpose(0, 2, 1, 3)

    qh, kh, vh = heads(q), heads(k), heads(v)
    logits = jnp.einsum('bhqd,bhkd->bhqk', qh * (D ** -0.5), kh) + bias[None]
    keep = mask.astype(f32)[:, None, None, :] > 0
    logits = jnp.where(keep, logits, f32(-1e9))
    w = jax.nn.softmax(logits, axis=-1)
    wa = jnp.einsum('bhqk,bhkd->bhqd', w, vh)
    wa = wa.transpose(0, 2, 1, 3).reshape(S1, S2, C)                     # 'b h n d -> b n (h d)'
    return (wa * jax.nn.sigmoid(g)) @ wo.astype(f32).T


if __name__ == "__main__":
    S = 16          # seq_len (num_res)
    C = 128         # c_pair (module default)
    H = 4           # num_head (module default)

    key = jax.random.PRNGKey(0)
    ks = jax.random.split(key, 9)
    pair = jax.random.normal(ks[0], (S, S, C), jnp.float32).astype(jnp.bfloat16)
    mask = (jax.random.uniform(ks[1], (S, S)) > 0.2).astype(jnp.bfloat16)

    w_scale = 1.0 / (C ** 0.5)

    def mkw(k_, shape):  # torch Linear layout (out, in), bf16 weights
        return (jax.random.normal(k_, shape, jnp.float32) * w_scale).astype(jnp.bfloat16)

    wq = mkw(ks[2], (C, C))
    wk = mkw(ks[3], (C, C))
    wv = mkw(ks[4], (C, C))
    wg = mkw(ks[5], (C, C))
    wo = mkw(ks[6], (C, C))
    wb = mkw(ks[7], (H, C))   # pair_bias_projection

    out = grid_self_attention(pair, mask, wq, wk, wv, wb, wg, wo, num_head=H)
    out = jax.block_until_ready(out)

    ref = reference(pair, mask, wq, wk, wv, wb, wg, wo, num_head=H)
    np.testing.assert_allclose(np.asarray(out.astype(jnp.float32)),
                               np.asarray(ref),
                               rtol=2e-2, atol=2e-2)
    print("KERNEL_OK")
</pallas_src>

<mosaic_0001>
module attributes {stable_mosaic.version = 11 : i64} {
  func.func @kernel(%arg0: i32, %arg1: memref<8x16x128xbf16, #tpu.memory_space<vmem>>, %arg2: memref<128x512xbf16, #tpu.memory_space<vmem>>, %arg3: memref<4x16x16xbf16, #tpu.memory_space<vmem>>, %arg4: memref<8x1x16xbf16, #tpu.memory_space<vmem>>, %arg5: memref<128x128xbf16, #tpu.memory_space<vmem>>, %arg6: memref<8x16x128xbf16, #tpu.memory_space<vmem>>) attributes {dimension_semantics = [#tpu.dimension_semantics<parallel>], iteration_bounds = array<i64: 2>, scalar_prefetch = 0 : i64, scratch_operands = 0 : i64, tpu.core_type = #tpu.core_type<tc>, window_params = [{transform_indices = @transform_0, window_bounds = array<i64: 8, 16, 128>}, {pipeline_mode = #tpu.pipeline_mode<synchronous>, transform_indices = @transform_1, window_bounds = array<i64: 128, 512>}, {pipeline_mode = #tpu.pipeline_mode<synchronous>, transform_indices = @transform_2, window_bounds = array<i64: 4, 16, 16>}, {transform_indices = @transform_3, window_bounds = array<i64: 8, 1, 16>}, {pipeline_mode = #tpu.pipeline_mode<synchronous>, transform_indices = @transform_4, window_bounds = array<i64: 128, 128>}, {transform_indices = @transform_5, window_bounds = array<i64: 8, 16, 128>}]} {
    %c0 = arith.constant 0 : index
    %c0_0 = arith.constant 0 : index
    %c0_1 = arith.constant 0 : index
    %0 = vector.load %arg1[%c0, %c0_0, %c0_1] : memref<8x16x128xbf16, #tpu.memory_space<vmem>>, vector<8x16x128xbf16>
    %1 = vector.shape_cast %0 : vector<8x16x128xbf16> to vector<128x128xbf16>
    %c0_2 = arith.constant 0 : index
    %c0_3 = arith.constant 0 : index
    %2 = vector.load %arg2[%c0_2, %c0_3] : memref<128x512xbf16, #tpu.memory_space<vmem>>, vector<128x512xbf16>
    %cst = arith.constant dense<0.000000e+00> : vector<128x512xf32>
    %3 = tpu.matmul %1, %2, %cst {dimension_numbers = #tpu.dot_dimension_numbers<[1], [0], [0], [1], [0, 0, 1, 1], [], []>} : vector<128x128xbf16>, vector<128x512xbf16>, vector<128x512xf32> -> vector<128x512xf32>
    %4 = vector.extract_strided_slice %3 {offsets = [0, 0], sizes = [128, 128], strides = [1, 1]} : vector<128x512xf32> to vector<128x128xf32>
    %5 = arith.truncf %4 : vector<128x128xf32> to vector<128x128xbf16>
    %6 = vector.shape_cast %5 : vector<128x128xbf16> to vector<8x16x128xbf16>
    %7 = vector.extract_strided_slice %3 {offsets = [0, 128], sizes = [128, 128], strides = [1, 1]} : vector<128x512xf32> to vector<128x128xf32>
    %8 = arith.truncf %7 : vector<128x128xf32> to vector<128x128xbf16>
    %9 = vector.shape_cast %8 : vector<128x128xbf16> to vector<8x16x128xbf16>
    %10 = vector.extract_strided_slice %3 {offsets = [0, 256], sizes = [128, 128], strides = [1, 1]} : vector<128x512xf32> to vector<128x128xf32>
    %11 = arith.truncf %10 : vector<128x128xf32> to vector<128x128xbf16>
    %12 = vector.shape_cast %11 : vector<128x128xbf16> to vector<8x16x128xbf16>
    %13 = vector.extract_strided_slice %3 {offsets = [0, 384], sizes = [128, 128], strides = [1, 1]} : vector<128x512xf32> to vector<128x128xf32>
    %14 = arith.truncf %13 : vector<128x128xf32> to vector<128x128xbf16>
    %15 = vector.shape_cast %14 : vector<128x128xbf16> to vector<8x16x128xbf16>
    %c0_4 = arith.constant 0 : index
    %c0_5 = arith.constant 0 : index
    %c0_6 = arith.constant 0 : index
    %16 = vector.load %arg4[%c0_4, %c0_5, %c0_6] : memref<8x1x16xbf16, #tpu.memory_space<vmem>>, vector<8x1x16xbf16>
    %17 = arith.extf %16 : vector<8x1x16xbf16> to vector<8x1x16xf32>
    %cst_7 = arith.constant 0.000000e+00 : f32
    %18 = vector.broadcast %cst_7 : f32 to vector<8x1x16xf32>
    %19 = arith.cmpf ogt, %17, %18 : vector<8x1x16xf32>
    %cst_8 = arith.constant 0.000000e+00 : f32
    %cst_9 = arith.constant -1.000000e+09 : f32
    %20 = vector.broadcast %cst_8 : f32 to vector<8x1x16xf32>
    %21 = vector.broadcast %cst_9 : f32 to vector<8x1x16xf32>
    %22 = arith.select %19, %20, %21 : vector<8x1x16xi1>, vector<8x1x16xf32>
    %c0_10 = arith.constant 0 : index
    %c0_11 = arith.constant 0 : index
    %23 = vector.load %arg5[%c0_10, %c0_11] : memref<128x128xbf16, #tpu.memory_space<vmem>>, vector<128x128xbf16>
    %cst_12 = arith.constant 0.000000e+00 : f32
    %24 = vector.broadcast %cst_12 : f32 to vector<128x128xf32>
    %25 = vector.extract_strided_slice %6 {offsets = [0, 0, 0], sizes = [8, 16, 32], strides = [1, 1, 1]} : vector<8x16x128xbf16> to vector<8x16x32xbf16>
    %26 = vector.extract_strided_slice %9 {offsets = [0, 0, 0], sizes = [8, 16, 32], strides = [1, 1, 1]} : vector<8x16x128xbf16> to vector<8x16x32xbf16>
    "tpu.trace_start"() <{level = 10 : i32, message = "bqd,bkd->bqk"}> : () -> ()
    %cst_13 = arith.constant dense<0.000000e+00> : vector<8x16x16xf32>
    %27 = tpu.matmul %25, %26, %cst_13 {dimension_numbers = #tpu.dot_dimension_numbers<[2], [2], [1], [1], [0, 0, 0, 1, 1, 1], [0], [0]>} : vector<8x16x32xbf16>, vector<8x16x32xbf16>, vector<8x16x16xf32> -> vector<8x16x16xf32>
    "tpu.trace_stop"() : () -> ()
    %c0_14 = arith.constant 0 : index
    %c0_15 = arith.constant 0 : index
    %c0_16 = arith.constant 0 : index
    %28 = vector.load %arg3[%c0_14, %c0_15, %c0_16] : memref<4x16x16xbf16, #tpu.memory_space<vmem>>, vector<1x16x16xbf16>
    %29 = vector.shape_cast %28 : vector<1x16x16xbf16> to vector<16x16xbf16>
    %30 = arith.extf %29 : vector<16x16xbf16> to vector<16x16xf32>
    %31 = vector.shape_cast %30 : vector<16x16xf32> to vector<1x16x16xf32>
    %32 = vector.broadcast %31 : vector<1x16x16xf32> to vector<8x16x16xf32>
    %33 = arith.addf %27, %32 : vector<8x16x16xf32>
    %34 = vector.broadcast %22 : vector<8x1x16xf32> to vector<8x16x16xf32>
    %35 = arith.addf %33, %34 : vector<8x16x16xf32>
    %36 = vector.extract_strided_slice %12 {offsets = [0, 0, 0], sizes = [8, 16, 32], strides = [1, 1, 1]} : vector<8x16x128xbf16> to vector<8x16x32xbf16>
    %cst_17 = arith.constant dense<0xFF800000> : vector<8x16xf32>
    %37 = vector.multi_reduction <maximumf>, %35, %cst_17 [2] : vector<8x16x16xf32> to vector<8x16xf32>
    %38 = vector.shape_cast %37 : vector<8x16xf32> to vector<8x16x1xf32>
    %39 = vector.broadcast %38 : vector<8x16x1xf32> to vector<8x16x16xf32>
    %40 = arith.subf %35, %39 : vector<8x16x16xf32>
    %41 = math.exp %40 : vector<8x16x16xf32>
    %cst_18 = arith.constant dense<0.000000e+00> : vector<8x16xf32>
    %42 = vector.multi_reduction <add>, %41, %cst_18 [2] : vector<8x16x16xf32> to vector<8x16xf32>
    %43 = vector.shape_cast %42 : vector<8x16xf32> to vector<8x16x1xf32>
    %44 = arith.truncf %41 : vector<8x16x16xf32> to vector<8x16x16xbf16>
    "tpu.trace_start"() <{level = 10 : i32, message = "bqk,bkd->bqd"}> : () -> ()
    %cst_19 = arith.constant dense<0.000000e+00> : vector<8x16x32xf32>
    %45 = tpu.matmul %44, %36, %cst_19 {dimension_numbers = #tpu.dot_dimension_numbers<[2], [1], [1], [2], [0, 0, 0, 1, 1, 2], [0], [0]>} : vector<8x16x16xbf16>, vector<8x16x32xbf16>, vector<8x16x32xf32> -> vector<8x16x32xf32>
    "tpu.trace_stop"() : () -> ()
    %46 = tpu.reciprocal %43 {approx = true} : vector<8x16x1xf32> -> vector<8x16x1xf32>
    %47 = vector.extract_strided_slice %15 {offsets = [0, 0, 0], sizes = [8, 16, 32], strides = [1, 1, 1]} : vector<8x16x128xbf16> to vector<8x16x32xbf16>
    %48 = arith.extf %47 : vector<8x16x32xbf16> to vector<8x16x32xf32>
    %49 = arith.negf %48 : vector<8x16x32xf32>
    %50 = math.exp %49 : vector<8x16x32xf32>
    %cst_20 = arith.constant 1.000000e+00 : f32
    %51 = vector.broadcast %cst_20 : f32 to vector<8x16x32xf32>
    %52 = arith.addf %51, %50 : vector<8x16x32xf32>
    %53 = arith.divf %51, %52 : vector<8x16x32xf32>
    %54 = vector.broadcast %46 : vector<8x16x1xf32> to vector<8x16x32xf32>
    %55 = arith.mulf %45, %54 : vector<8x16x32xf32>
    %56 = arith.mulf %55, %53 : vector<8x16x32xf32>
    %57 = vector.shape_cast %56 : vector<8x16x32xf32> to vector<128x32xf32>
    %58 = arith.truncf %57 : vector<128x32xf32> to vector<128x32xbf16>
    %59 = vector.extract_strided_slice %23 {offsets = [0, 0], sizes = [32, 128], strides = [1, 1]} : vector<128x128xbf16> to vector<32x128xbf16>
    %cst_21 = arith.constant dense<0.000000e+00> : vector<128x128xf32>
    %60 = tpu.matmul %58, %59, %cst_21 {dimension_numbers = #tpu.dot_dimension_numbers<[1], [0], [0], [1], [0, 0, 1, 1], [], []>} : vector<128x32xbf16>, vector<32x128xbf16>, vector<128x128xf32> -> vector<128x128xf32>
    %61 = arith.addf %24, %60 : vector<128x128xf32>
    %62 = vector.extract_strided_slice %6 {offsets = [0, 0, 32], sizes = [8, 16, 32], strides = [1, 1, 1]} : vector<8x16x128xbf16> to vector<8x16x32xbf16>
    %63 = vector.extract_strided_slice %9 {offsets = [0, 0, 32], sizes = [8, 16, 32], strides = [1, 1, 1]} : vector<8x16x128xbf16> to vector<8x16x32xbf16>
    "tpu.trace_start"() <{level = 10 : i32, message = "bqd,bkd->bqk"}> : () -> ()
    %cst_22 = arith.constant dense<0.000000e+00> : vector<8x16x16xf32>
    %64 = tpu.matmul %62, %63, %cst_22 {dimension_numbers = #tpu.dot_dimension_numbers<[2], [2], [1], [1], [0, 0, 0, 1, 1, 1], [0], [0]>} : vector<8x16x32xbf16>, vector<8x16x32xbf16>, vector<8x16x16xf32> -> vector<8x16x16xf32>
    "tpu.trace_stop"() : () -> ()
    %c1 = arith.constant 1 : index
    %c0_23 = arith.constant 0 : index
    %c0_24 = arith.constant 0 : index
    %65 = vector.load %arg3[%c1, %c0_23, %c0_24] : memref<4x16x16xbf16, #tpu.memory_space<vmem>>, vector<1x16x16xbf16>
    %66 = vector.shape_cast %65 : vector<1x16x16xbf16> to vector<16x16xbf16>
    %67 = arith.extf %66 : vector<16x16xbf16> to vector<16x16xf32>
    %68 = vector.shape_cast %67 : vector<16x16xf32> to vector<1x16x16xf32>
    %69 = vector.broadcast %68 : vector<1x16x16xf32> to vector<8x16x16xf32>
    %70 = arith.addf %64, %69 : vector<8x16x16xf32>
    %71 = vector.broadcast %22 : vector<8x1x16xf32> to vector<8x16x16xf32>
    %72 = arith.addf %70, %71 : vector<8x16x16xf32>
    %73 = vector.extract_strided_slice %12 {offsets = [0, 0, 32], sizes = [8, 16, 32], strides = [1, 1, 1]} : vector<8x16x128xbf16> to vector<8x16x32xbf16>
    %cst_25 = arith.constant dense<0xFF800000> : vector<8x16xf32>
    %74 = vector.multi_reduction <maximumf>, %72, %cst_25 [2] : vector<8x16x16xf32> to vector<8x16xf32>
    %75 = vector.shape_cast %74 : vector<8x16xf32> to vector<8x16x1xf32>
    %76 = vector.broadcast %75 : vector<8x16x1xf32> to vector<8x16x16xf32>
    %77 = arith.subf %72, %76 : vector<8x16x16xf32>
    %78 = math.exp %77 : vector<8x16x16xf32>
    %cst_26 = arith.constant dense<0.000000e+00> : vector<8x16xf32>
    %79 = vector.multi_reduction <add>, %78, %cst_26 [2] : vector<8x16x16xf32> to vector<8x16xf32>
    %80 = vector.shape_cast %79 : vector<8x16xf32> to vector<8x16x1xf32>
    %81 = arith.truncf %78 : vector<8x16x16xf32> to vector<8x16x16xbf16>
    "tpu.trace_start"() <{level = 10 : i32, message = "bqk,bkd->bqd"}> : () -> ()
    %cst_27 = arith.constant dense<0.000000e+00> : vector<8x16x32xf32>
    %82 = tpu.matmul %81, %73, %cst_27 {dimension_numbers = #tpu.dot_dimension_numbers<[2], [1], [1], [2], [0, 0, 0, 1, 1, 2], [0], [0]>} : vector<8x16x16xbf16>, vector<8x16x32xbf16>, vector<8x16x32xf32> -> vector<8x16x32xf32>
    "tpu.trace_stop"() : () -> ()
    %83 = tpu.reciprocal %80 {approx = true} : vector<8x16x1xf32> -> vector<8x16x1xf32>
    %84 = vector.extract_strided_slice %15 {offsets = [0, 0, 32], sizes = [8, 16, 32], strides = [1, 1, 1]} : vector<8x16x128xbf16> to vector<8x16x32xbf16>
    %85 = arith.extf %84 : vector<8x16x32xbf16> to vector<8x16x32xf32>
    %86 = arith.negf %85 : vector<8x16x32xf32>
    %87 = math.exp %86 : vector<8x16x32xf32>
    %cst_28 = arith.constant 1.000000e+00 : f32
    %88 = vector.broadcast %cst_28 : f32 to vector<8x16x32xf32>
    %89 = arith.addf %88, %87 : vector<8x16x32xf32>
    %90 = arith.divf %88, %89 : vector<8x16x32xf32>
    %91 = vector.broadcast %83 : vector<8x16x1xf32> to vector<8x16x32xf32>
    %92 = arith.mulf %82, %91 : vector<8x16x32xf32>
    %93 = arith.mulf %92, %90 : vector<8x16x32xf32>
    %94 = vector.shape_cast %93 : vector<8x16x32xf32> to vector<128x32xf32>
    %95 = arith.truncf %94 : vector<128x32xf32> to vector<128x32xbf16>
    %96 = vector.extract_strided_slice %23 {offsets = [32, 0], sizes = [32, 128], strides = [1, 1]} : vector<128x128xbf16> to vector<32x128xbf16>
    %cst_29 = arith.constant dense<0.000000e+00> : vector<128x128xf32>
    %97 = tpu.matmul %95, %96, %cst_29 {dimension_numbers = #tpu.dot_dimension_numbers<[1], [0], [0], [1], [0, 0, 1, 1], [], []>} : vector<128x32xbf16>, vector<32x128xbf16>, vector<128x128xf32> -> vector<128x128xf32>
    %98 = arith.addf %61, %97 : vector<128x128xf32>
    %99 = vector.extract_strided_slice %6 {offsets = [0, 0, 64], sizes = [8, 16, 32], strides = [1, 1, 1]} : vector<8x16x128xbf16> to vector<8x16x32xbf16>
    %100 = vector.extract_strided_slice %9 {offsets = [0, 0, 64], sizes = [8, 16, 32], strides = [1, 1, 1]} : vector<8x16x128xbf16> to vector<8x16x32xbf16>
    "tpu.trace_start"() <{level = 10 : i32, message = "bqd,bkd->bqk"}> : () -> ()
    %cst_30 = arith.constant dense<0.000000e+00> : vector<8x16x16xf32>
    %101 = tpu.matmul %99, %100, %cst_30 {dimension_numbers = #tpu.dot_dimension_numbers<[2], [2], [1], [1], [0, 0, 0, 1, 1, 1], [0], [0]>} : vector<8x16x32xbf16>, vector<8x16x32xbf16>, vector<8x16x16xf32> -> vector<8x16x16xf32>
    "tpu.trace_stop"() : () -> ()
    %c2 = arith.constant 2 : index
    %c0_31 = arith.constant 0 : index
    %c0_32 = arith.constant 0 : index
    %102 = vector.load %arg3[%c2, %c0_31, %c0_32] : memref<4x16x16xbf16, #tpu.memory_space<vmem>>, vector<1x16x16xbf16>
    %103 = vector.shape_cast %102 : vector<1x16x16xbf16> to vector<16x16xbf16>
    %104 = arith.extf %103 : vector<16x16xbf16> to vector<16x16xf32>
    %105 = vector.shape_cast %104 : vector<16x16xf32> to vector<1x16x16xf32>
    %106 = vector.broadcast %105 : vector<1x16x16xf32> to vector<8x16x16xf32>
    %107 = arith.addf %101, %106 : vector<8x16x16xf32>
    %108 = vector.broadcast %22 : vector<8x1x16xf32> to vector<8x16x16xf32>
    %109 = arith.addf %107, %108 : vector<8x16x16xf32>
    %110 = vector.extract_strided_slice %12 {offsets = [0, 0, 64], sizes = [8, 16, 32], strides = [1, 1, 1]} : vector<8x16x128xbf16> to vector<8x16x32xbf16>
    %cst_33 = arith.constant dense<0xFF800000> : vector<8x16xf32>
    %111 = vector.multi_reduction <maximumf>, %109, %cst_33 [2] : vector<8x16x16xf32> to vector<8x16xf32>
    %112 = vector.shape_cast %111 : vector<8x16xf32> to vector<8x16x1xf32>
    %113 = vector.broadcast %112 : vector<8x16x1xf32> to vector<8x16x16xf32>
    %114 = arith.subf %109, %113 : vector<8x16x16xf32>
    %115 = math.exp %114 : vector<8x16x16xf32>
    %cst_34 = arith.constant dense<0.000000e+00> : vector<8x16xf32>
    %116 = vector.multi_reduction <add>, %115, %cst_34 [2] : vector<8x16x16xf32> to vector<8x16xf32>
    %117 = vector.shape_cast %116 : vector<8x16xf32> to vector<8x16x1xf32>
    %118 = arith.truncf %115 : vector<8x16x16xf32> to vector<8x16x16xbf16>
    "tpu.trace_start"() <{level = 10 : i32, message = "bqk,bkd->bqd"}> : () -> ()
    %cst_35 = arith.constant dense<0.000000e+00> : vector<8x16x32xf32>
    %119 = tpu.matmul %118, %110, %cst_35 {dimension_numbers = #tpu.dot_dimension_numbers<[2], [1], [1], [2], [0, 0, 0, 1, 1, 2], [0], [0]>} : vector<8x16x16xbf16>, vector<8x16x32xbf16>, vector<8x16x32xf32> -> vector<8x16x32xf32>
    "tpu.trace_stop"() : () -> ()
    %120 = tpu.reciprocal %117 {approx = true} : vector<8x16x1xf32> -> vector<8x16x1xf32>
    %121 = vector.extract_strided_slice %15 {offsets = [0, 0, 64], sizes = [8, 16, 32], strides = [1, 1, 1]} : vector<8x16x128xbf16> to vector<8x16x32xbf16>
    %122 = arith.extf %121 : vector<8x16x32xbf16> to vector<8x16x32xf32>
    %123 = arith.negf %122 : vector<8x16x32xf32>
    %124 = math.exp %123 : vector<8x16x32xf32>
    %cst_36 = arith.constant 1.000000e+00 : f32
    %125 = vector.broadcast %cst_36 : f32 to vector<8x16x32xf32>
    %126 = arith.addf %125, %124 : vector<8x16x32xf32>
    %127 = arith.divf %125, %126 : vector<8x16x32xf32>
    %128 = vector.broadcast %120 : vector<8x16x1xf32> to vector<8x16x32xf32>
    %129 = arith.mulf %119, %128 : vector<8x16x32xf32>
    %130 = arith.mulf %129, %127 : vector<8x16x32xf32>
    %131 = vector.shape_cast %130 : vector<8x16x32xf32> to vector<128x32xf32>
    %132 = arith.truncf %131 : vector<128x32xf32> to vector<128x32xbf16>
    %133 = vector.extract_strided_slice %23 {offsets = [64, 0], sizes = [32, 128], strides = [1, 1]} : vector<128x128xbf16> to vector<32x128xbf16>
    %cst_37 = arith.constant dense<0.000000e+00> : vector<128x128xf32>
    %134 = tpu.matmul %132, %133, %cst_37 {dimension_numbers = #tpu.dot_dimension_numbers<[1], [0], [0], [1], [0, 0, 1, 1], [], []>} : vector<128x32xbf16>, vector<32x128xbf16>, vector<128x128xf32> -> vector<128x128xf32>
    %135 = arith.addf %98, %134 : vector<128x128xf32>
    %136 = vector.extract_strided_slice %6 {offsets = [0, 0, 96], sizes = [8, 16, 32], strides = [1, 1, 1]} : vector<8x16x128xbf16> to vector<8x16x32xbf16>
    %137 = vector.extract_strided_slice %9 {offsets = [0, 0, 96], sizes = [8, 16, 32], strides = [1, 1, 1]} : vector<8x16x128xbf16> to vector<8x16x32xbf16>
    "tpu.trace_start"() <{level = 10 : i32, message = "bqd,bkd->bqk"}> : () -> ()
    %cst_38 = arith.constant dense<0.000000e+00> : vector<8x16x16xf32>
    %138 = tpu.matmul %136, %137, %cst_38 {dimension_numbers = #tpu.dot_dimension_numbers<[2], [2], [1], [1], [0, 0, 0, 1, 1, 1], [0], [0]>} : vector<8x16x32xbf16>, vector<8x16x32xbf16>, vector<8x16x16xf32> -> vector<8x16x16xf32>
    "tpu.trace_stop"() : () -> ()
    %c3 = arith.constant 3 : index
    %c0_39 = arith.constant 0 : index
    %c0_40 = arith.constant 0 : index
    %139 = vector.load %arg3[%c3, %c0_39, %c0_40] : memref<4x16x16xbf16, #tpu.memory_space<vmem>>, vector<1x16x16xbf16>
    %140 = vector.shape_cast %139 : vector<1x16x16xbf16> to vector<16x16xbf16>
    %141 = arith.extf %140 : vector<16x16xbf16> to vector<16x16xf32>
    %142 = vector.shape_cast %141 : vector<16x16xf32> to vector<1x16x16xf32>
    %143 = vector.broadcast %142 : vector<1x16x16xf32> to vector<8x16x16xf32>
    %144 = arith.addf %138, %143 : vector<8x16x16xf32>
    %145 = vector.broadcast %22 : vector<8x1x16xf32> to vector<8x16x16xf32>
    %146 = arith.addf %144, %145 : vector<8x16x16xf32>
    %147 = vector.extract_strided_slice %12 {offsets = [0, 0, 96], sizes = [8, 16, 32], strides = [1, 1, 1]} : vector<8x16x128xbf16> to vector<8x16x32xbf16>
    %cst_41 = arith.constant dense<0xFF800000> : vector<8x16xf32>
    %148 = vector.multi_reduction <maximumf>, %146, %cst_41 [2] : vector<8x16x16xf32> to vector<8x16xf32>
    %149 = vector.shape_cast %148 : vector<8x16xf32> to vector<8x16x1xf32>
    %150 = vector.broadcast %149 : vector<8x16x1xf32> to vector<8x16x16xf32>
    %151 = arith.subf %146, %150 : vector<8x16x16xf32>
    %152 = math.exp %151 : vector<8x16x16xf32>
    %cst_42 = arith.constant dense<0.000000e+00> : vector<8x16xf32>
    %153 = vector.multi_reduction <add>, %152, %cst_42 [2] : vector<8x16x16xf32> to vector<8x16xf32>
    %154 = vector.shape_cast %153 : vector<8x16xf32> to vector<8x16x1xf32>
    %155 = arith.truncf %152 : vector<8x16x16xf32> to vector<8x16x16xbf16>
    "tpu.trace_start"() <{level = 10 : i32, message = "bqk,bkd->bqd"}> : () -> ()
    %cst_43 = arith.constant dense<0.000000e+00> : vector<8x16x32xf32>
    %156 = tpu.matmul %155, %147, %cst_43 {dimension_numbers = #tpu.dot_dimension_numbers<[2], [1], [1], [2], [0, 0, 0, 1, 1, 2], [0], [0]>} : vector<8x16x16xbf16>, vector<8x16x32xbf16>, vector<8x16x32xf32> -> vector<8x16x32xf32>
    "tpu.trace_stop"() : () -> ()
    %157 = tpu.reciprocal %154 {approx = true} : vector<8x16x1xf32> -> vector<8x16x1xf32>
    %158 = vector.extract_strided_slice %15 {offsets = [0, 0, 96], sizes = [8, 16, 32], strides = [1, 1, 1]} : vector<8x16x128xbf16> to vector<8x16x32xbf16>
    %159 = arith.extf %158 : vector<8x16x32xbf16> to vector<8x16x32xf32>
    %160 = arith.negf %159 : vector<8x16x32xf32>
    %161 = math.exp %160 : vector<8x16x32xf32>
    %cst_44 = arith.constant 1.000000e+00 : f32
    %162 = vector.broadcast %cst_44 : f32 to vector<8x16x32xf32>
    %163 = arith.addf %162, %161 : vector<8x16x32xf32>
    %164 = arith.divf %162, %163 : vector<8x16x32xf32>
    %165 = vector.broadcast %157 : vector<8x16x1xf32> to vector<8x16x32xf32>
    %166 = arith.mulf %156, %165 : vector<8x16x32xf32>
    %167 = arith.mulf %166, %164 : vector<8x16x32xf32>
    %168 = vector.shape_cast %167 : vector<8x16x32xf32> to vector<128x32xf32>
    %169 = arith.truncf %168 : vector<128x32xf32> to vector<128x32xbf16>
    %170 = vector.extract_strided_slice %23 {offsets = [96, 0], sizes = [32, 128], strides = [1, 1]} : vector<128x128xbf16> to vector<32x128xbf16>
    %cst_45 = arith.constant dense<0.000000e+00> : vector<128x128xf32>
    %171 = tpu.matmul %169, %170, %cst_45 {dimension_numbers = #tpu.dot_dimension_numbers<[1], [0], [0], [1], [0, 0, 1, 1], [], []>} : vector<128x32xbf16>, vector<32x128xbf16>, vector<128x128xf32> -> vector<128x128xf32>
    %172 = arith.addf %135, %171 : vector<128x128xf32>
    %173 = vector.shape_cast %172 : vector<128x128xf32> to vector<8x16x128xf32>
    %174 = arith.truncf %173 : vector<8x16x128xf32> to vector<8x16x128xbf16>
    %c0_46 = arith.constant 0 : index
    %c0_47 = arith.constant 0 : index
    %c0_48 = arith.constant 0 : index
    %175 = vector.load %arg6[%c0_46, %c0_47, %c0_48] : memref<8x16x128xbf16, #tpu.memory_space<vmem>>, vector<8x16x128xbf16>
    tpu.vector_store %arg6[%c0_46, %c0_47, %c0_48], %174 {strides = array<i32>} : memref<8x16x128xbf16, #tpu.memory_space<vmem>>, vector<8x16x128xbf16>,
    return
  }
  func.func @transform_0(%arg0: i32) -> (i32, i32, i32) {
    %c0_i32 = arith.constant 0 : i32
    %c0_i32_0 = arith.constant 0 : i32
    %c0_i32_1 = arith.constant 0 : i32
    return %arg0, %c0_i32, %c0_i32_0 : i32, i32, i32
  }
  func.func @transform_1(%arg0: i32) -> (i32, i32) {
    %c0_i32 = arith.constant 0 : i32
    %c0_i32_0 = arith.constant 0 : i32
    %c0_i32_1 = arith.constant 0 : i32
    return %c0_i32, %c0_i32_0 : i32, i32
  }
  func.func @transform_2(%arg0: i32) -> (i32, i32, i32) {
    %c0_i32 = arith.constant 0 : i32
    %c0_i32_0 = arith.constant 0 : i32
    %c0_i32_1 = arith.constant 0 : i32
    %c0_i32_2 = arith.constant 0 : i32
    return %c0_i32, %c0_i32_0, %c0_i32_1 : i32, i32, i32
  }
  func.func @transform_3(%arg0: i32) -> (i32, i32, i32) {
    %c0_i32 = arith.constant 0 : i32
    %c0_i32_0 = arith.constant 0 : i32
    %c0_i32_1 = arith.constant 0 : i32
    return %arg0, %c0_i32, %c0_i32_0 : i32, i32, i32
  }
  func.func @transform_4(%arg0: i32) -> (i32, i32) {
    %c0_i32 = arith.constant 0 : i32
    %c0_i32_0 = arith.constant 0 : i32
    %c0_i32_1 = arith.constant 0 : i32
    return %c0_i32, %c0_i32_0 : i32, i32
  }
  func.func @transform_5(%arg0: i32) -> (i32, i32, i32) {
    %c0_i32 = arith.constant 0 : i32
    %c0_i32_0 = arith.constant 0 : i32
    %c0_i32_1 = arith.constant 0 : i32
    return %arg0, %c0_i32, %c0_i32_0 : i32, i32, i32
  }
}

</mosaic_0001>

<llo_original>
// kernel: tpu_custom_call.1
$region0: #{tpu_custom_call.1}
  #allocation0 [shape = 'u32[]', space=smem, size = 0x4, offset = 0x4, fixed_abs, tag = 'smem constant byte address 0x4 - core index']
  #allocation1 [shape = 'u32[144,128]{1,0:T(1,128)}', space=vmem, size = 0x12000, scoped, tag = 'internal scratch']
  %s0 = inlined_call_operand.hbm [shape: bf16[16,16,128], index: 0, kind: input, shape index: {}]
  %s1 = inlined_call_operand.hbm [shape: bf16[128,512], index: 1, kind: input, shape index: {}]
  %s2 = inlined_call_operand.hbm [shape: bf16[4,16,16], index: 2, kind: input, shape index: {}]
  %s3 = inlined_call_operand.vmem [shape: bf16[16,1,16], index: 3, kind: input, shape index: {}]
  %s4 = inlined_call_operand.hbm [shape: bf16[128,128], index: 4, kind: input, shape index: {}]
  %s5 = inlined_call_operand.hbm [shape: bf16[16,16,128], index: 5, kind: output, shape index: {}]
  %s6 = sld [smem:[#allocation0]]
  $region69: #{tpu_custom_call.1} parent=0
    _
  %s8 = ssub.s32 1, %s6
  %s9 = scalar_select 0, %s8, %s6
  $region1: #{tpu_custom_call.1} parent=0
    #allocation2 [shape = 'u8[65536]{0}', space=vmem, size = 0x10000, scoped, tag = 'input window, operand 0']
    #allocation3 [shape = 's32[2]{0}', space=sflag, size = 0x8, scoped, tag = 'scoped memory for tpu_custom_call.1']
    #allocation4 [shape = 's32[2]{0}', space=sflag, size = 0x8, scoped, tag = 'scoped memory for tpu_custom_call.1']
    #allocation5 [shape = 'u8[131072]{0}', space=vmem, size = 0x20000, scoped, tag = 'input window, operand 1, single buffered']
    #allocation6 [shape = 's32[1]{0}', space=sflag, size = 0x4, scoped, tag = 'scoped memory for tpu_custom_call.1']
    #allocation7 [shape = 'u8[16384]{0}', space=vmem, size = 0x4000, scoped, tag = 'input window, operand 2, single buffered']
    #allocation8 [shape = 'u8[32768]{0}', space=vmem, size = 0x8000, scoped, tag = 'input window, operand 4, single buffered']
    #allocation9 [shape = 's32[1]{0}', space=sflag, size = 0x4, scoped, tag = 'scoped memory for tpu_custom_call.1']
    #allocation10 [shape = 'u8[65536]{0}', space=vmem, size = 0x10000, scoped, tag = 'output window, operand 0']
    %10 = vsyncpa [#allocation3], 0
    %s11 = scalar_lea.sflag [#allocation3], 1
    %12 = vsyncpa %s11, 0
    %13 = vsyncpa [#allocation6], 0
    %14 = vsyncpa [#allocation9], 0
    %15 = vsyncpa [#allocation4], 0
    %s16 = scalar_lea.sflag [#allocation4], 1
    %17 = vsyncpa %s16, 0
    loop: start=0, step=1, limit=4
    $region2: #{tpu_custom_call.1} parent=1 // loop_pre_header
      _
    $region3: #{tpu_custom_call.1} parent=1 // loop_header
      %s19 = sphi 0, %s23
      %p20 = scmp.ge.s32.totalorder %s19, 4
      %s29 = sphi 0, %s31
      %s32 = sphi 0, %s29
      %s33 = sphi 0, %s32
      %s49 = sphi 0, %s33
      %s53 = sphi 0, %s53
      %s55 = sphi 0, %s53
      %s56 = sphi 0, %s55
      %s70 = sphi 0, %s56
      %s74 = sphi 0, %s74
      %s76 = sphi 0, %s74
      %s77 = sphi 0, %s76
      %s91 = sphi 0, %s77
      %s97 = sphi 0, %s99
      %s100 = sphi 0, %s97
      %s101 = sphi 0, %s100
      %s117 = sphi 0, %s101
      %s121 = sphi 0, %s121
      %s123 = sphi 0, %s121
      %s124 = sphi 0, %s123
      %s138 = sphi 0, %s124
      %s144 = sphi 0, %s146
      %s147 = sphi 0, %s144
      %s148 = sphi 0, %s147
      %s164 = sphi 0, %s148
    $region4: #{tpu_custom_call.1} parent=1 // loop_header_branch
      %22 = sbr.rel (%p20) target = $region8
    $region5: #{tpu_custom_call.1} parent=1 // loop_body
      %s24 = ssub.s32 %s19, 1
      %s25 = ssub.s32 %s19, 2
      %s26 = sadd.s32 %s19, 1
      %s27 = ssub.s32 %s19, %s26
      %p28 = scmp.eq.s32.totalorder %s27, 0
      %s30 = sadd.s32 %s29, 1
      %s31 = scalar_select %p28, %s29, %s30
      %p34 = pneg %p28
      %p35 = scmp.eq.s32.totalorder %s19, 1
      %p36 = por %p34, %p35
      %p37 = scmp.ne.s32.totalorder %s29, %s32
      %p38 = scmp.eq.s32.totalorder %s19, 0
      %p39 = por %p37, %p38
      %p40 = scmp.ne.s32.totalorder %s29, %s32
      %p41 = scmp.eq.s32.totalorder %s24, 1
      %p42 = por %p40, %p41
      %p43 = scmp.ne.s32.totalorder %s32, %s33
      %p44 = scmp.eq.s32.totalorder %s24, 0
      %p45 = por %p43, %p44
      %p46 = scmp.ne.s32.totalorder %s32, %s33
      %p47 = scmp.eq.s32.totalorder %s25, 1
      %p48 = por %p46, %p47
      %p50 = scmp.ne.s32.totalorder %s33, %s49
      %p51 = scmp.eq.s32.totalorder %s25, 0
      %p52 = por %p50, %p51
      %s54 = sadd.s32 %s53, 1
      %p57 = scmp.eq.s32.totalorder %s19, 1
      %p58 = scmp.ne.s32.totalorder %s53, %s55
      %p59 = scmp.eq.s32.totalorder %s19, 0
      %p60 = por %p58, %p59
      %p61 = scmp.ne.s32.totalorder %s53, %s55
      %p62 = scmp.eq.s32.totalorder %s24, 1
      %p63 = por %p61, %p62
      %p64 = scmp.ne.s32.totalorder %s55, %s56
      %p65 = scmp.eq.s32.totalorder %s24, 0
      %p66 = por %p64, %p65
      %p67 = scmp.ne.s32.totalorder %s55, %s56
      %p68 = scmp.eq.s32.totalorder %s25, 1
      %p69 = por %p67, %p68
      %p71 = scmp.ne.s32.totalorder %s56, %s70
      %p72 = scmp.eq.s32.totalorder %s25, 0
      %p73 = por %p71, %p72
      %s75 = sadd.s32 %s74, 1
      %p78 = scmp.eq.s32.totalorder %s19, 1
      %p79 = scmp.ne.s32.totalorder %s74, %s76
      %p80 = scmp.eq.s32.totalorder %s19, 0
      %p81 = por %p79, %p80
      %p82 = scmp.ne.s32.totalorder %s74, %s76
      %p83 = scmp.eq.s32.totalorder %s24, 1
      %p84 = por %p82, %p83
      %p85 = scmp.ne.s32.totalorder %s76, %s77
      %p86 = scmp.eq.s32.totalorder %s24, 0
      %p87 = por %p85, %p86
      %p88 = scmp.ne.s32.totalorder %s76, %s77
      %p89 = scmp.eq.s32.totalorder %s25, 1
      %p90 = por %p88, %p89
      %p92 = scmp.ne.s32.totalorder %s77, %s91
      %p93 = scmp.eq.s32.totalorder %s25, 0
      %p94 = por %p92, %p93
      %s95 = ssub.s32 %s19, %s26
      %p96 = scmp.eq.s32.totalorder %s95, 0
      %s98 = sadd.s32 %s97, 1
      %s99 = scalar_select %p96, %s97, %s98
      %p102 = pneg %p96
      %p103 = scmp.eq.s32.totalorder %s19, 1
      %p104 = por %p102, %p103
      %p105 = scmp.ne.s32.totalorder %s97, %s100
      %p106 = scmp.eq.s32.totalorder %s19, 0
      %p107 = por %p105, %p106
      %p108 = scmp.ne.s32.totalorder %s97, %s100
      %p109 = scmp.eq.s32.totalorder %s24, 1
      %p110 = por %p108, %p109
      %p111 = scmp.ne.s32.totalorder %s100, %s101
      %p112 = scmp.eq.s32.totalorder %s24, 0
      %p113 = por %p111, %p112
      %p114 = scmp.ne.s32.totalorder %s100, %s101
      %p115 = scmp.eq.s32.totalorder %s25, 1
      %p116 = por %p114, %p115
      %p118 = scmp.ne.s32.totalorder %s101, %s117
      %p119 = scmp.eq.s32.totalorder %s25, 0
      %p120 = por %p118, %p119
      %s122 = sadd.s32 %s121, 1
      %p125 = scmp.eq.s32.totalorder %s19, 1
      %p126 = scmp.ne.s32.totalorder %s121, %s123
      %p127 = scmp.eq.s32.totalorder %s19, 0
      %p128 = por %p126, %p127
      %p129 = scmp.ne.s32.totalorder %s121, %s123
      %p130 = scmp.eq.s32.totalorder %s24, 1
      %p131 = por %p129, %p130
      %p132 = scmp.ne.s32.totalorder %s123, %s124
      %p133 = scmp.eq.s32.totalorder %s24, 0
      %p134 = por %p132, %p133
      %p135 = scmp.ne.s32.totalorder %s123, %s124
      %p136 = scmp.eq.s32.totalorder %s25, 1
      %p137 = por %p135, %p136
      %p139 = scmp.ne.s32.totalorder %s124, %s138
      %p140 = scmp.eq.s32.totalorder %s25, 0
      %p141 = por %p139, %p140
      %s142 = ssub.s32 %s19, %s26
      %p143 = scmp.eq.s32.totalorder %s142, 0
      %s145 = sadd.s32 %s144, 1
      %s146 = scalar_select %p143, %s144, %s145
      %p149 = pneg %p143
      %p150 = scmp.eq.s32.totalorder %s19, 1
      %p151 = por %p149, %p150
      %p152 = scmp.ne.s32.totalorder %s144, %s147
      %p153 = scmp.eq.s32.totalorder %s19, 0
      %p154 = por %p152, %p153
      %p155 = scmp.ne.s32.totalorder %s144, %s147
      %p156 = scmp.eq.s32.totalorder %s24, 1
      %p157 = por %p155, %p156
      %p158 = scmp.ne.s32.totalorder %s147, %s148
      %p159 = scmp.eq.s32.totalorder %s24, 0
      %p160 = por %p158, %p159
      %p161 = scmp.ne.s32.totalorder %s147, %s148
      %p162 = scmp.eq.s32.totalorder %s25, 1
      %p163 = por %p161, %p162
      %p165 = scmp.ne.s32.totalorder %s148, %s164
      %p166 = scmp.eq.s32.totalorder %s25, 0
      %p167 = por %p165, %p166
      %p168 = scmp.le.s32.totalorder 1, %s19
      %p169 = scmp.lt.s32.totalorder %s19, 3
      %p170 = pnand %p168, %p169
      %p171 = pneg %p170
      // Predicated region
      $region9: #{tpu_custom_call.1} parent=5 // pred_check
        _
      $region10: #{tpu_custom_call.1} parent=5 // pred_check_branch
        %173 = sbr.rel (%p170) target = $region12
      $region11: #{tpu_custom_call.1} parent=5 // pred_region
        %s174 = ssub.s32 %s19, 1
        // Predicated region
        $region13: #{tpu_custom_call.1} parent=11 // pred_check
          %p175 = pneg %p66
        $region14: #{tpu_custom_call.1} parent=11 // pred_check_branch
          %177 = sbr.rel (%p175) target = $region16
        $region15: #{tpu_custom_call.1} parent=11 // pred_region
          %s179 = ssub.s32 4096, 4096
          %180 = vsyncadd [#allocation6], %s179
          %s181 = sshll.u32 [#allocation5], 4
          %s182 = int_to_ptr.vmem [resolvable:$true] %s181
          %187 = dma.hbm_to_vmem [thread:$0]  %s1, 4096, %s182, [#allocation6], 256, 256, 16
        $region16: #{tpu_custom_call.1} parent=11 // pred_fallthru
          _
        // Predicated region
        $region17: #{tpu_custom_call.1} parent=11 // pred_check
          %p188 = pneg %p87
        $region18: #{tpu_custom_call.1} parent=11 // pred_check_branch
          %190 = sbr.rel (%p188) target = $region20
        $region19: #{tpu_custom_call.1} parent=11 // pred_region
          %s192 = ssub.s32 512, 512
          %193 = vsyncadd [#allocation6], %s192
          %s194 = sshll.u32 [#allocation7], 4
          %s195 = int_to_ptr.vmem [resolvable:$true] %s194
          %200 = dma.hbm_to_vmem [thread:$0]  %s2, 512, %s195, [#allocation6], 64, 64, 4
        $region20: #{tpu_custom_call.1} parent=11 // pred_fallthru
          _
        // Predicated region
        $region21: #{tpu_custom_call.1} parent=11 // pred_check
          %p201 = pneg %p134
        $region22: #{tpu_custom_call.1} parent=11 // pred_check_branch
          %203 = sbr.rel (%p201) target = $region24
        $region23: #{tpu_custom_call.1} parent=11 // pred_region
          %s205 = ssub.s32 1024, 1024
          %206 = vsyncadd [#allocation9], %s205
          %s207 = sshll.u32 [#allocation8], 4
          %s208 = int_to_ptr.vmem [resolvable:$true] %s207
          %213 = dma.hbm_to_vmem [thread:$0]  %s4, 1024, %s208, [#allocation9], 64, 64, 4
        $region24: #{tpu_custom_call.1} parent=11 // pred_fallthru
          _
      $region12: #{tpu_custom_call.1} parent=5 // pred_fallthru
        _
      %p214 = scmp.lt.s32.totalorder %s19, 2
      // Predicated region
      $region25: #{tpu_custom_call.1} parent=5 // pred_check
        %p215 = pneg %p214
      $region26: #{tpu_custom_call.1} parent=5 // pred_check_branch
        %217 = sbr.rel (%p215) target = $region28
      $region27: #{tpu_custom_call.1} parent=5 // pred_region
        // Predicated region
        $region29: #{tpu_custom_call.1} parent=27 // pred_check
          %p218 = pneg %p39
        $region30: #{tpu_custom_call.1} parent=27 // pred_check_branch
          %220 = sbr.rel (%p218) target = $region32
        $region31: #{tpu_custom_call.1} parent=27 // pred_region
          %s221 = sand.u32 %s29, 1
          %s222 = scalar_lea.sflag [#allocation3], %s221
          %s223 = sand.u32 %s29, 1
          %s224 = smul.addr %s223, 64
          %s225 = scalar_lea.vmem [#allocation2], %s224
          %s226 = smul.u32 8, %s19
          %s228 = ssub.s32 1024, 1024
          %229 = vsyncadd %s222, %s228
          %s230 = smul.addr %s226, 2
          %s231 = smul.addr %s230, 64
          %s232 = scalar_lea.hbm %s0, %s231
          %s233 = sshll.u32 %s225, 4
          %s234 = int_to_ptr.vmem [resolvable:$true] %s233
          %239 = dma.hbm_to_vmem [thread:$0]  %s232, 1024, %s234, %s222, 64, 64, 4
        $region32: #{tpu_custom_call.1} parent=27 // pred_fallthru
          _
        // Predicated region
        $region33: #{tpu_custom_call.1} parent=27 // pred_check
          %p240 = pneg %p107
        $region34: #{tpu_custom_call.1} parent=27 // pred_check_branch
          %242 = sbr.rel (%p240) target = $region36
        $region35: #{tpu_custom_call.1} parent=27 // pred_region
          %s243 = smul.u32 8, %s19
          %p244 = scmp.lt.s32.totalorder %s243, 15
          %s245 = scalar_select %p244, %s243, 15
          %s246 = scalar_lea.vmem %s3, %s245
          %s247 = smul.u32 8, %s19
        $region36: #{tpu_custom_call.1} parent=27 // pred_fallthru
          _
      $region28: #{tpu_custom_call.1} parent=5 // pred_fallthru
        _
      %p248 = scmp.le.s32.totalorder 1, %s19
      %p249 = scmp.lt.s32.totalorder %s19, 3
      %p250 = pnand %p248, %p249
      %p251 = pneg %p250
      // Predicated region
      $region37: #{tpu_custom_call.1} parent=5 // pred_check
        _
      $region38: #{tpu_custom_call.1} parent=5 // pred_check_branch
        %253 = sbr.rel (%p250) target = $region40
      $region39: #{tpu_custom_call.1} parent=5 // pred_region
        %s254 = ssub.s32 %s19, 1
        %s255 = sand.u32 %s32, 1
        %s256 = scalar_lea.sflag [#allocation3], %s255
        %s257 = sand.u32 %s32, 1
        %s258 = smul.addr %s257, 64
        %s259 = scalar_lea.vmem [#allocation2], %s258
        // Predicated region
        $region41: #{tpu_custom_call.1} parent=39 // pred_check
          %p260 = pneg %p45
        $region42: #{tpu_custom_call.1} parent=39 // pred_check_branch
          %262 = sbr.rel (%p260) target = $region44
        $region43: #{tpu_custom_call.1} parent=39 // pred_region
          %263 = dma.done %s256, 1024
        $region44: #{tpu_custom_call.1} parent=39 // pred_fallthru
          _
        // Predicated region
        $region45: #{tpu_custom_call.1} parent=39 // pred_check
          %p264 = pneg %p66
        $region46: #{tpu_custom_call.1} parent=39 // pred_check_branch
          %266 = sbr.rel (%p264) target = $region48
        $region47: #{tpu_custom_call.1} parent=39 // pred_region
          %267 = dma.done [#allocation6], 4096
        $region48: #{tpu_custom_call.1} parent=39 // pred_fallthru
          _
        // Predicated region
        $region49: #{tpu_custom_call.1} parent=39 // pred_check
          %p268 = pneg %p87
        $region50: #{tpu_custom_call.1} parent=39 // pred_check_branch
          %270 = sbr.rel (%p268) target = $region52
        $region51: #{tpu_custom_call.1} parent=39 // pred_region
          %271 = dma.done [#allocation6], 512
        $region52: #{tpu_custom_call.1} parent=39 // pred_fallthru
          _
        // Predicated region
        $region53: #{tpu_custom_call.1} parent=39 // pred_check
          %p272 = pneg %p134
        $region54: #{tpu_custom_call.1} parent=39 // pred_check_branch
          %274 = sbr.rel (%p272) target = $region56
        $region55: #{tpu_custom_call.1} parent=39 // pred_region
          %275 = dma.done [#allocation9], 1024
        $region56: #{tpu_custom_call.1} parent=39 // pred_fallthru
          _
        %s276 = sand.u32 %s32, 1
        %s277 = scalar_lea.sflag [#allocation3], %s276
        %s278 = sand.u32 %s32, 1
        %s279 = smul.addr %s278, 64
        %s280 = scalar_lea.vmem [#allocation2], %s279
        %p281 = pneg %p45
        %p282 = pneg %p42
        %p283 = pneg %p66
        %p284 = pneg %p63
        %p285 = pneg %p87
        %p286 = pneg %p84
        %s287 = smul.u32 8, %s24
        %p288 = scmp.lt.s32.totalorder %s287, 15
        %s289 = scalar_select %p288, %s287, 15
        %s290 = scalar_lea.vmem %s3, %s289
        %p291 = pneg %p113
        %p292 = pneg %p110
        %p293 = pneg %p134
        %p294 = pneg %p131
        %p295 = pneg %p160
        %p296 = pneg %p157
        %s297 = sand.u32 %s147, 1
        %s298 = scalar_lea.sflag [#allocation4], %s297
        %s299 = sand.u32 %s147, 1
        %s300 = smul.addr %s299, 64
        %s301 = scalar_lea.vmem [#allocation10], %s300
        %s302 = smul.u32 8, %s24
        %s303 = smul.u32 8, %s24
        %p304 = scmp.lt.s32.totalorder %s303, 15
        %s305 = scalar_select %p304, %s303, 15
        %s306 = scalar_lea.vmem %s3, %s305
        %s307 = smul.u32 8, %s24
        %s308 = smul.u32 8, %s24
        %v310 = vld [vmem:[%s259] sm:$0xf]
        %v311 = vld [vmem:[%s259 + $0x4] sm:$0xf]
        %v312 = vld [vmem:[%s259 + $0x8] sm:$0xf]
        %v313 = vld [vmem:[%s259 + $0xc] sm:$0xf]
        %v314 = vld [vmem:[%s259 + $0x10] sm:$0xf]
        %v315 = vld [vmem:[%s259 + $0x14] sm:$0xf]
        %v316 = vld [vmem:[%s259 + $0x18] sm:$0xf]
        %v317 = vld [vmem:[%s259 + $0x1c] sm:$0xf]
        %v318 = vld [vmem:[%s259 + $0x20] sm:$0xf]
        %v319 = vld [vmem:[%s259 + $0x24] sm:$0xf]
        %v320 = vld [vmem:[%s259 + $0x28] sm:$0xf]
        %v321 = vld [vmem:[%s259 + $0x2c] sm:$0xf]
        %v322 = vld [vmem:[%s259 + $0x30] sm:$0xf]
        %v323 = vld [vmem:[%s259 + $0x34] sm:$0xf]
        %v324 = vld [vmem:[%s259 + $0x38] sm:$0xf]
        %v325 = vld [vmem:[%s259 + $0x3c] sm:$0xf]
        %v326 = vld [vmem:[#allocation5] sm:$0xff]
        %v327 = vld [vmem:[#allocation5 + $0x8] sm:$0xff]
        %v328 = vld [vmem:[#allocation5 + $0x10] sm:$0xff]
        %v329 = vld [vmem:[#allocation5 + $0x18] sm:$0xff]
        %v330 = vld [vmem:[#allocation5 + $0x20] sm:$0xff]
        %v331 = vld [vmem:[#allocation5 + $0x28] sm:$0xff]
        %v332 = vld [vmem:[#allocation5 + $0x30] sm:$0xff]
        %v333 = vld [vmem:[#allocation5 + $0x38] sm:$0xff]
        %v334 = vld [vmem:[#allocation5 + $0x40] sm:$0xff]
        %v335 = vld [vmem:[#allocation5 + $0x48] sm:$0xff]
        %v336 = vld [vmem:[#allocation5 + $0x50] sm:$0xff]
        %v337 = vld [vmem:[#allocation5 + $0x58] sm:$0xff]
        %v338 = vld [vmem:[#allocation5 + $0x60] sm:$0xff]
        %v339 = vld [vmem:[#allocation5 + $0x68] sm:$0xff]
        %v340 = vld [vmem:[#allocation5 + $0x70] sm:$0xff]
        %v341 = vld [vmem:[#allocation5 + $0x78] sm:$0xff]
        %v342 = vld [vmem:[#allocation5 + $0x80] sm:$0xff]
        %v343 = vld [vmem:[#allocation5 + $0x88] sm:$0xff]
        %v344 = vld [vmem:[#allocation5 + $0x90] sm:$0xff]
        %v345 = vld [vmem:[#allocation5 + $0x98] sm:$0xff]
        %v346 = vld [vmem:[#allocation5 + $0xa0] sm:$0xff]
        %v347 = vld [vmem:[#allocation5 + $0xa8] sm:$0xff]
        %v348 = vld [vmem:[#allocation5 + $0xb0] sm:$0xff]
        %v349 = vld [vmem:[#allocation5 + $0xb8] sm:$0xff]
        %v350 = vld [vmem:[#allocation5 + $0xc0] sm:$0xff]
        %v351 = vld [vmem:[#allocation5 + $0xc8] sm:$0xff]
        %v352 = vld [vmem:[#allocation5 + $0xd0] sm:$0xff]
        %v353 = vld [vmem:[#allocation5 + $0xd8] sm:$0xff]
        %v354 = vld [vmem:[#allocation5 + $0xe0] sm:$0xff]
        %v355 = vld [vmem:[#allocation5 + $0xe8] sm:$0xff]
        %v356 = vld [vmem:[#allocation5 + $0xf0] sm:$0xff]
        %v357 = vld [vmem:[#allocation5 + $0xf8] sm:$0xff]
        %v374 = vunpack.c.l.b16 %v310
        %v375 = vunpack.c.l.b16 %v311
        %v376 = vunpack.c.l.b16 %v312
        %v377 = vunpack.c.l.b16 %v313
        %v378 = vunpack.c.l.b16 %v314
        %v379 = vunpack.c.l.b16 %v315
        %v380 = vunpack.c.l.b16 %v316
        %v381 = vunpack.c.l.b16 %v317
        %v382 = vunpack.c.l.b16 %v318
        %v383 = vunpack.c.l.b16 %v319
        %v384 = vunpack.c.l.b16 %v320
        %v385 = vunpack.c.l.b16 %v321
        %v386 = vunpack.c.l.b16 %v322
        %v387 = vunpack.c.l.b16 %v323
        %v388 = vunpack.c.l.b16 %v324
        %v389 = vunpack.c.l.b16 %v325
        %v390 = vpack.c.b16 %v375, %v374
        %v391 = vpack.c.b16 %v377, %v376
        %v392 = vpack.c.b16 %v379, %v378
        %v393 = vpack.c.b16 %v381, %v380
        %v394 = vpack.c.b16 %v383, %v382
        %v395 = vpack.c.b16 %v385, %v384
        %v396 = vpack.c.b16 %v387, %v386
        %v397 = vpack.c.b16 %v389, %v388
        %v438 = vunpack.c.l.b16 %v326
        %v439 = vunpack.c.h.b16 %v326
        %v440 = vunpack.c.l.b16 %v327
        %v441 = vunpack.c.h.b16 %v327
        %v442 = vunpack.c.l.b16 %v328
        %v443 = vunpack.c.h.b16 %v328
        %v444 = vunpack.c.l.b16 %v329
        %v445 = vunpack.c.h.b16 %v329
        %v446 = vunpack.c.l.b16 %v330
        %v447 = vunpack.c.h.b16 %v330
        %v448 = vunpack.c.l.b16 %v331
        %v449 = vunpack.c.h.b16 %v331
        %v450 = vunpack.c.l.b16 %v332
        %v451 = vunpack.c.h.b16 %v332
        %v452 = vunpack.c.l.b16 %v333
        %v453 = vunpack.c.h.b16 %v333
        %v454 = vunpack.c.l.b16 %v334
        %v455 = vunpack.c.h.b16 %v334
        %v456 = vunpack.c.l.b16 %v335
        %v457 = vunpack.c.h.b16 %v335
        %v458 = vunpack.c.l.b16 %v336
        %v459 = vunpack.c.h.b16 %v336
        %v460 = vunpack.c.l.b16 %v337
        %v461 = vunpack.c.h.b16 %v337
        %v462 = vunpack.c.l.b16 %v338
        %v463 = vunpack.c.h.b16 %v338
        %v464 = vunpack.c.l.b16 %v339
        %v465 = vunpack.c.h.b16 %v339
        %v466 = vunpack.c.l.b16 %v340
        %v467 = vunpack.c.h.b16 %v340
        %v468 = vunpack.c.l.b16 %v341
        %v469 = vunpack.c.h.b16 %v341
        %v470 = vunpack.c.l.b16 %v342
        %v471 = vunpack.c.h.b16 %v342
        %v472 = vunpack.c.l.b16 %v343
        %v473 = vunpack.c.h.b16 %v343
        %v474 = vunpack.c.l.b16 %v344
        %v475 = vunpack.c.h.b16 %v344
        %v476 = vunpack.c.l.b16 %v345
        %v477 = vunpack.c.h.b16 %v345
        %v478 = vunpack.c.l.b16 %v346
        %v479 = vunpack.c.h.b16 %v346
        %v480 = vunpack.c.l.b16 %v347
        %v481 = vunpack.c.h.b16 %v347
        %v482 = vunpack.c.l.b16 %v348
        %v483 = vunpack.c.h.b16 %v348
        %v484 = vunpack.c.l.b16 %v349
        %v485 = vunpack.c.h.b16 %v349
        %v486 = vunpack.c.l.b16 %v350
        %v487 = vunpack.c.h.b16 %v350
        %v488 = vunpack.c.l.b16 %v351
        %v489 = vunpack.c.h.b16 %v351
        %v490 = vunpack.c.l.b16 %v352
        %v491 = vunpack.c.h.b16 %v352
        %v492 = vunpack.c.l.b16 %v353
        %v493 = vunpack.c.h.b16 %v353
        %v494 = vunpack.c.l.b16 %v354
        %v495 = vunpack.c.h.b16 %v354
        %v496 = vunpack.c.l.b16 %v355
        %v497 = vunpack.c.h.b16 %v355
        %v498 = vunpack.c.l.b16 %v356
        %v499 = vunpack.c.h.b16 %v356
        %v500 = vunpack.c.l.b16 %v357
        %v501 = vunpack.c.h.b16 %v357
        %v502 = vpack.c.b16 %v442, %v438
        %v503 = vpack.c.b16 %v443, %v439
        %v504 = vpack.c.b16 %v444, %v440
        %v505 = vpack.c.b16 %v445, %v441
        %v506 = vpack.c.b16 %v450, %v446
        %v507 = vpack.c.b16 %v451, %v447
        %v508 = vpack.c.b16 %v452, %v448
        %v509 = vpack.c.b16 %v453, %v449
        %v510 = vpack.c.b16 %v458, %v454
        %v511 = vpack.c.b16 %v459, %v455
        %v512 = vpack.c.b16 %v460, %v456
        %v513 = vpack.c.b16 %v461, %v457
        %v514 = vpack.c.b16 %v466, %v462
        %v515 = vpack.c.b16 %v467, %v463
        %v516 = vpack.c.b16 %v468, %v464
        %v517 = vpack.c.b16 %v469, %v465
        %v518 = vpack.c.b16 %v474, %v470
        %v519 = vpack.c.b16 %v475, %v471
        %v520 = vpack.c.b16 %v476, %v472
        %v521 = vpack.c.b16 %v477, %v473
        %v522 = vpack.c.b16 %v482, %v478
        %v523 = vpack.c.b16 %v483, %v479
        %v524 = vpack.c.b16 %v484, %v480
        %v525 = vpack.c.b16 %v485, %v481
        %v526 = vpack.c.b16 %v490, %v486
        %v527 = vpack.c.b16 %v491, %v487
        %v528 = vpack.c.b16 %v492, %v488
        %v529 = vpack.c.b16 %v493, %v489
        %v530 = vpack.c.b16 %v498, %v494
        %v531 = vpack.c.b16 %v499, %v495
        %v532 = vpack.c.b16 %v500, %v496
        %v533 = vpack.c.b16 %v501, %v497
        %566 = vmatprep.subr.bf16.mxu0 %v503
        %567 = vmatpush1.bf16.msra.mxu0 %v502
        %568 = vmatprep.subr.bf16.mxu0 %v507
        %569 = vmatpush1.bf16.msra.mxu0 %v506
        %570 = vmatprep.subr.bf16.mxu0 %v511
        %571 = vmatpush1.bf16.msra.mxu0 %v510
        %572 = vmatprep.subr.bf16.mxu0 %v515
        %573 = vmatpush1.bf16.msra.mxu0 %v514
        %574 = vmatprep.subr.bf16.mxu0 %v519
        %575 = vmatpush1.bf16.msra.mxu0 %v518
        %576 = vmatprep.subr.bf16.mxu0 %v523
        %577 = vmatpush1.bf16.msra.mxu0 %v522
        %578 = vmatprep.subr.bf16.mxu0 %v527
        %579 = vmatpush1.bf16.msra.mxu0 %v526
        %580 = vmatprep.subr.bf16.mxu0 %v531
        %581 = vmatpush1.bf16.msra.mxu0 %v530
        %582 = vmatprep.subr.bf16.mxu0 0
        %583 = vmatpush1.bf16.msra.mxu0 0
        %584 = vmatprep.subr.bf16.mxu0 0
        %585 = vmatpush1.bf16.msra.mxu0 0
        %586 = vmatprep.subr.bf16.mxu0 0
        %587 = vmatpush1.bf16.msra.mxu0 0
        %588 = vmatprep.subr.bf16.mxu0 0
        %589 = vmatpush1.bf16.msra.mxu0 0
        %590 = vmatprep.subr.bf16.mxu0 0
        %591 = vmatpush1.bf16.msra.mxu0 0
        %592 = vmatprep.subr.bf16.mxu0 0
        %593 = vmatpush1.bf16.msra.mxu0 0
        %594 = vmatprep.subr.bf16.mxu0 0
        %595 = vmatpush1.bf16.msra.mxu0 0
        %596 = vmatprep.subr.bf16.mxu0 0
        %597 = vmatpush1.bf16.msra.mxu0 0
        %598 = vmatprep.mubr.bf16.mxu0 0
        %599 = vmatmul.mubr.bf16.gmra.mrb[0].mxu0 %v390
        %v600 = vpop.f32.mrb[0].mxu0
        %v601 = vadd.f32 0.0, %v600
        %v602 = vpop.f32.mrb[0].mxu0
        %v603 = vadd.f32 0.0, %v602
        %v604 = vpop.f32.mrb[0].mxu0
        %v605 = vadd.f32 0.0, %v604
        %v606 = vpop.f32.mrb[0].mxu0
        %v607 = vadd.f32 0.0, %v606
        %608 = vmatprep.mubr.bf16.mxu0 0
        %609 = vmatmul.mubr.bf16.gmra.mrb[0].mxu0 %v391
        %v610 = vpop.f32.mrb[0].mxu0
        %v611 = vadd.f32 0.0, %v610
        %v612 = vpop.f32.mrb[0].mxu0
        %v613 = vadd.f32 0.0, %v612
        %v614 = vpop.f32.mrb[0].mxu0
        %v615 = vadd.f32 0.0, %v614
        %v616 = vpop.f32.mrb[0].mxu0
        %v617 = vadd.f32 0.0, %v616
        %618 = vmatprep.mubr.bf16.mxu0 0
        %619 = vmatmul.mubr.bf16.gmra.mrb[0].mxu0 %v392
        %v620 = vpop.f32.mrb[0].mxu0
        %v621 = vadd.f32 0.0, %v620
        %v622 = vpop.f32.mrb[0].mxu0
        %v623 = vadd.f32 0.0, %v622
        %v624 = vpop.f32.mrb[0].mxu0
        %v625 = vadd.f32 0.0, %v624
        %v626 = vpop.f32.mrb[0].mxu0
        %v627 = vadd.f32 0.0, %v626
        %628 = vmatprep.mubr.bf16.mxu0 0
        %629 = vmatmul.mubr.bf16.gmra.mrb[0].mxu0 %v393
        %v630 = vpop.f32.mrb[0].mxu0
        %v631 = vadd.f32 0.0, %v630
        %v632 = vpop.f32.mrb[0].mxu0
        %v633 = vadd.f32 0.0, %v632
        %v634 = vpop.f32.mrb[0].mxu0
        %v635 = vadd.f32 0.0, %v634
        %v636 = vpop.f32.mrb[0].mxu0
        %v637 = vadd.f32 0.0, %v636
        %638 = vmatprep.mubr.bf16.mxu0 0
        %639 = vmatmul.mubr.bf16.gmra.mrb[0].mxu0 %v394
        %v640 = vpop.f32.mrb[0].mxu0
        %v641 = vadd.f32 0.0, %v640
        %v642 = vpop.f32.mrb[0].mxu0
        %v643 = vadd.f32 0.0, %v642
        %v644 = vpop.f32.mrb[0].mxu0
        %v645 = vadd.f32 0.0, %v644
        %v646 = vpop.f32.mrb[0].mxu0
        %v647 = vadd.f32 0.0, %v646
        %648 = vmatprep.mubr.bf16.mxu0 0
        %649 = vmatmul.mubr.bf16.gmra.mrb[0].mxu0 %v395
        %v650 = vpop.f32.mrb[0].mxu0
        %v651 = vadd.f32 0.0, %v650
        %v652 = vpop.f32.mrb[0].mxu0
        %v653 = vadd.f32 0.0, %v652
        %v654 = vpop.f32.mrb[0].mxu0
        %v655 = vadd.f32 0.0, %v654
        %v656 = vpop.f32.mrb[0].mxu0
        %v657 = vadd.f32 0.0, %v656
        %658 = vmatprep.mubr.bf16.mxu0 0
        %659 = vmatmul.mubr.bf16.gmra.mrb[0].mxu0 %v396
        %v660 = vpop.f32.mrb[0].mxu0
        %v661 = vadd.f32 0.0, %v660
        %v662 = vpop.f32.mrb[0].mxu0
        %v663 = vadd.f32 0.0, %v662
        %v664 = vpop.f32.mrb[0].mxu0
        %v665 = vadd.f32 0.0, %v664
        %v666 = vpop.f32.mrb[0].mxu0
        %v667 = vadd.f32 0.0, %v666
        %668 = vmatprep.mubr.bf16.mxu0 0
        %669 = vmatmul.mubr.bf16.gmra.mrb[0].mxu0 %v397
        %v670 = vpop.f32.mrb[0].mxu0
        %v671 = vadd.f32 0.0, %v670
        %v672 = vpop.f32.mrb[0].mxu0
        %v673 = vadd.f32 0.0, %v672
        %v674 = vpop.f32.mrb[0].mxu0
        %v675 = vadd.f32 0.0, %v674
        %v676 = vpop.f32.mrb[0].mxu0
        %v677 = vadd.f32 0.0, %v676
        %678 = vdwg.mxu0
        %679 = vmatprep.subr.bf16.mxu0 %v505
        %680 = vmatpush1.bf16.msra.mxu0 %v504
        %681 = vmatprep.subr.bf16.mxu0 %v509
        %682 = vmatpush1.bf16.msra.mxu0 %v508
        %683 = vmatprep.subr.bf16.mxu0 %v513
        %684 = vmatpush1.bf16.msra.mxu0 %v512
        %685 = vmatprep.subr.bf16.mxu0 %v517
        %686 = vmatpush1.bf16.msra.mxu0 %v516
        %687 = vmatprep.subr.bf16.mxu0 %v521
        %688 = vmatpush1.bf16.msra.mxu0 %v520
        %689 = vmatprep.subr.bf16.mxu0 %v525
        %690 = vmatpush1.bf16.msra.mxu0 %v524
        %691 = vmatprep.subr.bf16.mxu0 %v529
        %692 = vmatpush1.bf16.msra.mxu0 %v528
        %693 = vmatprep.subr.bf16.mxu0 %v533
        %694 = vmatpush1.bf16.msra.mxu0 %v532
        %695 = vmatprep.subr.bf16.mxu0 0
        %696 = vmatpush1.bf16.msra.mxu0 0
        %697 = vmatprep.subr.bf16.mxu0 0
        %698 = vmatpush1.bf16.msra.mxu0 0
        %699 = vmatprep.subr.bf16.mxu0 0
        %700 = vmatpush1.bf16.msra.mxu0 0
        %701 = vmatprep.subr.bf16.mxu0 0
        %702 = vmatpush1.bf16.msra.mxu0 0
        %703 = vmatprep.subr.bf16.mxu0 0
        %704 = vmatpush1.bf16.msra.mxu0 0
        %705 = vmatprep.subr.bf16.mxu0 0
        %706 = vmatpush1.bf16.msra.mxu0 0
        %707 = vmatprep.subr.bf16.mxu0 0
        %708 = vmatpush1.bf16.msra.mxu0 0
        %709 = vmatprep.subr.bf16.mxu0 0
        %710 = vmatpush1.bf16.msra.mxu0 0
        %711 = vmatprep.mubr.bf16.mxu0 0
        %712 = vmatmul.mubr.bf16.gmra.mrb[0].mxu0 %v390
        %v713 = vpop.f32.mrb[0].mxu0
        %v714 = vadd.f32 0.0, %v713
        %v715 = vpop.f32.mrb[0].mxu0
        %v716 = vadd.f32 0.0, %v715
        %v717 = vpop.f32.mrb[0].mxu0
        %v718 = vadd.f32 0.0, %v717
        %v719 = vpop.f32.mrb[0].mxu0
        %v720 = vadd.f32 0.0, %v719
        %721 = vmatprep.mubr.bf16.mxu0 0
        %722 = vmatmul.mubr.bf16.gmra.mrb[0].mxu0 %v391
        %v723 = vpop.f32.mrb[0].mxu0
        %v724 = vadd.f32 0.0, %v723
        %v725 = vpop.f32.mrb[0].mxu0
        %v726 = vadd.f32 0.0, %v725
        %v727 = vpop.f32.mrb[0].mxu0
        %v728 = vadd.f32 0.0, %v727
        %v729 = vpop.f32.mrb[0].mxu0
        %v730 = vadd.f32 0.0, %v729
        %731 = vmatprep.mubr.bf16.mxu0 0
        %732 = vmatmul.mubr.bf16.gmra.mrb[0].mxu0 %v392
        %v733 = vpop.f32.mrb[0].mxu0
        %v734 = vadd.f32 0.0, %v733
        %v735 = vpop.f32.mrb[0].mxu0
        %v736 = vadd.f32 0.0, %v735
        %v737 = vpop.f32.mrb[0].mxu0
        %v738 = vadd.f32 0.0, %v737
        %v739 = vpop.f32.mrb[0].mxu0
        %v740 = vadd.f32 0.0, %v739
        %741 = vmatprep.mubr.bf16.mxu0 0
        %742 = vmatmul.mubr.bf16.gmra.mrb[0].mxu0 %v393
        %v743 = vpop.f32.mrb[0].mxu0
        %v744 = vadd.f32 0.0, %v743
        %v745 = vpop.f32.mrb[0].mxu0
        %v746 = vadd.f32 0.0, %v745
        %v747 = vpop.f32.mrb[0].mxu0
        %v748 = vadd.f32 0.0, %v747
        %v749 = vpop.f32.mrb[0].mxu0
        %v750 = vadd.f32 0.0, %v749
        %751 = vmatprep.mubr.bf16.mxu0 0
        %752 = vmatmul.mubr.bf16.gmra.mrb[0].mxu0 %v394
        %v753 = vpop.f32.mrb[0].mxu0
        %v754 = vadd.f32 0.0, %v753
        %v755 = vpop.f32.mrb[0].mxu0
        %v756 = vadd.f32 0.0, %v755
        %v757 = vpop.f32.mrb[0].mxu0
        %v758 = vadd.f32 0.0, %v757
        %v759 = vpop.f32.mrb[0].mxu0
        %v760 = vadd.f32 0.0, %v759
        %761 = vmatprep.mubr.bf16.mxu0 0
        %762 = vmatmul.mubr.bf16.gmra.mrb[0].mxu0 %v395
        %v763 = vpop.f32.mrb[0].mxu0
        %v764 = vadd.f32 0.0, %v763
        %v765 = vpop.f32.mrb[0].mxu0
        %v766 = vadd.f32 0.0, %v765
        %v767 = vpop.f32.mrb[0].mxu0
        %v768 = vadd.f32 0.0, %v767
        %v769 = vpop.f32.mrb[0].mxu0
        %v770 = vadd.f32 0.0, %v769
        %771 = vmatprep.mubr.bf16.mxu0 0
        %772 = vmatmul.mubr.bf16.gmra.mrb[0].mxu0 %v396
        %v773 = vpop.f32.mrb[0].mxu0
        %v774 = vadd.f32 0.0, %v773
        %v775 = vpop.f32.mrb[0].mxu0
        %v776 = vadd.f32 0.0, %v775
        %v777 = vpop.f32.mrb[0].mxu0
        %v778 = vadd.f32 0.0, %v777
        %v779 = vpop.f32.mrb[0].mxu0
        %v780 = vadd.f32 0.0, %v779
        %781 = vmatprep.mubr.bf16.mxu0 0
        %782 = vmatmul.mubr.bf16.gmra.mrb[0].mxu0 %v397
        %v783 = vpop.f32.mrb[0].mxu0
        %v784 = vadd.f32 0.0, %v783
        %v785 = vpop.f32.mrb[0].mxu0
        %v786 = vadd.f32 0.0, %v785
        %v787 = vpop.f32.mrb[0].mxu0
        %v788 = vadd.f32 0.0, %v787
        %v789 = vpop.f32.mrb[0].mxu0
        %v790 = vadd.f32 0.0, %v789
        %791 = vdwg.mxu0
        %v792 = vpack.c.bf16 %v605, %v601
        %v793 = vpack.c.bf16 %v615, %v611
        %v794 = vpack.c.bf16 %v625, %v621
        %v795 = vpack.c.bf16 %v635, %v631
        %v796 = vpack.c.bf16 %v645, %v641
        %v797 = vpack.c.bf16 %v655, %v651
        %v798 = vpack.c.bf16 %v665, %v661
        %v799 = vpack.c.bf16 %v675, %v671
        %v800 = vpack.c.bf16 %v607, %v603
        %v801 = vpack.c.bf16 %v617, %v613
        %v802 = vpack.c.bf16 %v627, %v623
        %v803 = vpack.c.bf16 %v637, %v633
        %v804 = vpack.c.bf16 %v647, %v643
        %v805 = vpack.c.bf16 %v657, %v653
        %v806 = vpack.c.bf16 %v667, %v663
        %v807 = vpack.c.bf16 %v677, %v673
        %v808 = vpack.c.bf16 %v718, %v714
        %v809 = vpack.c.bf16 %v728, %v724
        %v810 = vpack.c.bf16 %v738, %v734
        %v811 = vpack.c.bf16 %v748, %v744
        %v812 = vpack.c.bf16 %v758, %v754
        %v813 = vpack.c.bf16 %v768, %v764
        %v814 = vpack.c.bf16 %v778, %v774
        %v815 = vpack.c.bf16 %v788, %v784
        %v816 = vpack.c.bf16 %v720, %v716
        %v817 = vpack.c.bf16 %v730, %v726
        %v818 = vpack.c.bf16 %v740, %v736
        %v819 = vpack.c.bf16 %v750, %v746
        %v820 = vpack.c.bf16 %v760, %v756
        %v821 = vpack.c.bf16 %v770, %v766
        %v822 = vpack.c.bf16 %v780, %v776
        %v823 = vpack.c.bf16 %v790, %v786
        %v824 = vld [vmem:[%s306] sm:$0x1]
        %v825 = vld [vmem:[%s306 + $0x1] sm:$0x1]
        %v826 = vld [vmem:[%s306 + $0x2] sm:$0x1]
        %v827 = vld [vmem:[%s306 + $0x3] sm:$0x1]
        %v828 = vld [vmem:[%s306 + $0x4] sm:$0x1]
        %v829 = vld [vmem:[%s306 + $0x5] sm:$0x1]
        %v830 = vld [vmem:[%s306 + $0x6] sm:$0x1]
        %v831 = vld [vmem:[%s306 + $0x7] sm:$0x1]
        %v832 = vunpack.c.l.bf16 %v824
        %v833 = vunpack.c.l.bf16 %v825
        %v834 = vunpack.c.l.bf16 %v826
        %v835 = vunpack.c.l.bf16 %v827
        %v836 = vunpack.c.l.bf16 %v828
        %v837 = vunpack.c.l.bf16 %v829
        %v838 = vunpack.c.l.bf16 %v830
        %v839 = vunpack.c.l.bf16 %v831
        %vm840 = vcmp.gt.f32.partialorder %v832, 0.0
        %vm841 = vcmp.gt.f32.partialorder %v833, 0.0
        %vm842 = vcmp.gt.f32.partialorder %v834, 0.0
        %vm843 = vcmp.gt.f32.partialorder %v835, 0.0
        %vm844 = vcmp.gt.f32.partialorder %v836, 0.0
        %vm845 = vcmp.gt.f32.partialorder %v837, 0.0
        %vm846 = vcmp.gt.f32.partialorder %v838, 0.0
        %vm847 = vcmp.gt.f32.partialorder %v839, 0.0
        %v848 = vsel %vm840, 0.0, -1e+09
        %v849 = vsel %vm841, 0.0, -1e+09
        %v850 = vsel %vm842, 0.0, -1e+09
        %v851 = vsel %vm843, 0.0, -1e+09
        %v852 = vsel %vm844, 0.0, -1e+09
        %v853 = vsel %vm845, 0.0, -1e+09
        %v854 = vsel %vm846, 0.0, -1e+09
        %v855 = vsel %vm847, 0.0, -1e+09
        %v856 = vld [vmem:[#allocation8] sm:$0xf]
        %v857 = vld [vmem:[#allocation8 + $0x4] sm:$0xf]
        %v858 = vld [vmem:[#allocation8 + $0x8] sm:$0xf]
        %v859 = vld [vmem:[#allocation8 + $0xc] sm:$0xf]
        %v860 = vld [vmem:[#allocation8 + $0x10] sm:$0xf]
        %v861 = vld [vmem:[#allocation8 + $0x14] sm:$0xf]
        %v862 = vld [vmem:[#allocation8 + $0x18] sm:$0xf]
        %v863 = vld [vmem:[#allocation8 + $0x1c] sm:$0xf]
        %v864 = vld [vmem:[#allocation8 + $0x20] sm:$0xf]
        %v865 = vld [vmem:[#allocation8 + $0x24] sm:$0xf]
        %v866 = vld [vmem:[#allocation8 + $0x28] sm:$0xf]
        %v867 = vld [vmem:[#allocation8 + $0x2c] sm:$0xf]
        %v868 = vld [vmem:[#allocation8 + $0x30] sm:$0xf]
        %v869 = vld [vmem:[#allocation8 + $0x34] sm:$0xf]
        %v870 = vld [vmem:[#allocation8 + $0x38] sm:$0xf]
        %v871 = vld [vmem:[#allocation8 + $0x3c] sm:$0xf]
        %v872 = vld [vmem:[#allocation7] sm:$0xf]
        %v873 = vld [vmem:[#allocation7 + $0x4] sm:$0xf]
        %v874 = vunpack.c.l.bf16 %v872
        %v875 = vunpack.c.l.bf16 %v873
        %vm876 = vcmask 261120
        %v878 = vsel %vm876, %v792, 0
        %v881 = vsel %vm876, %v800, 0
        %883 = vmatprep.subr.bf16.mxu0 0
        %884 = vmatpush1.bf16.xpose.msra.mxu0 %v881
        %885 = vmatprep.subr.bf16.mxu0 0
        %886 = vmatpush1.bf16.xpose.msra.mxu0 0
        %887 = vmatprep.subr.bf16.mxu0 0
        %888 = vmatpush1.bf16.xpose.msra.mxu0 0
        %889 = vmatprep.subr.bf16.mxu0 0
        %890 = vmatpush1.bf16.xpose.msra.mxu0 0
        %891 = vmatprep.subr.bf16.mxu0 0
        %892 = vmatpush1.bf16.xpose.msra.mxu0 0
        %893 = vmatprep.subr.bf16.mxu0 0
        %894 = vmatpush1.bf16.xpose.msra.mxu0 0
        %895 = vmatprep.subr.bf16.mxu0 0
        %896 = vmatpush1.bf16.xpose.msra.mxu0 0
        %897 = vmatprep.subr.bf16.mxu0 0
        %898 = vmatpush1.bf16.xpose.msra.mxu0 0
        %899 = vmatprep.subr.bf16.mxu0 0
        %900 = vmatpush1.bf16.xpose.msra.mxu0 0
        %901 = vmatprep.subr.bf16.mxu0 0
        %902 = vmatpush1.bf16.xpose.msra.mxu0 0
        %903 = vmatprep.subr.bf16.mxu0 0
        %904 = vmatpush1.bf16.xpose.msra.mxu0 0
        %905 = vmatprep.subr.bf16.mxu0 0
        %906 = vmatpush1.bf16.xpose.msra.mxu0 0
        %907 = vmatprep.subr.bf16.mxu0 0
        %908 = vmatpush1.bf16.xpose.msra.mxu0 0
        %909 = vmatprep.subr.bf16.mxu0 0
        %910 = vmatpush1.bf16.xpose.msra.mxu0 0
        %911 = vmatprep.subr.bf16.mxu0 0
        %912 = vmatpush1.bf16.xpose.msra.mxu0 0
        %913 = vmatprep.subr.bf16.mxu0 0
        %914 = vmatpush1.bf16.xpose.msra.mxu0 0
        %915 = vmatprep.mubr.bf16.mxu0 0
        %916 = vmatmul.mubr.bf16.gmra.mrb[0].mxu0 %v878
        %v917 = vpop.f32.mrb[0].mxu0
        %v918 = vadd.f32 %v874, %v917
        %v919 = vpop.f32.mrb[0].mxu0
        %v920 = vpop.f32.mrb[0].mxu0
        %v921 = vadd.f32 %v875, %v920
        %v922 = vpop.f32.mrb[0].mxu0
        %923 = vdwg.mxu0
        %v925 = vsel %vm876, %v793, 0
        %v928 = vsel %vm876, %v801, 0
        %930 = vmatprep.subr.bf16.mxu0 0
        %931 = vmatpush1.bf16.xpose.msra.mxu0 %v928
        %932 = vmatprep.subr.bf16.mxu0 0
        %933 = vmatpush1.bf16.xpose.msra.mxu0 0
        %934 = vmatprep.subr.bf16.mxu0 0
        %935 = vmatpush1.bf16.xpose.msra.mxu0 0
        %936 = vmatprep.subr.bf16.mxu0 0
        %937 = vmatpush1.bf16.xpose.msra.mxu0 0
        %938 = vmatprep.subr.bf16.mxu0 0
        %939 = vmatpush1.bf16.xpose.msra.mxu0 0
        %940 = vmatprep.subr.bf16.mxu0 0
        %941 = vmatpush1.bf16.xpose.msra.mxu0 0
        %942 = vmatprep.subr.bf16.mxu0 0
        %943 = vmatpush1.bf16.xpose.msra.mxu0 0
        %944 = vmatprep.subr.bf16.mxu0 0
        %945 = vmatpush1.bf16.xpose.msra.mxu0 0
        %946 = vmatprep.subr.bf16.mxu0 0
        %947 = vmatpush1.bf16.xpose.msra.mxu0 0
        %948 = vmatprep.subr.bf16.mxu0 0
        %949 = vmatpush1.bf16.xpose.msra.mxu0 0
        %950 = vmatprep.subr.bf16.mxu0 0
        %951 = vmatpush1.bf16.xpose.msra.mxu0 0
        %952 = vmatprep.subr.bf16.mxu0 0
        %953 = vmatpush1.bf16.xpose.msra.mxu0 0
        %954 = vmatprep.subr.bf16.mxu0 0
        %955 = vmatpush1.bf16.xpose.msra.mxu0 0
        %956 = vmatprep.subr.bf16.mxu0 0
        %957 = vmatpush1.bf16.xpose.msra.mxu0 0
        %958 = vmatprep.subr.bf16.mxu0 0
        %959 = vmatpush1.bf16.xpose.msra.mxu0 0
        %960 = vmatprep.subr.bf16.mxu0 0
        %961 = vmatpush1.bf16.xpose.msra.mxu0 0
        %962 = vmatprep.mubr.bf16.mxu0 0
        %963 = vmatmul.mubr.bf16.gmra.mrb[0].mxu0 %v925
        %v964 = vpop.f32.mrb[0].mxu0
        %v965 = vadd.f32 %v874, %v964
        %v966 = vpop.f32.mrb[0].mxu0
        %v967 = vpop.f32.mrb[0].mxu0
        %v968 = vadd.f32 %v875, %v967
        %v969 = vpop.f32.mrb[0].mxu0
        %970 = vdwg.mxu0
        %v972 = vsel %vm876, %v794, 0
        %v975 = vsel %vm876, %v802, 0
        %977 = vmatprep.subr.bf16.mxu0 0
        %978 = vmatpush1.bf16.xpose.msra.mxu0 %v975
        %979 = vmatprep.subr.bf16.mxu0 0
        %980 = vmatpush1.bf16.xpose.msra.mxu0 0
        %981 = vmatprep.subr.bf16.mxu0 0
        %982 = vmatpush1.bf16.xpose.msra.mxu0 0
        %983 = vmatprep.subr.bf16.mxu0 0
        %984 = vmatpush1.bf16.xpose.msra.mxu0 0
        %985 = vmatprep.subr.bf16.mxu0 0
        %986 = vmatpush1.bf16.xpose.msra.mxu0 0
        %987 = vmatprep.subr.bf16.mxu0 0
        %988 = vmatpush1.bf16.xpose.msra.mxu0 0
        %989 = vmatprep.subr.bf16.mxu0 0
        %990 = vmatpush1.bf16.xpose.msra.mxu0 0
        %991 = vmatprep.subr.bf16.mxu0 0
        %992 = vmatpush1.bf16.xpose.msra.mxu0 0
        %993 = vmatprep.subr.bf16.mxu0 0
        %994 = vmatpush1.bf16.xpose.msra.mxu0 0
        %995 = vmatprep.subr.bf16.mxu0 0
        %996 = vmatpush1.bf16.xpose.msra.mxu0 0
        %997 = vmatprep.subr.bf16.mxu0 0
        %998 = vmatpush1.bf16.xpose.msra.mxu0 0
        %999 = vmatprep.subr.bf16.mxu0 0
        %1000 = vmatpush1.bf16.xpose.msra.mxu0 0
        %1001 = vmatprep.subr.bf16.mxu0 0
        %1002 = vmatpush1.bf16.xpose.msra.mxu0 0
        %1003 = vmatprep.subr.bf16.mxu0 0
        %1004 = vmatpush1.bf16.xpose.msra.mxu0 0
        %1005 = vmatprep.subr.bf16.mxu0 0
        %1006 = vmatpush1.bf16.xpose.msra.mxu0 0
        %1007 = vmatprep.subr.bf16.mxu0 0
        %1008 = vmatpush1.bf16.xpose.msra.mxu0 0
        %1009 = vmatprep.mubr.bf16.mxu0 0
        %1010 = vmatmul.mubr.bf16.gmra.mrb[0].mxu0 %v972
        %v1011 = vpop.f32.mrb[0].mxu0
        %v1012 = vadd.f32 %v874, %v1011
        %v1013 = vpop.f32.mrb[0].mxu0
        %v1014 = vpop.f32.mrb[0].mxu0
        %v1015 = vadd.f32 %v875, %v1014
        %v1016 = vpop.f32.mrb[0].mxu0
        %1017 = vdwg.mxu0
        %v1019 = vsel %vm876, %v795, 0
        %v1022 = vsel %vm876, %v803, 0
        %1024 = vmatprep.subr.bf16.mxu0 0
        %1025 = vmatpush1.bf16.xpose.msra.mxu0 %v1022
        %1026 = vmatprep.subr.bf16.mxu0 0
        %1027 = vmatpush1.bf16.xpose.msra.mxu0 0
        %1028 = vmatprep.subr.bf16.mxu0 0
        %1029 = vmatpush1.bf16.xpose.msra.mxu0 0
        %1030 = vmatprep.subr.bf16.mxu0 0
        %1031 = vmatpush1.bf16.xpose.msra.mxu0 0
        %1032 = vmatprep.subr.bf16.mxu0 0
        %1033 = vmatpush1.bf16.xpose.msra.mxu0 0
        %1034 = vmatprep.subr.bf16.mxu0 0
        %1035 = vmatpush1.bf16.xpose.msra.mxu0 0
        %1036 = vmatprep.subr.bf16.mxu0 0
        %1037 = vmatpush1.bf16.xpose.msra.mxu0 0
        %1038 = vmatprep.subr.bf16.mxu0 0
        %1039 = vmatpush1.bf16.xpose.msra.mxu0 0
        %1040 = vmatprep.subr.bf16.mxu0 0
        %1041 = vmatpush1.bf16.xpose.msra.mxu0 0
        %1042 = vmatprep.subr.bf16.mxu0 0
        %1043 = vmatpush1.bf16.xpose.msra.mxu0 0
        %1044 = vmatprep.subr.bf16.mxu0 0
        %1045 = vmatpush1.bf16.xpose.msra.mxu0 0
        %1046 = vmatprep.subr.bf16.mxu0 0
        %1047 = vmatpush1.bf16.xpose.msra.mxu0 0
        %1048 = vmatprep.subr.bf16.mxu0 0
        %1049 = vmatpush1.bf16.xpose.msra.mxu0 0
        %1050 = vmatprep.subr.bf16.mxu0 0
        %1051 = vmatpush1.bf16.xpose.msra.mxu0 0
        %1052 = vmatprep.subr.bf16.mxu0 0
        %1053 = vmatpush1.bf16.xpose.msra.mxu0 0
        %1054 = vmatprep.subr.bf16.mxu0 0
        %1055 = vmatpush1.bf16.xpose.msra.mxu0 0
        %1056 = vmatprep.mubr.bf16.mxu0 0
        %1057 = vmatmul.mubr.bf16.gmra.mrb[0].mxu0 %v1019
        %v1058 = vpop.f32.mrb[0].mxu0
        %v1059 = vadd.f32 %v874, %v1058
        %v1060 = vpop.f32.mrb[0].mxu0
        %v1061 = vpop.f32.mrb[0].mxu0
        %v1062 = vadd.f32 %v875, %v1061
        %v1063 = vpop.f32.mrb[0].mxu0
        %1064 = vdwg.mxu0
        %v1066 = vsel %vm876, %v796, 0
        %v1069 = vsel %vm876, %v804, 0
        %1071 = vmatprep.subr.bf16.mxu0 0
        %1072 = vmatpush1.bf16.xpose.msra.mxu0 %v1069
        %1073 = vmatprep.subr.bf16.mxu0 0
        %1074 = vmatpush1.bf16.xpose.msra.mxu0 0
        %1075 = vmatprep.subr.bf16.mxu0 0
        %1076 = vmatpush1.bf16.xpose.msra.mxu0 0
        %1077 = vmatprep.subr.bf16.mxu0 0
        %1078 = vmatpush1.bf16.xpose.msra.mxu0 0
        %1079 = vmatprep.subr.bf16.mxu0 0
        %1080 = vmatpush1.bf16.xpose.msra.mxu0 0
        %1081 = vmatprep.subr.bf16.mxu0 0
        %1082 = vmatpush1.bf16.xpose.msra.mxu0 0
        %1083 = vmatprep.subr.bf16.mxu0 0
        %1084 = vmatpush1.bf16.xpose.msra.mxu0 0
        %1085 = vmatprep.subr.bf16.mxu0 0
        %1086 = vmatpush1.bf16.xpose.msra.mxu0 0
        %1087 = vmatprep.subr.bf16.mxu0 0
        %1088 = vmatpush1.bf16.xpose.msra.mxu0 0
        %1089 = vmatprep.subr.bf16.mxu0 0
        %1090 = vmatpush1.bf16.xpose.msra.mxu0 0
        %1091 = vmatprep.subr.bf16.mxu0 0
        %1092 = vmatpush1.bf16.xpose.msra.mxu0 0
        %1093 = vmatprep.subr.bf16.mxu0 0
        %1094 = vmatpush1.bf16.xpose.msra.mxu0 0
        %1095 = vmatprep.subr.bf16.mxu0 0
        %1096 = vmatpush1.bf16.xpose.msra.mxu0 0
        %1097 = vmatprep.subr.bf16.mxu0 0
        %1098 = vmatpush1.bf16.xpose.msra.mxu0 0
        %1099 = vmatprep.subr.bf16.mxu0 0
        %1100 = vmatpush1.bf16.xpose.msra.mxu0 0
        %1101 = vmatprep.subr.bf16.mxu0 0
        %1102 = vmatpush1.bf16.xpose.msra.mxu0 0
        %1103 = vmatprep.mubr.bf16.mxu0 0
        %1104 = vmatmul.mubr.bf16.gmra.mrb[0].mxu0 %v1066
        %v1105 = vpop.f32.mrb[0].mxu0
        %v1106 = vadd.f32 %v874, %v1105
        %v1107 = vpop.f32.mrb[0].mxu0
        %v1108 = vpop.f32.mrb[0].mxu0
        %v1109 = vadd.f32 %v875, %v1108
        %v1110 = vpop.f32.mrb[0].mxu0
        %1111 = vdwg.mxu0
        %v1113 = vsel %vm876, %v797, 0
        %v1116 = vsel %vm876, %v805, 0
        %1118 = vmatprep.subr.bf16.mxu0 0
        %1119 = vmatpush1.bf16.xpose.msra.mxu0 %v1116
        %1120 = vmatprep.subr.bf16.mxu0 0
        %1121 = vmatpush1.bf16.xpose.msra.mxu0 0
        %1122 = vmatprep.subr.bf16.mxu0 0
        %1123 = vmatpush1.bf16.xpose.msra.mxu0 0
        %1124 = vmatprep.subr.bf16.mxu0 0
        %1125 = vmatpush1.bf16.xpose.msra.mxu0 0
        %1126 = vmatprep.subr.bf16.mxu0 0
        %1127 = vmatpush1.bf16.xpose.msra.mxu0 0
        %1128 = vmatprep.subr.bf16.mxu0 0
        %1129 = vmatpush1.bf16.xpose.msra.mxu0 0
        %1130 = vmatprep.subr.bf16.mxu0 0
        %1131 = vmatpush1.bf16.xpose.msra.mxu0 0
        %1132 = vmatprep.subr.bf16.mxu0 0
        %1133 = vmatpush1.bf16.xpose.msra.mxu0 0
        %1134 = vmatprep.subr.bf16.mxu0 0
        %1135 = vmatpush1.bf16.xpose.msra.mxu0 0
        %1136 = vmatprep.subr.bf16.mxu0 0
        %1137 = vmatpush1.bf16.xpose.msra.mxu0 0
        %1138 = vmatprep.subr.bf16.mxu0 0
        %1139 = vmatpush1.bf16.xpose.msra.mxu0 0
        %1140 = vmatprep.subr.bf16.mxu0 0
        %1141 = vmatpush1.bf16.xpose.msra.mxu0 0
        %1142 = vmatprep.subr.bf16.mxu0 0
        %1143 = vmatpush1.bf16.xpose.msra.mxu0 0
        %1144 = vmatprep.subr.bf16.mxu0 0
        %1145 = vmatpush1.bf16.xpose.msra.mxu0 0
        %1146 = vmatprep.subr.bf16.mxu0 0
        %1147 = vmatpush1.bf16.xpose.msra.mxu0 0
        %1148 = vmatprep.subr.bf16.mxu0 0
        %1149 = vmatpush1.bf16.xpose.msra.mxu0 0
        %1150 = vmatprep.mubr.bf16.mxu0 0
        %1151 = vmatmul.mubr.bf16.gmra.mrb[0].mxu0 %v1113
        %v1152 = vpop.f32.mrb[0].mxu0
        %v1153 = vadd.f32 %v874, %v1152
        %v1154 = vpop.f32.mrb[0].mxu0
        %v1155 = vpop.f32.mrb[0].mxu0
        %v1156 = vadd.f32 %v875, %v1155
        %v1157 = vpop.f32.mrb[0].mxu0
        %1158 = vdwg.mxu0
        %v1160 = vsel %vm876, %v798, 0
        %v1163 = vsel %vm876, %v806, 0
        %1165 = vmatprep.subr.bf16.mxu0 0
        %1166 = vmatpush1.bf16.xpose.msra.mxu0 %v1163
        %1167 = vmatprep.subr.bf16.mxu0 0
        %1168 = vmatpush1.bf16.xpose.msra.mxu0 0
        %1169 = vmatprep.subr.bf16.mxu0 0
        %1170 = vmatpush1.bf16.xpose.msra.mxu0 0
        %1171 = vmatprep.subr.bf16.mxu0 0
        %1172 = vmatpush1.bf16.xpose.msra.mxu0 0
        %1173 = vmatprep.subr.bf16.mxu0 0
        %1174 = vmatpush1.bf16.xpose.msra.mxu0 0
        %1175 = vmatprep.subr.bf16.mxu0 0
        %1176 = vmatpush1.bf16.xpose.msra.mxu0 0
        %1177 = vmatprep.subr.bf16.mxu0 0
        %1178 = vmatpush1.bf16.xpose.msra.mxu0 0
        %1179 = vmatprep.subr.bf16.mxu0 0
        %1180 = vmatpush1.bf16.xpose.msra.mxu0 0
        %1181 = vmatprep.subr.bf16.mxu0 0
        %1182 = vmatpush1.bf16.xpose.msra.mxu0 0
        %1183 = vmatprep.subr.bf16.mxu0 0
        %1184 = vmatpush1.bf16.xpose.msra.mxu0 0
        %1185 = vmatprep.subr.bf16.mxu0 0
        %1186 = vmatpush1.bf16.xpose.msra.mxu0 0
        %1187 = vmatprep.subr.bf16.mxu0 0
        %1188 = vmatpush1.bf16.xpose.msra.mxu0 0
        %1189 = vmatprep.subr.bf16.mxu0 0
        %1190 = vmatpush1.bf16.xpose.msra.mxu0 0
        %1191 = vmatprep.subr.bf16.mxu0 0
        %1192 = vmatpush1.bf16.xpose.msra.mxu0 0
        %1193 = vmatprep.subr.bf16.mxu0 0
        %1194 = vmatpush1.bf16.xpose.msra.mxu0 0
        %1195 = vmatprep.subr.bf16.mxu0 0
        %1196 = vmatpush1.bf16.xpose.msra.mxu0 0
        %1197 = vmatprep.mubr.bf16.mxu0 0
        %1198 = vmatmul.mubr.bf16.gmra.mrb[0].mxu0 %v1160
        %v1199 = vpop.f32.mrb[0].mxu0
        %v1200 = vadd.f32 %v874, %v1199
        %v1201 = vpop.f32.mrb[0].mxu0
        %v1202 = vpop.f32.mrb[0].mxu0
        %v1203 = vadd.f32 %v875, %v1202
        %v1204 = vpop.f32.mrb[0].mxu0
        %1205 = vdwg.mxu0
        %v1207 = vsel %vm876, %v799, 0
        %v1210 = vsel %vm876, %v807, 0
        %1212 = vmatprep.subr.bf16.mxu0 0
        %1213 = vmatpush1.bf16.xpose.msra.mxu0 %v1210
        %1214 = vmatprep.subr.bf16.mxu0 0
        %1215 = vmatpush1.bf16.xpose.msra.mxu0 0
        %1216 = vmatprep.subr.bf16.mxu0 0
        %1217 = vmatpush1.bf16.xpose.msra.mxu0 0
        %1218 = vmatprep.subr.bf16.mxu0 0
        %1219 = vmatpush1.bf16.xpose.msra.mxu0 0
        %1220 = vmatprep.subr.bf16.mxu0 0
        %1221 = vmatpush1.bf16.xpose.msra.mxu0 0
        %1222 = vmatprep.subr.bf16.mxu0 0
        %1223 = vmatpush1.bf16.xpose.msra.mxu0 0
        %1224 = vmatprep.subr.bf16.mxu0 0
        %1225 = vmatpush1.bf16.xpose.msra.mxu0 0
        %1226 = vmatprep.subr.bf16.mxu0 0
        %1227 = vmatpush1.bf16.xpose.msra.mxu0 0
        %1228 = vmatprep.subr.bf16.mxu0 0
        %1229 = vmatpush1.bf16.xpose.msra.mxu0 0
        %1230 = vmatprep.subr.bf16.mxu0 0
        %1231 = vmatpush1.bf16.xpose.msra.mxu0 0
        %1232 = vmatprep.subr.bf16.mxu0 0
        %1233 = vmatpush1.bf16.xpose.msra.mxu0 0
        %1234 = vmatprep.subr.bf16.mxu0 0
        %1235 = vmatpush1.bf16.xpose.msra.mxu0 0
        %1236 = vmatprep.subr.bf16.mxu0 0
        %1237 = vmatpush1.bf16.xpose.msra.mxu0 0
        %1238 = vmatprep.subr.bf16.mxu0 0
        %1239 = vmatpush1.bf16.xpose.msra.mxu0 0
        %1240 = vmatprep.subr.bf16.mxu0 0
        %1241 = vmatpush1.bf16.xpose.msra.mxu0 0
        %1242 = vmatprep.subr.bf16.mxu0 0
        %1243 = vmatpush1.bf16.xpose.msra.mxu0 0
        %1244 = vmatprep.mubr.bf16.mxu0 0
        %1245 = vmatmul.mubr.bf16.gmra.mrb[0].mxu0 %v1207
        %v1246 = vpop.f32.mrb[0].mxu0
        %v1247 = vadd.f32 %v874, %v1246
        %v1248 = vpop.f32.mrb[0].mxu0
        %v1249 = vpop.f32.mrb[0].mxu0
        %v1250 = vadd.f32 %v875, %v1249
        %v1251 = vpop.f32.mrb[0].mxu0
        %1252 = vdwg.mxu0
        %v1253 = vlaneseq
        %v1254 = vshrl.u32 %v1253, 7
        %v1255 = vsub.s32 0, %v1254
        %v1256 = vrot.slane %v848, %v1255
        %v1257 = vlaneseq
        %v1258 = vshrl.u32 %v1257, 7
        %v1259 = vsub.s32 0, %v1258
        %v1260 = vrot.slane %v849, %v1259
        %v1261 = vlaneseq
        %v1262 = vshrl.u32 %v1261, 7
        %v1263 = vsub.s32 0, %v1262
        %v1264 = vrot.slane %v850, %v1263
        %v1265 = vlaneseq
        %v1266 = vshrl.u32 %v1265, 7
        %v1267 = vsub.s32 0, %v1266
        %v1268 = vrot.slane %v851, %v1267
        %v1269 = vlaneseq
        %v1270 = vshrl.u32 %v1269, 7
        %v1271 = vsub.s32 0, %v1270
        %v1272 = vrot.slane %v852, %v1271
        %v1273 = vlaneseq
        %v1274 = vshrl.u32 %v1273, 7
        %v1275 = vsub.s32 0, %v1274
        %v1276 = vrot.slane %v853, %v1275
        %v1277 = vlaneseq
        %v1278 = vshrl.u32 %v1277, 7
        %v1279 = vsub.s32 0, %v1278
        %v1280 = vrot.slane %v854, %v1279
        %v1281 = vlaneseq
        %v1282 = vshrl.u32 %v1281, 7
        %v1283 = vsub.s32 0, %v1282
        %v1284 = vrot.slane %v855, %v1283
        %v1285 = vadd.f32 %v918, %v1256
        %v1286 = vadd.f32 %v921, %v1256
        %v1287 = vadd.f32 %v965, %v1260
        %v1288 = vadd.f32 %v968, %v1260
        %v1289 = vadd.f32 %v1012, %v1264
        %v1290 = vadd.f32 %v1015, %v1264
        %v1291 = vadd.f32 %v1059, %v1268
        %v1292 = vadd.f32 %v1062, %v1268
        %v1293 = vadd.f32 %v1106, %v1272
        %v1294 = vadd.f32 %v1109, %v1272
        %v1295 = vadd.f32 %v1153, %v1276
        %v1296 = vadd.f32 %v1156, %v1276
        %v1297 = vadd.f32 %v1200, %v1280
        %v1298 = vadd.f32 %v1203, %v1280
        %v1299 = vadd.f32 %v1247, %v1284
        %v1300 = vadd.f32 %v1250, %v1284
        %vm1301 = vcmask 130048
        %v1302 = vsel %vm1301, %v1285, -inf
        %1303 = vmax.xlane.f32.xlu0 %v1302
        %v1304 = vpop.xlane.xlu0 %1303
        %v1305 = vsel %vm1301, %v1286, -inf
        %1306 = vmax.xlane.f32.xlu0 %v1305
        %v1307 = vpop.xlane.xlu0 %1306
        %v1308 = vsel %vm1301, %v1287, -inf
        %1309 = vmax.xlane.f32.xlu0 %v1308
        %v1310 = vpop.xlane.xlu0 %1309
        %v1311 = vsel %vm1301, %v1288, -inf
        %1312 = vmax.xlane.f32.xlu0 %v1311
        %v1313 = vpop.xlane.xlu0 %1312
        %v1314 = vsel %vm1301, %v1289, -inf
        %1315 = vmax.xlane.f32.xlu0 %v1314
        %v1316 = vpop.xlane.xlu0 %1315
        %v1317 = vsel %vm1301, %v1290, -inf
        %1318 = vmax.xlane.f32.xlu0 %v1317
        %v1319 = vpop.xlane.xlu0 %1318
        %v1320 = vsel %vm1301, %v1291, -inf
        %1321 = vmax.xlane.f32.xlu0 %v1320
        %v1322 = vpop.xlane.xlu0 %1321
        %v1323 = vsel %vm1301, %v1292, -inf
        %1324 = vmax.xlane.f32.xlu0 %v1323
        %v1325 = vpop.xlane.xlu0 %1324
        %v1326 = vsel %vm1301, %v1293, -inf
        %1327 = vmax.xlane.f32.xlu0 %v1326
        %v1328 = vpop.xlane.xlu0 %1327
        %v1329 = vsel %vm1301, %v1294, -inf
        %1330 = vmax.xlane.f32.xlu0 %v1329
        %v1331 = vpop.xlane.xlu0 %1330
        %v1332 = vsel %vm1301, %v1295, -inf
        %1333 = vmax.xlane.f32.xlu0 %v1332
        %v1334 = vpop.xlane.xlu0 %1333
        %v1335 = vsel %vm1301, %v1296, -inf
        %1336 = vmax.xlane.f32.xlu0 %v1335
        %v1337 = vpop.xlane.xlu0 %1336
        %v1338 = vsel %vm1301, %v1297, -inf
        %1339 = vmax.xlane.f32.xlu0 %v1338
        %v1340 = vpop.xlane.xlu0 %1339
        %v1341 = vsel %vm1301, %v1298, -inf
        %1342 = vmax.xlane.f32.xlu0 %v1341
        %v1343 = vpop.xlane.xlu0 %1342
        %v1344 = vsel %vm1301, %v1299, -inf
        %1345 = vmax.xlane.f32.xlu0 %v1344
        %v1346 = vpop.xlane.xlu0 %1345
        %v1347 = vsel %vm1301, %v1300, -inf
        %1348 = vmax.xlane.f32.xlu0 %v1347
        %v1349 = vpop.xlane.xlu0 %1348
        %v1350 = vsub.f32 %v1285, %v1304
        %v1351 = vsub.f32 %v1286, %v1307
        %v1352 = vsub.f32 %v1287, %v1310
        %v1353 = vsub.f32 %v1288, %v1313
        %v1354 = vsub.f32 %v1289, %v1316
        %v1355 = vsub.f32 %v1290, %v1319
        %v1356 = vsub.f32 %v1291, %v1322
        %v1357 = vsub.f32 %v1292, %v1325
        %v1358 = vsub.f32 %v1293, %v1328
        %v1359 = vsub.f32 %v1294, %v1331
        %v1360 = vsub.f32 %v1295, %v1334
        %v1361 = vsub.f32 %v1296, %v1337
        %v1362 = vsub.f32 %v1297, %v1340
        %v1363 = vsub.f32 %v1298, %v1343
        %v1364 = vsub.f32 %v1299, %v1346
        %v1365 = vsub.f32 %v1300, %v1349
        %v1366 = vmul.f32 %v1350, 1.442695
        %v1367 = vpow.pop %v1366
        %v1368 = vmul.f32 %v1351, 1.442695
        %v1369 = vpow.pop %v1368
        %v1370 = vmul.f32 %v1352, 1.442695
        %v1371 = vpow.pop %v1370
        %v1372 = vmul.f32 %v1353, 1.442695
        %v1373 = vpow.pop %v1372
        %v1374 = vmul.f32 %v1354, 1.442695
        %v1375 = vpow.pop %v1374
        %v1376 = vmul.f32 %v1355, 1.442695
        %v1377 = vpow.pop %v1376
        %v1378 = vmul.f32 %v1356, 1.442695
        %v1379 = vpow.pop %v1378
        %v1380 = vmul.f32 %v1357, 1.442695
        %v1381 = vpow.pop %v1380
        %v1382 = vmul.f32 %v1358, 1.442695
        %v1383 = vpow.pop %v1382
        %v1384 = vmul.f32 %v1359, 1.442695
        %v1385 = vpow.pop %v1384
        %v1386 = vmul.f32 %v1360, 1.442695
        %v1387 = vpow.pop %v1386
        %v1388 = vmul.f32 %v1361, 1.442695
        %v1389 = vpow.pop %v1388
        %v1390 = vmul.f32 %v1362, 1.442695
        %v1391 = vpow.pop %v1390
        %v1392 = vmul.f32 %v1363, 1.442695
        %v1393 = vpow.pop %v1392
        %v1394 = vmul.f32 %v1364, 1.442695
        %v1395 = vpow.pop %v1394
        %v1396 = vmul.f32 %v1365, 1.442695
        %v1397 = vpow.pop %v1396
        %v1398 = vsel %vm1301, %v1367, 0.0
        %1399 = vadd.xlane.f32.xlu0 %v1398
        %v1400 = vpop.xlane.xlu0 %1399
        %v1401 = vsel %vm1301, %v1369, 0.0
        %1402 = vadd.xlane.f32.xlu0 %v1401
        %v1403 = vpop.xlane.xlu0 %1402
        %v1404 = vsel %vm1301, %v1371, 0.0
        %1405 = vadd.xlane.f32.xlu0 %v1404
        %v1406 = vpop.xlane.xlu0 %1405
        %v1407 = vsel %vm1301, %v1373, 0.0
        %1408 = vadd.xlane.f32.xlu0 %v1407
        %v1409 = vpop.xlane.xlu0 %1408
        %v1410 = vsel %vm1301, %v1375, 0.0
        %1411 = vadd.xlane.f32.xlu0 %v1410
        %v1412 = vpop.xlane.xlu0 %1411
        %v1413 = vsel %vm1301, %v1377, 0.0
        %1414 = vadd.xlane.f32.xlu0 %v1413
        %v1415 = vpop.xlane.xlu0 %1414
        %v1416 = vsel %vm1301, %v1379, 0.0
        %1417 = vadd.xlane.f32.xlu0 %v1416
        %v1418 = vpop.xlane.xlu0 %1417
        %v1419 = vsel %vm1301, %v1381, 0.0
        %1420 = vadd.xlane.f32.xlu0 %v1419
        %v1421 = vpop.xlane.xlu0 %1420
        %v1422 = vsel %vm1301, %v1383, 0.0
        %1423 = vadd.xlane.f32.xlu0 %v1422
        %v1424 = vpop.xlane.xlu0 %1423
        %v1425 = vsel %vm1301, %v1385, 0.0
        %1426 = vadd.xlane.f32.xlu0 %v1425
        %v1427 = vpop.xlane.xlu0 %1426
        %v1428 = vsel %vm1301, %v1387, 0.0
        %1429 = vadd.xlane.f32.xlu0 %v1428
        %v1430 = vpop.xlane.xlu0 %1429
        %v1431 = vsel %vm1301, %v1389, 0.0
        %1432 = vadd.xlane.f32.xlu0 %v1431
        %v1433 = vpop.xlane.xlu0 %1432
        %v1434 = vsel %vm1301, %v1391, 0.0
        %1435 = vadd.xlane.f32.xlu0 %v1434
        %v1436 = vpop.xlane.xlu0 %1435
        %v1437 = vsel %vm1301, %v1393, 0.0
        %1438 = vadd.xlane.f32.xlu0 %v1437
        %v1439 = vpop.xlane.xlu0 %1438
        %v1440 = vsel %vm1301, %v1395, 0.0
        %1441 = vadd.xlane.f32.xlu0 %v1440
        %v1442 = vpop.xlane.xlu0 %1441
        %v1443 = vsel %vm1301, %v1397, 0.0
        %1444 = vadd.xlane.f32.xlu0 %v1443
        %v1445 = vpop.xlane.xlu0 %1444
        %v1446 = vpack.c.bf16 %v1369, %v1367
        %v1447 = vpack.c.bf16 %v1373, %v1371
        %v1448 = vpack.c.bf16 %v1377, %v1375
        %v1449 = vpack.c.bf16 %v1381, %v1379
        %v1450 = vpack.c.bf16 %v1385, %v1383
        %v1451 = vpack.c.bf16 %v1389, %v1387
        %v1452 = vpack.c.bf16 %v1393, %v1391
        %v1453 = vpack.c.bf16 %v1397, %v1395
        %v1455 = vsel %vm1301, %v1446, 0
        %1457 = vmatprep.subr.bf16.mxu0 0
        %1458 = vmatpush1.bf16.msra.mxu0 %v808
        %1459 = vmatprep.subr.bf16.mxu0 0
        %1460 = vmatpush1.bf16.msra.mxu0 0
        %1461 = vmatprep.subr.bf16.mxu0 0
        %1462 = vmatpush1.bf16.msra.mxu0 0
        %1463 = vmatprep.subr.bf16.mxu0 0
        %1464 = vmatpush1.bf16.msra.mxu0 0
        %1465 = vmatprep.subr.bf16.mxu0 0
        %1466 = vmatpush1.bf16.msra.mxu0 0
        %1467 = vmatprep.subr.bf16.mxu0 0
        %1468 = vmatpush1.bf16.msra.mxu0 0
        %1469 = vmatprep.subr.bf16.mxu0 0
        %1470 = vmatpush1.bf16.msra.mxu0 0
        %1471 = vmatprep.subr.bf16.mxu0 0
        %1472 = vmatpush1.bf16.msra.mxu0 0
        %1473 = vmatprep.subr.bf16.mxu0 0
        %1474 = vmatpush1.bf16.msra.mxu0 0
        %1475 = vmatprep.subr.bf16.mxu0 0
        %1476 = vmatpush1.bf16.msra.mxu0 0
        %1477 = vmatprep.subr.bf16.mxu0 0
        %1478 = vmatpush1.bf16.msra.mxu0 0
        %1479 = vmatprep.subr.bf16.mxu0 0
        %1480 = vmatpush1.bf16.msra.mxu0 0
        %1481 = vmatprep.subr.bf16.mxu0 0
        %1482 = vmatpush1.bf16.msra.mxu0 0
        %1483 = vmatprep.subr.bf16.mxu0 0
        %1484 = vmatpush1.bf16.msra.mxu0 0
        %1485 = vmatprep.subr.bf16.mxu0 0
        %1486 = vmatpush1.bf16.msra.mxu0 0
        %1487 = vmatprep.subr.bf16.mxu0 0
        %1488 = vmatpush1.bf16.msra.mxu0 0
        %1489 = vmatprep.mubr.bf16.mxu0 0
        %1490 = vmatmul.mubr.bf16.gmra.mrb[0].mxu0 %v1455
        %v1491 = vpop.f32.mrb[0].mxu0
        %v1492 = vadd.f32 0.0, %v1491
        %v1493 = vpop.f32.mrb[0].mxu0
        %v1494 = vpop.f32.mrb[0].mxu0
        %v1495 = vadd.f32 0.0, %v1494
        %v1496 = vpop.f32.mrb[0].mxu0
        %1497 = vdwg.mxu0
        %v1499 = vsel %vm1301, %v1447, 0
        %1501 = vmatprep.subr.bf16.mxu0 0
        %1502 = vmatpush1.bf16.msra.mxu0 %v809
        %1503 = vmatprep.subr.bf16.mxu0 0
        %1504 = vmatpush1.bf16.msra.mxu0 0
        %1505 = vmatprep.subr.bf16.mxu0 0
        %1506 = vmatpush1.bf16.msra.mxu0 0
        %1507 = vmatprep.subr.bf16.mxu0 0
        %1508 = vmatpush1.bf16.msra.mxu0 0
        %1509 = vmatprep.subr.bf16.mxu0 0
        %1510 = vmatpush1.bf16.msra.mxu0 0
        %1511 = vmatprep.subr.bf16.mxu0 0
        %1512 = vmatpush1.bf16.msra.mxu0 0
        %1513 = vmatprep.subr.bf16.mxu0 0
        %1514 = vmatpush1.bf16.msra.mxu0 0
        %1515 = vmatprep.subr.bf16.mxu0 0
        %1516 = vmatpush1.bf16.msra.mxu0 0
        %1517 = vmatprep.subr.bf16.mxu0 0
        %1518 = vmatpush1.bf16.msra.mxu0 0
        %1519 = vmatprep.subr.bf16.mxu0 0
        %1520 = vmatpush1.bf16.msra.mxu0 0
        %1521 = vmatprep.subr.bf16.mxu0 0
        %1522 = vmatpush1.bf16.msra.mxu0 0
        %1523 = vmatprep.subr.bf16.mxu0 0
        %1524 = vmatpush1.bf16.msra.mxu0 0
        %1525 = vmatprep.subr.bf16.mxu0 0
        %1526 = vmatpush1.bf16.msra.mxu0 0
        %1527 = vmatprep.subr.bf16.mxu0 0
        %1528 = vmatpush1.bf16.msra.mxu0 0
        %1529 = vmatprep.subr.bf16.mxu0 0
        %1530 = vmatpush1.bf16.msra.mxu0 0
        %1531 = vmatprep.subr.bf16.mxu0 0
        %1532 = vmatpush1.bf16.msra.mxu0 0
        %1533 = vmatprep.mubr.bf16.mxu0 0
        %1534 = vmatmul.mubr.bf16.gmra.mrb[0].mxu0 %v1499
        %v1535 = vpop.f32.mrb[0].mxu0
        %v1536 = vadd.f32 0.0, %v1535
        %v1537 = vpop.f32.mrb[0].mxu0
        %v1538 = vpop.f32.mrb[0].mxu0
        %v1539 = vadd.f32 0.0, %v1538
        %v1540 = vpop.f32.mrb[0].mxu0
        %1541 = vdwg.mxu0
        %v1543 = vsel %vm1301, %v1448, 0
        %1545 = vmatprep.subr.bf16.mxu0 0
        %1546 = vmatpush1.bf16.msra.mxu0 %v810
        %1547 = vmatprep.subr.bf16.mxu0 0
        %1548 = vmatpush1.bf16.msra.mxu0 0
        %1549 = vmatprep.subr.bf16.mxu0 0
        %1550 = vmatpush1.bf16.msra.mxu0 0
        %1551 = vmatprep.subr.bf16.mxu0 0
        %1552 = vmatpush1.bf16.msra.mxu0 0
        %1553 = vmatprep.subr.bf16.mxu0 0
        %1554 = vmatpush1.bf16.msra.mxu0 0
        %1555 = vmatprep.subr.bf16.mxu0 0
        %1556 = vmatpush1.bf16.msra.mxu0 0
        %1557 = vmatprep.subr.bf16.mxu0 0
        %1558 = vmatpush1.bf16.msra.mxu0 0
        %1559 = vmatprep.subr.bf16.mxu0 0
        %1560 = vmatpush1.bf16.msra.mxu0 0
        %1561 = vmatprep.subr.bf16.mxu0 0
        %1562 = vmatpush1.bf16.msra.mxu0 0
        %1563 = vmatprep.subr.bf16.mxu0 0
        %1564 = vmatpush1.bf16.msra.mxu0 0
        %1565 = vmatprep.subr.bf16.mxu0 0
        %1566 = vmatpush1.bf16.msra.mxu0 0
        %1567 = vmatprep.subr.bf16.mxu0 0
        %1568 = vmatpush1.bf16.msra.mxu0 0
        %1569 = vmatprep.subr.bf16.mxu0 0
        %1570 = vmatpush1.bf16.msra.mxu0 0
        %1571 = vmatprep.subr.bf16.mxu0 0
        %1572 = vmatpush1.bf16.msra.mxu0 0
        %1573 = vmatprep.subr.bf16.mxu0 0
        %1574 = vmatpush1.bf16.msra.mxu0 0
        %1575 = vmatprep.subr.bf16.mxu0 0
        %1576 = vmatpush1.bf16.msra.mxu0 0
        %1577 = vmatprep.mubr.bf16.mxu0 0
        %1578 = vmatmul.mubr.bf16.gmra.mrb[0].mxu0 %v1543
        %v1579 = vpop.f32.mrb[0].mxu0
        %v1580 = vadd.f32 0.0, %v1579
        %v1581 = vpop.f32.mrb[0].mxu0
        %v1582 = vpop.f32.mrb[0].mxu0
        %v1583 = vadd.f32 0.0, %v1582
        %v1584 = vpop.f32.mrb[0].mxu0
        %1585 = vdwg.mxu0
        %v1587 = vsel %vm1301, %v1449, 0
        %1589 = vmatprep.subr.bf16.mxu0 0
        %1590 = vmatpush1.bf16.msra.mxu0 %v811
        %1591 = vmatprep.subr.bf16.mxu0 0
        %1592 = vmatpush1.bf16.msra.mxu0 0
        %1593 = vmatprep.subr.bf16.mxu0 0
        %1594 = vmatpush1.bf16.msra.mxu0 0
        %1595 = vmatprep.subr.bf16.mxu0 0
        %1596 = vmatpush1.bf16.msra.mxu0 0
        %1597 = vmatprep.subr.bf16.mxu0 0
        %1598 = vmatpush1.bf16.msra.mxu0 0
        %1599 = vmatprep.subr.bf16.mxu0 0
        %1600 = vmatpush1.bf16.msra.mxu0 0
        %1601 = vmatprep.subr.bf16.mxu0 0
        %1602 = vmatpush1.bf16.msra.mxu0 0
        %1603 = vmatprep.subr.bf16.mxu0 0
        %1604 = vmatpush1.bf16.msra.mxu0 0
        %1605 = vmatprep.subr.bf16.mxu0 0
        %1606 = vmatpush1.bf16.msra.mxu0 0
        %1607 = vmatprep.subr.bf16.mxu0 0
        %1608 = vmatpush1.bf16.msra.mxu0 0
        %1609 = vmatprep.subr.bf16.mxu0 0
        %1610 = vmatpush1.bf16.msra.mxu0 0
        %1611 = vmatprep.subr.bf16.mxu0 0
        %1612 = vmatpush1.bf16.msra.mxu0 0
        %1613 = vmatprep.subr.bf16.mxu0 0
        %1614 = vmatpush1.bf16.msra.mxu0 0
        %1615 = vmatprep.subr.bf16.mxu0 0
        %1616 = vmatpush1.bf16.msra.mxu0 0
        %1617 = vmatprep.subr.bf16.mxu0 0
        %1618 = vmatpush1.bf16.msra.mxu0 0
        %1619 = vmatprep.subr.bf16.mxu0 0
        %1620 = vmatpush1.bf16.msra.mxu0 0
        %1621 = vmatprep.mubr.bf16.mxu0 0
        %1622 = vmatmul.mubr.bf16.gmra.mrb[0].mxu0 %v1587
        %v1623 = vpop.f32.mrb[0].mxu0
        %v1624 = vadd.f32 0.0, %v1623
        %v1625 = vpop.f32.mrb[0].mxu0
        %v1626 = vpop.f32.mrb[0].mxu0
        %v1627 = vadd.f32 0.0, %v1626
        %v1628 = vpop.f32.mrb[0].mxu0
        %1629 = vdwg.mxu0
        %v1631 = vsel %vm1301, %v1450, 0
        %1633 = vmatprep.subr.bf16.mxu0 0
        %1634 = vmatpush1.bf16.msra.mxu0 %v812
        %1635 = vmatprep.subr.bf16.mxu0 0
        %1636 = vmatpush1.bf16.msra.mxu0 0
        %1637 = vmatprep.subr.bf16.mxu0 0
        %1638 = vmatpush1.bf16.msra.mxu0 0
        %1639 = vmatprep.subr.bf16.mxu0 0
        %1640 = vmatpush1.bf16.msra.mxu0 0
        %1641 = vmatprep.subr.bf16.mxu0 0
        %1642 = vmatpush1.bf16.msra.mxu0 0
        %1643 = vmatprep.subr.bf16.mxu0 0
        %1644 = vmatpush1.bf16.msra.mxu0 0
        %1645 = vmatprep.subr.bf16.mxu0 0
        %1646 = vmatpush1.bf16.msra.mxu0 0
        %1647 = vmatprep.subr.bf16.mxu0 0
        %1648 = vmatpush1.bf16.msra.mxu0 0
        %1649 = vmatprep.subr.bf16.mxu0 0
        %1650 = vmatpush1.bf16.msra.mxu0 0
        %1651 = vmatprep.subr.bf16.mxu0 0
        %1652 = vmatpush1.bf16.msra.mxu0 0
        %1653 = vmatprep.subr.bf16.mxu0 0
        %1654 = vmatpush1.bf16.msra.mxu0 0
        %1655 = vmatprep.subr.bf16.mxu0 0
        %1656 = vmatpush1.bf16.msra.mxu0 0
        %1657 = vmatprep.subr.bf16.mxu0 0
        %1658 = vmatpush1.bf16.msra.mxu0 0
        %1659 = vmatprep.subr.bf16.mxu0 0
        %1660 = vmatpush1.bf16.msra.mxu0 0
        %1661 = vmatprep.subr.bf16.mxu0 0
        %1662 = vmatpush1.bf16.msra.mxu0 0
        %1663 = vmatprep.subr.bf16.mxu0 0
        %1664 = vmatpush1.bf16.msra.mxu0 0
        %1665 = vmatprep.mubr.bf16.mxu0 0
        %1666 = vmatmul.mubr.bf16.gmra.mrb[0].mxu0 %v1631
        %v1667 = vpop.f32.mrb[0].mxu0
        %v1668 = vadd.f32 0.0, %v1667
        %v1669 = vpop.f32.mrb[0].mxu0
        %v1670 = vpop.f32.mrb[0].mxu0
        %v1671 = vadd.f32 0.0, %v1670
        %v1672 = vpop.f32.mrb[0].mxu0
        %1673 = vdwg.mxu0
        %v1675 = vsel %vm1301, %v1451, 0
        %1677 = vmatprep.subr.bf16.mxu0 0
        %1678 = vmatpush1.bf16.msra.mxu0 %v813
        %1679 = vmatprep.subr.bf16.mxu0 0
        %1680 = vmatpush1.bf16.msra.mxu0 0
        %1681 = vmatprep.subr.bf16.mxu0 0
        %1682 = vmatpush1.bf16.msra.mxu0 0
        %1683 = vmatprep.subr.bf16.mxu0 0
        %1684 = vmatpush1.bf16.msra.mxu0 0
        %1685 = vmatprep.subr.bf16.mxu0 0
        %1686 = vmatpush1.bf16.msra.mxu0 0
        %1687 = vmatprep.subr.bf16.mxu0 0
        %1688 = vmatpush1.bf16.msra.mxu0 0
        %1689 = vmatprep.subr.bf16.mxu0 0
        %1690 = vmatpush1.bf16.msra.mxu0 0
        %1691 = vmatprep.subr.bf16.mxu0 0
        %1692 = vmatpush1.bf16.msra.mxu0 0
        %1693 = vmatprep.subr.bf16.mxu0 0
        %1694 = vmatpush1.bf16.msra.mxu0 0
        %1695 = vmatprep.subr.bf16.mxu0 0
        %1696 = vmatpush1.bf16.msra.mxu0 0
        %1697 = vmatprep.subr.bf16.mxu0 0
        %1698 = vmatpush1.bf16.msra.mxu0 0
        %1699 = vmatprep.subr.bf16.mxu0 0
        %1700 = vmatpush1.bf16.msra.mxu0 0
        %1701 = vmatprep.subr.bf16.mxu0 0
        %1702 = vmatpush1.bf16.msra.mxu0 0
        %1703 = vmatprep.subr.bf16.mxu0 0
        %1704 = vmatpush1.bf16.msra.mxu0 0
        %1705 = vmatprep.subr.bf16.mxu0 0
        %1706 = vmatpush1.bf16.msra.mxu0 0
        %1707 = vmatprep.subr.bf16.mxu0 0
        %1708 = vmatpush1.bf16.msra.mxu0 0
        %1709 = vmatprep.mubr.bf16.mxu0 0
        %1710 = vmatmul.mubr.bf16.gmra.mrb[0].mxu0 %v1675
        %v1711 = vpop.f32.mrb[0].mxu0
        %v1712 = vadd.f32 0.0, %v1711
        %v1713 = vpop.f32.mrb[0].mxu0
        %v1714 = vpop.f32.mrb[0].mxu0
        %v1715 = vadd.f32 0.0, %v1714
        %v1716 = vpop.f32.mrb[0].mxu0
        %1717 = vdwg.mxu0
        %v1719 = vsel %vm1301, %v1452, 0
        %1721 = vmatprep.subr.bf16.mxu0 0
        %1722 = vmatpush1.bf16.msra.mxu0 %v814
        %1723 = vmatprep.subr.bf16.mxu0 0
        %1724 = vmatpush1.bf16.msra.mxu0 0
        %1725 = vmatprep.subr.bf16.mxu0 0
        %1726 = vmatpush1.bf16.msra.mxu0 0
        %1727 = vmatprep.subr.bf16.mxu0 0
        %1728 = vmatpush1.bf16.msra.mxu0 0
        %1729 = vmatprep.subr.bf16.mxu0 0
        %1730 = vmatpush1.bf16.msra.mxu0 0
        %1731 = vmatprep.subr.bf16.mxu0 0
        %1732 = vmatpush1.bf16.msra.mxu0 0
        %1733 = vmatprep.subr.bf16.mxu0 0
        %1734 = vmatpush1.bf16.msra.mxu0 0
        %1735 = vmatprep.subr.bf16.mxu0 0
        %1736 = vmatpush1.bf16.msra.mxu0 0
        %1737 = vmatprep.subr.bf16.mxu0 0
        %1738 = vmatpush1.bf16.msra.mxu0 0
        %1739 = vmatprep.subr.bf16.mxu0 0
        %1740 = vmatpush1.bf16.msra.mxu0 0
        %1741 = vmatprep.subr.bf16.mxu0 0
        %1742 = vmatpush1.bf16.msra.mxu0 0
        %1743 = vmatprep.subr.bf16.mxu0 0
        %1744 = vmatpush1.bf16.msra.mxu0 0
        %1745 = vmatprep.subr.bf16.mxu0 0
        %1746 = vmatpush1.bf16.msra.mxu0 0
        %1747 = vmatprep.subr.bf16.mxu0 0
        %1748 = vmatpush1.bf16.msra.mxu0 0
        %1749 = vmatprep.subr.bf16.mxu0 0
        %1750 = vmatpush1.bf16.msra.mxu0 0
        %1751 = vmatprep.subr.bf16.mxu0 0
        %1752 = vmatpush1.bf16.msra.mxu0 0
        %1753 = vmatprep.mubr.bf16.mxu0 0
        %1754 = vmatmul.mubr.bf16.gmra.mrb[0].mxu0 %v1719
        %v1755 = vpop.f32.mrb[0].mxu0
        %v1756 = vadd.f32 0.0, %v1755
        %v1757 = vpop.f32.mrb[0].mxu0
        %v1758 = vpop.f32.mrb[0].mxu0
        %v1759 = vadd.f32 0.0, %v1758
        %v1760 = vpop.f32.mrb[0].mxu0
        %1761 = vdwg.mxu0
        %v1763 = vsel %vm1301, %v1453, 0
        %1765 = vmatprep.subr.bf16.mxu0 0
        %1766 = vmatpush1.bf16.msra.mxu0 %v815
        %1767 = vmatprep.subr.bf16.mxu0 0
        %1768 = vmatpush1.bf16.msra.mxu0 0
        %1769 = vmatprep.subr.bf16.mxu0 0
        %1770 = vmatpush1.bf16.msra.mxu0 0
        %1771 = vmatprep.subr.bf16.mxu0 0
        %1772 = vmatpush1.bf16.msra.mxu0 0
        %1773 = vmatprep.subr.bf16.mxu0 0
        %1774 = vmatpush1.bf16.msra.mxu0 0
        %1775 = vmatprep.subr.bf16.mxu0 0
        %1776 = vmatpush1.bf16.msra.mxu0 0
        %1777 = vmatprep.subr.bf16.mxu0 0
        %1778 = vmatpush1.bf16.msra.mxu0 0
        %1779 = vmatprep.subr.bf16.mxu0 0
        %1780 = vmatpush1.bf16.msra.mxu0 0
        %1781 = vmatprep.subr.bf16.mxu0 0
        %1782 = vmatpush1.bf16.msra.mxu0 0
        %1783 = vmatprep.subr.bf16.mxu0 0
        %1784 = vmatpush1.bf16.msra.mxu0 0
        %1785 = vmatprep.subr.bf16.mxu0 0
        %1786 = vmatpush1.bf16.msra.mxu0 0
        %1787 = vmatprep.subr.bf16.mxu0 0
        %1788 = vmatpush1.bf16.msra.mxu0 0
        %1789 = vmatprep.subr.bf16.mxu0 0
        %1790 = vmatpush1.bf16.msra.mxu0 0
        %1791 = vmatprep.subr.bf16.mxu0 0
        %1792 = vmatpush1.bf16.msra.mxu0 0
        %1793 = vmatprep.subr.bf16.mxu0 0
        %1794 = vmatpush1.bf16.msra.mxu0 0
        %1795 = vmatprep.subr.bf16.mxu0 0
        %1796 = vmatpush1.bf16.msra.mxu0 0
        %1797 = vmatprep.mubr.bf16.mxu0 0
        %1798 = vmatmul.mubr.bf16.gmra.mrb[0].mxu0 %v1763
        %v1799 = vpop.f32.mrb[0].mxu0
        %v1800 = vadd.f32 0.0, %v1799
        %v1801 = vpop.f32.mrb[0].mxu0
        %v1802 = vpop.f32.mrb[0].mxu0
        %v1803 = vadd.f32 0.0, %v1802
        %v1804 = vpop.f32.mrb[0].mxu0
        %1805 = vdwg.mxu0
        %v1806 = vrcp.pop %v1400
        %v1807 = vrcp.pop %v1403
        %v1808 = vrcp.pop %v1406
        %v1809 = vrcp.pop %v1409
        %v1810 = vrcp.pop %v1412
        %v1811 = vrcp.pop %v1415
        %v1812 = vrcp.pop %v1418
        %v1813 = vrcp.pop %v1421
        %v1814 = vrcp.pop %v1424
        %v1815 = vrcp.pop %v1427
        %v1816 = vrcp.pop %v1430
        %v1817 = vrcp.pop %v1433
        %v1818 = vrcp.pop %v1436
        %v1819 = vrcp.pop %v1439
        %v1820 = vrcp.pop %v1442
        %v1821 = vrcp.pop %v1445
        %v1822 = vunpack.c.l.bf16 %v816
        %v1823 = vunpack.c.h.bf16 %v816
        %v1824 = vunpack.c.l.bf16 %v817
        %v1825 = vunpack.c.h.bf16 %v817
        %v1826 = vunpack.c.l.bf16 %v818
        %v1827 = vunpack.c.h.bf16 %v818
        %v1828 = vunpack.c.l.bf16 %v819
        %v1829 = vunpack.c.h.bf16 %v819
        %v1830 = vunpack.c.l.bf16 %v820
        %v1831 = vunpack.c.h.bf16 %v820
        %v1832 = vunpack.c.l.bf16 %v821
        %v1833 = vunpack.c.h.bf16 %v821
        %v1834 = vunpack.c.l.bf16 %v822
        %v1835 = vunpack.c.h.bf16 %v822
        %v1836 = vunpack.c.l.bf16 %v823
        %v1837 = vunpack.c.h.bf16 %v823
        %v1838 = vxor.u32 %v1822, 2147483648
        %v1839 = vxor.u32 %v1823, 2147483648
        %v1840 = vxor.u32 %v1824, 2147483648
        %v1841 = vxor.u32 %v1825, 2147483648
        %v1842 = vxor.u32 %v1826, 2147483648
        %v1843 = vxor.u32 %v1827, 2147483648
        %v1844 = vxor.u32 %v1828, 2147483648
        %v1845 = vxor.u32 %v1829, 2147483648
        %v1846 = vxor.u32 %v1830, 2147483648
        %v1847 = vxor.u32 %v1831, 2147483648
        %v1848 = vxor.u32 %v1832, 2147483648
        %v1849 = vxor.u32 %v1833, 2147483648
        %v1850 = vxor.u32 %v1834, 2147483648
        %v1851 = vxor.u32 %v1835, 2147483648
        %v1852 = vxor.u32 %v1836, 2147483648
        %v1853 = vxor.u32 %v1837, 2147483648
        %v1854 = vmul.f32 %v1838, 1.442695
        %v1855 = vpow.pop %v1854
        %v1856 = vmul.f32 %v1839, 1.442695
        %v1857 = vpow.pop %v1856
        %v1858 = vmul.f32 %v1840, 1.442695
        %v1859 = vpow.pop %v1858
        %v1860 = vmul.f32 %v1841, 1.442695
        %v1861 = vpow.pop %v1860
        %v1862 = vmul.f32 %v1842, 1.442695
        %v1863 = vpow.pop %v1862
        %v1864 = vmul.f32 %v1843, 1.442695
        %v1865 = vpow.pop %v1864
        %v1866 = vmul.f32 %v1844, 1.442695
        %v1867 = vpow.pop %v1866
        %v1868 = vmul.f32 %v1845, 1.442695
        %v1869 = vpow.pop %v1868
        %v1870 = vmul.f32 %v1846, 1.442695
        %v1871 = vpow.pop %v1870
        %v1872 = vmul.f32 %v1847, 1.442695
        %v1873 = vpow.pop %v1872
        %v1874 = vmul.f32 %v1848, 1.442695
        %v1875 = vpow.pop %v1874
        %v1876 = vmul.f32 %v1849, 1.442695
        %v1877 = vpow.pop %v1876
        %v1878 = vmul.f32 %v1850, 1.442695
        %v1879 = vpow.pop %v1878
        %v1880 = vmul.f32 %v1851, 1.442695
        %v1881 = vpow.pop %v1880
        %v1882 = vmul.f32 %v1852, 1.442695
        %v1883 = vpow.pop %v1882
        %v1884 = vmul.f32 %v1853, 1.442695
        %v1885 = vpow.pop %v1884
        %v1886 = vadd.f32 %v1855, 1.0
        %v1887 = vadd.f32 %v1857, 1.0
        %v1888 = vadd.f32 %v1859, 1.0
        %v1889 = vadd.f32 %v1861, 1.0
        %v1890 = vadd.f32 %v1863, 1.0
        %v1891 = vadd.f32 %v1865, 1.0
        %v1892 = vadd.f32 %v1867, 1.0
        %v1893 = vadd.f32 %v1869, 1.0
        %v1894 = vadd.f32 %v1871, 1.0
        %v1895 = vadd.f32 %v1873, 1.0
        %v1896 = vadd.f32 %v1875, 1.0
        %v1897 = vadd.f32 %v1877, 1.0
        %v1898 = vadd.f32 %v1879, 1.0
        %v1899 = vadd.f32 %v1881, 1.0
        %v1900 = vadd.f32 %v1883, 1.0
        %v1901 = vadd.f32 %v1885, 1.0
        %v1902 = vrcp.pop %v1886
        %v1903 = vmul.f32 1.0, %v1902
        %v1904 = vrcp.pop %v1887
        %v1905 = vmul.f32 1.0, %v1904
        %v1906 = vrcp.pop %v1888
        %v1907 = vmul.f32 1.0, %v1906
        %v1908 = vrcp.pop %v1889
        %v1909 = vmul.f32 1.0, %v1908
        %v1910 = vrcp.pop %v1890
        %v1911 = vmul.f32 1.0, %v1910
        %v1912 = vrcp.pop %v1891
        %v1913 = vmul.f32 1.0, %v1912
        %v1914 = vrcp.pop %v1892
        %v1915 = vmul.f32 1.0, %v1914
        %v1916 = vrcp.pop %v1893
        %v1917 = vmul.f32 1.0, %v1916
        %v1918 = vrcp.pop %v1894
        %v1919 = vmul.f32 1.0, %v1918
        %v1920 = vrcp.pop %v1895
        %v1921 = vmul.f32 1.0, %v1920
        %v1922 = vrcp.pop %v1896
        %v1923 = vmul.f32 1.0, %v1922
        %v1924 = vrcp.pop %v1897
        %v1925 = vmul.f32 1.0, %v1924
        %v1926 = vrcp.pop %v1898
        %v1927 = vmul.f32 1.0, %v1926
        %v1928 = vrcp.pop %v1899
        %v1929 = vmul.f32 1.0, %v1928
        %v1930 = vrcp.pop %v1900
        %v1931 = vmul.f32 1.0, %v1930
        %v1932 = vrcp.pop %v1901
        %v1933 = vmul.f32 1.0, %v1932
        %v1934 = vmul.f32 %v1492, %v1806
        %v1935 = vmul.f32 %v1495, %v1807
        %v1936 = vmul.f32 %v1536, %v1808
        %v1937 = vmul.f32 %v1539, %v1809
        %v1938 = vmul.f32 %v1580, %v1810
        %v1939 = vmul.f32 %v1583, %v1811
        %v1940 = vmul.f32 %v1624, %v1812
        %v1941 = vmul.f32 %v1627, %v1813
        %v1942 = vmul.f32 %v1668, %v1814
        %v1943 = vmul.f32 %v1671, %v1815
        %v1944 = vmul.f32 %v1712, %v1816
        %v1945 = vmul.f32 %v1715, %v1817
        %v1946 = vmul.f32 %v1756, %v1818
        %v1947 = vmul.f32 %v1759, %v1819
        %v1948 = vmul.f32 %v1800, %v1820
        %v1949 = vmul.f32 %v1803, %v1821
        %v1950 = vmul.f32 %v1934, %v1903
        %v1951 = vmul.f32 %v1935, %v1905
        %v1952 = vmul.f32 %v1936, %v1907
        %v1953 = vmul.f32 %v1937, %v1909
        %v1954 = vmul.f32 %v1938, %v1911
        %v1955 = vmul.f32 %v1939, %v1913
        %v1956 = vmul.f32 %v1940, %v1915
        %v1957 = vmul.f32 %v1941, %v1917
        %v1958 = vmul.f32 %v1942, %v1919
        %v1959 = vmul.f32 %v1943, %v1921
        %v1960 = vmul.f32 %v1944, %v1923
        %v1961 = vmul.f32 %v1945, %v1925
        %v1962 = vmul.f32 %v1946, %v1927
        %v1963 = vmul.f32 %v1947, %v1929
        %v1964 = vmul.f32 %v1948, %v1931
        %v1965 = vmul.f32 %v1949, %v1933
        %v1966 = vpack.c.bf16 %v1951, %v1950
        %v1967 = vpack.c.bf16 %v1953, %v1952
        %v1968 = vpack.c.bf16 %v1955, %v1954
        %v1969 = vpack.c.bf16 %v1957, %v1956
        %v1970 = vpack.c.bf16 %v1959, %v1958
        %v1971 = vpack.c.bf16 %v1961, %v1960
        %v1972 = vpack.c.bf16 %v1963, %v1962
        %v1973 = vpack.c.bf16 %v1965, %v1964
        %s1974 = scalar_lea.vmem [#allocation7], 8
        %v1975 = vld [vmem:[%s1974] sm:$0xf]
        %v1976 = vld [vmem:[%s1974 + $0x4] sm:$0xf]
        %v1977 = vunpack.c.l.bf16 %v1975
        %v1978 = vunpack.c.l.bf16 %v1976
        %1980 = vrot.lane.b32.xlu0 %v792, 96
        %v1981 = vpop.permute.xlu0 %1980
        %1983 = vrot.lane.b32.xlu0 %v800, 96
        %v1984 = vpop.permute.xlu0 %1983
        %v1986 = vsel %vm876, %v1981, 0
        %v1989 = vsel %vm876, %v1984, 0
        %1991 = vmatprep.subr.bf16.mxu0 0
        %1992 = vmatpush1.bf16.xpose.msra.mxu0 %v1989
        %1993 = vmatprep.subr.bf16.mxu0 0
        %1994 = vmatpush1.bf16.xpose.msra.mxu0 0
        %1995 = vmatprep.subr.bf16.mxu0 0
        %1996 = vmatpush1.bf16.xpose.msra.mxu0 0
        %1997 = vmatprep.subr.bf16.mxu0 0
        %1998 = vmatpush1.bf16.xpose.msra.mxu0 0
        %1999 = vmatprep.subr.bf16.mxu0 0
        %2000 = vmatpush1.bf16.xpose.msra.mxu0 0
        %2001 = vmatprep.subr.bf16.mxu0 0
        %2002 = vmatpush1.bf16.xpose.msra.mxu0 0
        %2003 = vmatprep.subr.bf16.mxu0 0
        %2004 = vmatpush1.bf16.xpose.msra.mxu0 0
        %2005 = vmatprep.subr.bf16.mxu0 0
        %2006 = vmatpush1.bf16.xpose.msra.mxu0 0
        %2007 = vmatprep.subr.bf16.mxu0 0
        %2008 = vmatpush1.bf16.xpose.msra.mxu0 0
        %2009 = vmatprep.subr.bf16.mxu0 0
        %2010 = vmatpush1.bf16.xpose.msra.mxu0 0
        %2011 = vmatprep.subr.bf16.mxu0 0
        %2012 = vmatpush1.bf16.xpose.msra.mxu0 0
        %2013 = vmatprep.subr.bf16.mxu0 0
        %2014 = vmatpush1.bf16.xpose.msra.mxu0 0
        %2015 = vmatprep.subr.bf16.mxu0 0
        %2016 = vmatpush1.bf16.xpose.msra.mxu0 0
        %2017 = vmatprep.subr.bf16.mxu0 0
        %2018 = vmatpush1.bf16.xpose.msra.mxu0 0
        %2019 = vmatprep.subr.bf16.mxu0 0
        %2020 = vmatpush1.bf16.xpose.msra.mxu0 0
        %2021 = vmatprep.subr.bf16.mxu0 0
        %2022 = vmatpush1.bf16.xpose.msra.mxu0 0
        %2023 = vmatprep.mubr.bf16.mxu0 0
        %2024 = vmatmul.mubr.bf16.gmra.mrb[0].mxu0 %v1986
        %v2025 = vpop.f32.mrb[0].mxu0
        %v2026 = vadd.f32 %v1977, %v2025
        %v2027 = vpop.f32.mrb[0].mxu0
        %v2028 = vpop.f32.mrb[0].mxu0
        %v2029 = vadd.f32 %v1978, %v2028
        %v2030 = vpop.f32.mrb[0].mxu0
        %2031 = vdwg.mxu0
        %2033 = vrot.lane.b32.xlu0 %v793, 96
        %v2034 = vpop.permute.xlu0 %2033
        %2036 = vrot.lane.b32.xlu0 %v801, 96
        %v2037 = vpop.permute.xlu0 %2036
        %v2039 = vsel %vm876, %v2034, 0
        %v2042 = vsel %vm876, %v2037, 0
        %2044 = vmatprep.subr.bf16.mxu0 0
        %2045 = vmatpush1.bf16.xpose.msra.mxu0 %v2042
        %2046 = vmatprep.subr.bf16.mxu0 0
        %2047 = vmatpush1.bf16.xpose.msra.mxu0 0
        %2048 = vmatprep.subr.bf16.mxu0 0
        %2049 = vmatpush1.bf16.xpose.msra.mxu0 0
        %2050 = vmatprep.subr.bf16.mxu0 0
        %2051 = vmatpush1.bf16.xpose.msra.mxu0 0
        %2052 = vmatprep.subr.bf16.mxu0 0
        %2053 = vmatpush1.bf16.xpose.msra.mxu0 0
        %2054 = vmatprep.subr.bf16.mxu0 0
        %2055 = vmatpush1.bf16.xpose.msra.mxu0 0
        %2056 = vmatprep.subr.bf16.mxu0 0
        %2057 = vmatpush1.bf16.xpose.msra.mxu0 0
        %2058 = vmatprep.subr.bf16.mxu0 0
        %2059 = vmatpush1.bf16.xpose.msra.mxu0 0
        %2060 = vmatprep.subr.bf16.mxu0 0
        %2061 = vmatpush1.bf16.xpose.msra.mxu0 0
        %2062 = vmatprep.subr.bf16.mxu0 0
        %2063 = vmatpush1.bf16.xpose.msra.mxu0 0
        %2064 = vmatprep.subr.bf16.mxu0 0
        %2065 = vmatpush1.bf16.xpose.msra.mxu0 0
        %2066 = vmatprep.subr.bf16.mxu0 0
        %2067 = vmatpush1.bf16.xpose.msra.mxu0 0
        %2068 = vmatprep.subr.bf16.mxu0 0
        %2069 = vmatpush1.bf16.xpose.msra.mxu0 0
        %2070 = vmatprep.subr.bf16.mxu0 0
        %2071 = vmatpush1.bf16.xpose.msra.mxu0 0
        %2072 = vmatprep.subr.bf16.mxu0 0
        %2073 = vmatpush1.bf16.xpose.msra.mxu0 0
        %2074 = vmatprep.subr.bf16.mxu0 0
        %2075 = vmatpush1.bf16.xpose.msra.mxu0 0
        %2076 = vmatprep.mubr.bf16.mxu0 0
        %2077 = vmatmul.mubr.bf16.gmra.mrb[0].mxu0 %v2039
        %v2078 = vpop.f32.mrb[0].mxu0
        %v2079 = vadd.f32 %v1977, %v2078
        %v2080 = vpop.f32.mrb[0].mxu0
        %v2081 = vpop.f32.mrb[0].mxu0
        %v2082 = vadd.f32 %v1978, %v2081
        %v2083 = vpop.f32.mrb[0].mxu0
        %2084 = vdwg.mxu0
        %2086 = vrot.lane.b32.xlu0 %v794, 96
        %v2087 = vpop.permute.xlu0 %2086
        %2089 = vrot.lane.b32.xlu0 %v802, 96
        %v2090 = vpop.permute.xlu0 %2089
        %v2092 = vsel %vm876, %v2087, 0
        %v2095 = vsel %vm876, %v2090, 0
        %2097 = vmatprep.subr.bf16.mxu0 0
        %2098 = vmatpush1.bf16.xpose.msra.mxu0 %v2095
        %2099 = vmatprep.subr.bf16.mxu0 0
        %2100 = vmatpush1.bf16.xpose.msra.mxu0 0
        %2101 = vmatprep.subr.bf16.mxu0 0
        %2102 = vmatpush1.bf16.xpose.msra.mxu0 0
        %2103 = vmatprep.subr.bf16.mxu0 0
        %2104 = vmatpush1.bf16.xpose.msra.mxu0 0
        %2105 = vmatprep.subr.bf16.mxu0 0
        %2106 = vmatpush1.bf16.xpose.msra.mxu0 0
        %2107 = vmatprep.subr.bf16.mxu0 0
        %2108 = vmatpush1.bf16.xpose.msra.mxu0 0
        %2109 = vmatprep.subr.bf16.mxu0 0
        %2110 = vmatpush1.bf16.xpose.msra.mxu0 0
        %2111 = vmatprep.subr.bf16.mxu0 0
        %2112 = vmatpush1.bf16.xpose.msra.mxu0 0
        %2113 = vmatprep.subr.bf16.mxu0 0
        %2114 = vmatpush1.bf16.xpose.msra.mxu0 0
        %2115 = vmatprep.subr.bf16.mxu0 0
        %2116 = vmatpush1.bf16.xpose.msra.mxu0 0
        %2117 = vmatprep.subr.bf16.mxu0 0
        %2118 = vmatpush1.bf16.xpose.msra.mxu0 0
        %2119 = vmatprep.subr.bf16.mxu0 0
        %2120 = vmatpush1.bf16.xpose.msra.mxu0 0
        %2121 = vmatprep.subr.bf16.mxu0 0
        %2122 = vmatpush1.bf16.xpose.msra.mxu0 0
        %2123 = vmatprep.subr.bf16.mxu0 0
        %2124 = vmatpush1.bf16.xpose.msra.mxu0 0
        %2125 = vmatprep.subr.bf16.mxu0 0
        %2126 = vmatpush1.bf16.xpose.msra.mxu0 0
        %2127 = vmatprep.subr.bf16.mxu0 0
        %2128 = vmatpush1.bf16.xpose.msra.mxu0 0
        %2129 = vmatprep.mubr.bf16.mxu0 0
        %2130 = vmatmul.mubr.bf16.gmra.mrb[0].mxu0 %v2092
        %v2131 = vpop.f32.mrb[0].mxu0
        %v2132 = vadd.f32 %v1977, %v2131
        %v2133 = vpop.f32.mrb[0].mxu0
        %v2134 = vpop.f32.mrb[0].mxu0
        %v2135 = vadd.f32 %v1978, %v2134
        %v2136 = vpop.f32.mrb[0].mxu0
        %2137 = vdwg.mxu0
        %2139 = vrot.lane.b32.xlu0 %v795, 96
        %v2140 = vpop.permute.xlu0 %2139
        %2142 = vrot.lane.b32.xlu0 %v803, 96
        %v2143 = vpop.permute.xlu0 %2142
        %v2145 = vsel %vm876, %v2140, 0
        %v2148 = vsel %vm876, %v2143, 0
        %2150 = vmatprep.subr.bf16.mxu0 0
        %2151 = vmatpush1.bf16.xpose.msra.mxu0 %v2148
        %2152 = vmatprep.subr.bf16.mxu0 0
        %2153 = vmatpush1.bf16.xpose.msra.mxu0 0
        %2154 = vmatprep.subr.bf16.mxu0 0
        %2155 = vmatpush1.bf16.xpose.msra.mxu0 0
        %2156 = vmatprep.subr.bf16.mxu0 0
        %2157 = vmatpush1.bf16.xpose.msra.mxu0 0
        %2158 = vmatprep.subr.bf16.mxu0 0
        %2159 = vmatpush1.bf16.xpose.msra.mxu0 0
        %2160 = vmatprep.subr.bf16.mxu0 0
        %2161 = vmatpush1.bf16.xpose.msra.mxu0 0
        %2162 = vmatprep.subr.bf16.mxu0 0
        %2163 = vmatpush1.bf16.xpose.msra.mxu0 0
        %2164 = vmatprep.subr.bf16.mxu0 0
        %2165 = vmatpush1.bf16.xpose.msra.mxu0 0
        %2166 = vmatprep.subr.bf16.mxu0 0
        %2167 = vmatpush1.bf16.xpose.msra.mxu0 0
        %2168 = vmatprep.subr.bf16.mxu0 0
        %2169 = vmatpush1.bf16.xpose.msra.mxu0 0
        %2170 = vmatprep.subr.bf16.mxu0 0
        %2171 = vmatpush1.bf16.xpose.msra.mxu0 0
        %2172 = vmatprep.subr.bf16.mxu0 0
        %2173 = vmatpush1.bf16.xpose.msra.mxu0 0
        %2174 = vmatprep.subr.bf16.mxu0 0
        %2175 = vmatpush1.bf16.xpose.msra.mxu0 0
        %2176 = vmatprep.subr.bf16.mxu0 0
        %2177 = vmatpush1.bf16.xpose.msra.mxu0 0
        %2178 = vmatprep.subr.bf16.mxu0 0
        %2179 = vmatpush1.bf16.xpose.msra.mxu0 0
        %2180 = vmatprep.subr.bf16.mxu0 0
        %2181 = vmatpush1.bf16.xpose.msra.mxu0 0
        %2182 = vmatprep.mubr.bf16.mxu0 0
        %2183 = vmatmul.mubr.bf16.gmra.mrb[0].mxu0 %v2145
        %v2184 = vpop.f32.mrb[0].mxu0
        %v2185 = vadd.f32 %v1977, %v2184
        %v2186 = vpop.f32.mrb[0].mxu0
        %v2187 = vpop.f32.mrb[0].mxu0
        %v2188 = vadd.f32 %v1978, %v2187
        %v2189 = vpop.f32.mrb[0].mxu0
        %2190 = vdwg.mxu0
        %2192 = vrot.lane.b32.xlu0 %v796, 96
        %v2193 = vpop.permute.xlu0 %2192
        %2195 = vrot.lane.b32.xlu0 %v804, 96
        %v2196 = vpop.permute.xlu0 %2195
        %v2198 = vsel %vm876, %v2193, 0
        %v2201 = vsel %vm876, %v2196, 0
        %2203 = vmatprep.subr.bf16.mxu0 0
        %2204 = vmatpush1.bf16.xpose.msra.mxu0 %v2201
        %2205 = vmatprep.subr.bf16.mxu0 0
        %2206 = vmatpush1.bf16.xpose.msra.mxu0 0
        %2207 = vmatprep.subr.bf16.mxu0 0
        %2208 = vmatpush1.bf16.xpose.msra.mxu0 0
        %2209 = vmatprep.subr.bf16.mxu0 0
        %2210 = vmatpush1.bf16.xpose.msra.mxu0 0
        %2211 = vmatprep.subr.bf16.mxu0 0
        %2212 = vmatpush1.bf16.xpose.msra.mxu0 0
        %2213 = vmatprep.subr.bf16.mxu0 0
        %2214 = vmatpush1.bf16.xpose.msra.mxu0 0
        %2215 = vmatprep.subr.bf16.mxu0 0
        %2216 = vmatpush1.bf16.xpose.msra.mxu0 0
        %2217 = vmatprep.subr.bf16.mxu0 0
        %2218 = vmatpush1.bf16.xpose.msra.mxu0 0
        %2219 = vmatprep.subr.bf16.mxu0 0
        %2220 = vmatpush1.bf16.xpose.msra.mxu0 0
        %2221 = vmatprep.subr.bf16.mxu0 0
        %2222 = vmatpush1.bf16.xpose.msra.mxu0 0
        %2223 = vmatprep.subr.bf16.mxu0 0
        %2224 = vmatpush1.bf16.xpose.msra.mxu0 0
        %2225 = vmatprep.subr.bf16.mxu0 0
        %2226 = vmatpush1.bf16.xpose.msra.mxu0 0
        %2227 = vmatprep.subr.bf16.mxu0 0
        %2228 = vmatpush1.bf16.xpose.msra.mxu0 0
        %2229 = vmatprep.subr.bf16.mxu0 0
        %2230 = vmatpush1.bf16.xpose.msra.mxu0 0
        %2231 = vmatprep.subr.bf16.mxu0 0
        %2232 = vmatpush1.bf16.xpose.msra.mxu0 0
        %2233 = vmatprep.subr.bf16.mxu0 0
        %2234 = vmatpush1.bf16.xpose.msra.mxu0 0
        %2235 = vmatprep.mubr.bf16.mxu0 0
        %2236 = vmatmul.mubr.bf16.gmra.mrb[0].mxu0 %v2198
        %v2237 = vpop.f32.mrb[0].mxu0
        %v2238 = vadd.f32 %v1977, %v2237
        %v2239 = vpop.f32.mrb[0].mxu0
        %v2240 = vpop.f32.mrb[0].mxu0
        %v2241 = vadd.f32 %v1978, %v2240
        %v2242 = vpop.f32.mrb[0].mxu0
        %2243 = vdwg.mxu0
        %2245 = vrot.lane.b32.xlu0 %v797, 96
        %v2246 = vpop.permute.xlu0 %2245
        %2248 = vrot.lane.b32.xlu0 %v805, 96
        %v2249 = vpop.permute.xlu0 %2248
        %v2251 = vsel %vm876, %v2246, 0
        %v2254 = vsel %vm876, %v2249, 0
        %2256 = vmatprep.subr.bf16.mxu0 0
        %2257 = vmatpush1.bf16.xpose.msra.mxu0 %v2254
        %2258 = vmatprep.subr.bf16.mxu0 0
        %2259 = vmatpush1.bf16.xpose.msra.mxu0 0
        %2260 = vmatprep.subr.bf16.mxu0 0
        %2261 = vmatpush1.bf16.xpose.msra.mxu0 0
        %2262 = vmatprep.subr.bf16.mxu0 0
        %2263 = vmatpush1.bf16.xpose.msra.mxu0 0
        %2264 = vmatprep.subr.bf16.mxu0 0
        %2265 = vmatpush1.bf16.xpose.msra.mxu0 0
        %2266 = vmatprep.subr.bf16.mxu0 0
        %2267 = vmatpush1.bf16.xpose.msra.mxu0 0
        %2268 = vmatprep.subr.bf16.mxu0 0
        %2269 = vmatpush1.bf16.xpose.msra.mxu0 0
        %2270 = vmatprep.subr.bf16.mxu0 0
        %2271 = vmatpush1.bf16.xpose.msra.mxu0 0
        %2272 = vmatprep.subr.bf16.mxu0 0
        %2273 = vmatpush1.bf16.xpose.msra.mxu0 0
        %2274 = vmatprep.subr.bf16.mxu0 0
        %2275 = vmatpush1.bf16.xpose.msra.mxu0 0
        %2276 = vmatprep.subr.bf16.mxu0 0
        %2277 = vmatpush1.bf16.xpose.msra.mxu0 0
        %2278 = vmatprep.subr.bf16.mxu0 0
        %2279 = vmatpush1.bf16.xpose.msra.mxu0 0
        %2280 = vmatprep.subr.bf16.mxu0 0
        %2281 = vmatpush1.bf16.xpose.msra.mxu0 0
        %2282 = vmatprep.subr.bf16.mxu0 0
        %2283 = vmatpush1.bf16.xpose.msra.mxu0 0
        %2284 = vmatprep.subr.bf16.mxu0 0
        %2285 = vmatpush1.bf16.xpose.msra.mxu0 0
        %2286 = vmatprep.subr.bf16.mxu0 0
        %2287 = vmatpush1.bf16.xpose.msra.mxu0 0
        %2288 = vmatprep.mubr.bf16.mxu0 0
        %2289 = vmatmul.mubr.bf16.gmra.mrb[0].mxu0 %v2251
        %v2290 = vpop.f32.mrb[0].mxu0
        %v2291 = vadd.f32 %v1977, %v2290
        %v2292 = vpop.f32.mrb[0].mxu0
        %v2293 = vpop.f32.mrb[0].mxu0
        %v2294 = vadd.f32 %v1978, %v2293
        %v2295 = vpop.f32.mrb[0].mxu0
        %2296 = vdwg.mxu0
        %2298 = vrot.lane.b32.xlu0 %v798, 96
        %v2299 = vpop.permute.xlu0 %2298
        %2301 = vrot.lane.b32.xlu0 %v806, 96
        %v2302 = vpop.permute.xlu0 %2301
        %v2304 = vsel %vm876, %v2299, 0
        %v2307 = vsel %vm876, %v2302, 0
        %2309 = vmatprep.subr.bf16.mxu0 0
        %2310 = vmatpush1.bf16.xpose.msra.mxu0 %v2307
        %2311 = vmatprep.subr.bf16.mxu0 0
        %2312 = vmatpush1.bf16.xpose.msra.mxu0 0
        %2313 = vmatprep.subr.bf16.mxu0 0
        %2314 = vmatpush1.bf16.xpose.msra.mxu0 0
        %2315 = vmatprep.subr.bf16.mxu0 0
        %2316 = vmatpush1.bf16.xpose.msra.mxu0 0
        %2317 = vmatprep.subr.bf16.mxu0 0
        %2318 = vmatpush1.bf16.xpose.msra.mxu0 0
        %2319 = vmatprep.subr.bf16.mxu0 0
        %2320 = vmatpush1.bf16.xpose.msra.mxu0 0
        %2321 = vmatprep.subr.bf16.mxu0 0
        %2322 = vmatpush1.bf16.xpose.msra.mxu0 0
        %2323 = vmatprep.subr.bf16.mxu0 0
        %2324 = vmatpush1.bf16.xpose.msra.mxu0 0
        %2325 = vmatprep.subr.bf16.mxu0 0
        %2326 = vmatpush1.bf16.xpose.msra.mxu0 0
        %2327 = vmatprep.subr.bf16.mxu0 0
        %2328 = vmatpush1.bf16.xpose.msra.mxu0 0
        %2329 = vmatprep.subr.bf16.mxu0 0
        %2330 = vmatpush1.bf16.xpose.msra.mxu0 0
        %2331 = vmatprep.subr.bf16.mxu0 0
        %2332 = vmatpush1.bf16.xpose.msra.mxu0 0
        %2333 = vmatprep.subr.bf16.mxu0 0
        %2334 = vmatpush1.bf16.xpose.msra.mxu0 0
        %2335 = vmatprep.subr.bf16.mxu0 0
        %2336 = vmatpush1.bf16.xpose.msra.mxu0 0
        %2337 = vmatprep.subr.bf16.mxu0 0
        %2338 = vmatpush1.bf16.xpose.msra.mxu0 0
        %2339 = vmatprep.subr.bf16.mxu0 0
        %2340 = vmatpush1.bf16.xpose.msra.mxu0 0
        %2341 = vmatprep.mubr.bf16.mxu0 0
        %2342 = vmatmul.mubr.bf16.gmra.mrb[0].mxu0 %v2304
        %v2343 = vpop.f32.mrb[0].mxu0
        %v2344 = vadd.f32 %v1977, %v2343
        %v2345 = vpop.f32.mrb[0].mxu0
        %v2346 = vpop.f32.mrb[0].mxu0
        %v2347 = vadd.f32 %v1978, %v2346
        %v2348 = vpop.f32.mrb[0].mxu0
        %2349 = vdwg.mxu0
        %2351 = vrot.lane.b32.xlu0 %v799, 96
        %v2352 = vpop.permute.xlu0 %2351
        %2354 = vrot.lane.b32.xlu0 %v807, 96
        %v2355 = vpop.permute.xlu0 %2354
        %v2357 = vsel %vm876, %v2352, 0
        %v2360 = vsel %vm876, %v2355, 0
        %2362 = vmatprep.subr.bf16.mxu0 0
        %2363 = vmatpush1.bf16.xpose.msra.mxu0 %v2360
        %2364 = vmatprep.subr.bf16.mxu0 0
        %2365 = vmatpush1.bf16.xpose.msra.mxu0 0
        %2366 = vmatprep.subr.bf16.mxu0 0
        %2367 = vmatpush1.bf16.xpose.msra.mxu0 0
        %2368 = vmatprep.subr.bf16.mxu0 0
        %2369 = vmatpush1.bf16.xpose.msra.mxu0 0
        %2370 = vmatprep.subr.bf16.mxu0 0
        %2371 = vmatpush1.bf16.xpose.msra.mxu0 0
        %2372 = vmatprep.subr.bf16.mxu0 0
        %2373 = vmatpush1.bf16.xpose.msra.mxu0 0
        %2374 = vmatprep.subr.bf16.mxu0 0
        %2375 = vmatpush1.bf16.xpose.msra.mxu0 0
        %2376 = vmatprep.subr.bf16.mxu0 0
        %2377 = vmatpush1.bf16.xpose.msra.mxu0 0
        %2378 = vmatprep.subr.bf16.mxu0 0
        %2379 = vmatpush1.bf16.xpose.msra.mxu0 0
        %2380 = vmatprep.subr.bf16.mxu0 0
        %2381 = vmatpush1.bf16.xpose.msra.mxu0 0
        %2382 = vmatprep.subr.bf16.mxu0 0
        %2383 = vmatpush1.bf16.xpose.msra.mxu0 0
        %2384 = vmatprep.subr.bf16.mxu0 0
        %2385 = vmatpush1.bf16.xpose.msra.mxu0 0
        %2386 = vmatprep.subr.bf16.mxu0 0
        %2387 = vmatpush1.bf16.xpose.msra.mxu0 0
        %2388 = vmatprep.subr.bf16.mxu0 0
        %2389 = vmatpush1.bf16.xpose.msra.mxu0 0
        %2390 = vmatprep.subr.bf16.mxu0 0
        %2391 = vmatpush1.bf16.xpose.msra.mxu0 0
        %2392 = vmatprep.subr.bf16.mxu0 0
        %2393 = vmatpush1.bf16.xpose.msra.mxu0 0
        %2394 = vmatprep.mubr.bf16.mxu0 0
        %2395 = vmatmul.mubr.bf16.gmra.mrb[0].mxu0 %v2357
        %v2396 = vpop.f32.mrb[0].mxu0
        %v2397 = vadd.f32 %v1977, %v2396
        %v2398 = vpop.f32.mrb[0].mxu0
        %v2399 = vpop.f32.mrb[0].mxu0
        %v2400 = vadd.f32 %v1978, %v2399
        %v2401 = vpop.f32.mrb[0].mxu0
        %2402 = vdwg.mxu0
        %v2403 = vadd.f32 %v2026, %v1256
        %v2404 = vadd.f32 %v2029, %v1256
        %v2405 = vadd.f32 %v2079, %v1260
        %v2406 = vadd.f32 %v2082, %v1260
        %v2407 = vadd.f32 %v2132, %v1264
        %v2408 = vadd.f32 %v2135, %v1264
        %v2409 = vadd.f32 %v2185, %v1268
        %v2410 = vadd.f32 %v2188, %v1268
        %v2411 = vadd.f32 %v2238, %v1272
        %v2412 = vadd.f32 %v2241, %v1272
        %v2413 = vadd.f32 %v2291, %v1276
        %v2414 = vadd.f32 %v2294, %v1276
        %v2415 = vadd.f32 %v2344, %v1280
        %v2416 = vadd.f32 %v2347, %v1280
        %v2417 = vadd.f32 %v2397, %v1284
        %v2418 = vadd.f32 %v2400, %v1284
        %v2419 = vsel %vm1301, %v2403, -inf
        %2420 = vmax.xlane.f32.xlu0 %v2419
        %v2421 = vpop.xlane.xlu0 %2420
        %v2422 = vsel %vm1301, %v2404, -inf
        %2423 = vmax.xlane.f32.xlu0 %v2422
        %v2424 = vpop.xlane.xlu0 %2423
        %v2425 = vsel %vm1301, %v2405, -inf
        %2426 = vmax.xlane.f32.xlu0 %v2425
        %v2427 = vpop.xlane.xlu0 %2426
        %v2428 = vsel %vm1301, %v2406, -inf
        %2429 = vmax.xlane.f32.xlu0 %v2428
        %v2430 = vpop.xlane.xlu0 %2429
        %v2431 = vsel %vm1301, %v2407, -inf
        %2432 = vmax.xlane.f32.xlu0 %v2431
        %v2433 = vpop.xlane.xlu0 %2432
        %v2434 = vsel %vm1301, %v2408, -inf
        %2435 = vmax.xlane.f32.xlu0 %v2434
        %v2436 = vpop.xlane.xlu0 %2435
        %v2437 = vsel %vm1301, %v2409, -inf
        %2438 = vmax.xlane.f32.xlu0 %v2437
        %v2439 = vpop.xlane.xlu0 %2438
        %v2440 = vsel %vm1301, %v2410, -inf
        %2441 = vmax.xlane.f32.xlu0 %v2440
        %v2442 = vpop.xlane.xlu0 %2441
        %v2443 = vsel %vm1301, %v2411, -inf
        %2444 = vmax.xlane.f32.xlu0 %v2443
        %v2445 = vpop.xlane.xlu0 %2444
        %v2446 = vsel %vm1301, %v2412, -inf
        %2447 = vmax.xlane.f32.xlu0 %v2446
        %v2448 = vpop.xlane.xlu0 %2447
        %v2449 = vsel %vm1301, %v2413, -inf
        %2450 = vmax.xlane.f32.xlu0 %v2449
        %v2451 = vpop.xlane.xlu0 %2450
        %v2452 = vsel %vm1301, %v2414, -inf
        %2453 = vmax.xlane.f32.xlu0 %v2452
        %v2454 = vpop.xlane.xlu0 %2453
        %v2455 = vsel %vm1301, %v2415, -inf
        %2456 = vmax.xlane.f32.xlu0 %v2455
        %v2457 = vpop.xlane.xlu0 %2456
        %v2458 = vsel %vm1301, %v2416, -inf
        %2459 = vmax.xlane.f32.xlu0 %v2458
        %v2460 = vpop.xlane.xlu0 %2459
        %v2461 = vsel %vm1301, %v2417, -inf
        %2462 = vmax.xlane.f32.xlu0 %v2461
        %v2463 = vpop.xlane.xlu0 %2462
        %v2464 = vsel %vm1301, %v2418, -inf
        %2465 = vmax.xlane.f32.xlu0 %v2464
        %v2466 = vpop.xlane.xlu0 %2465
        %v2467 = vsub.f32 %v2403, %v2421
        %v2468 = vsub.f32 %v2404, %v2424
        %v2469 = vsub.f32 %v2405, %v2427
        %v2470 = vsub.f32 %v2406, %v2430
        %v2471 = vsub.f32 %v2407, %v2433
        %v2472 = vsub.f32 %v2408, %v2436
        %v2473 = vsub.f32 %v2409, %v2439
        %v2474 = vsub.f32 %v2410, %v2442
        %v2475 = vsub.f32 %v2411, %v2445
        %v2476 = vsub.f32 %v2412, %v2448
        %v2477 = vsub.f32 %v2413, %v2451
        %v2478 = vsub.f32 %v2414, %v2454
        %v2479 = vsub.f32 %v2415, %v2457
        %v2480 = vsub.f32 %v2416, %v2460
        %v2481 = vsub.f32 %v2417, %v2463
        %v2482 = vsub.f32 %v2418, %v2466
        %v2483 = vmul.f32 %v2467, 1.442695
        %v2484 = vpow.pop %v2483
        %v2485 = vmul.f32 %v2468, 1.442695
        %v2486 = vpow.pop %v2485
        %v2487 = vmul.f32 %v2469, 1.442695
        %v2488 = vpow.pop %v2487
        %v2489 = vmul.f32 %v2470, 1.442695
        %v2490 = vpow.pop %v2489
        %v2491 = vmul.f32 %v2471, 1.442695
        %v2492 = vpow.pop %v2491
        %v2493 = vmul.f32 %v2472, 1.442695
        %v2494 = vpow.pop %v2493
        %v2495 = vmul.f32 %v2473, 1.442695
        %v2496 = vpow.pop %v2495
        %v2497 = vmul.f32 %v2474, 1.442695
        %v2498 = vpow.pop %v2497
        %v2499 = vmul.f32 %v2475, 1.442695
        %v2500 = vpow.pop %v2499
        %v2501 = vmul.f32 %v2476, 1.442695
        %v2502 = vpow.pop %v2501
        %v2503 = vmul.f32 %v2477, 1.442695
        %v2504 = vpow.pop %v2503
        %v2505 = vmul.f32 %v2478, 1.442695
        %v2506 = vpow.pop %v2505
        %v2507 = vmul.f32 %v2479, 1.442695
        %v2508 = vpow.pop %v2507
        %v2509 = vmul.f32 %v2480, 1.442695
        %v2510 = vpow.pop %v2509
        %v2511 = vmul.f32 %v2481, 1.442695
        %v2512 = vpow.pop %v2511
        %v2513 = vmul.f32 %v2482, 1.442695
        %v2514 = vpow.pop %v2513
        %v2515 = vsel %vm1301, %v2484, 0.0
        %2516 = vadd.xlane.f32.xlu0 %v2515
        %v2517 = vpop.xlane.xlu0 %2516
        %v2518 = vsel %vm1301, %v2486, 0.0
        %2519 = vadd.xlane.f32.xlu0 %v2518
        %v2520 = vpop.xlane.xlu0 %2519
        %v2521 = vsel %vm1301, %v2488, 0.0
        %2522 = vadd.xlane.f32.xlu0 %v2521
        %v2523 = vpop.xlane.xlu0 %2522
        %v2524 = vsel %vm1301, %v2490, 0.0
        %2525 = vadd.xlane.f32.xlu0 %v2524
        %v2526 = vpop.xlane.xlu0 %2525
        %v2527 = vsel %vm1301, %v2492, 0.0
        %2528 = vadd.xlane.f32.xlu0 %v2527
        %v2529 = vpop.xlane.xlu0 %2528
        %v2530 = vsel %vm1301, %v2494, 0.0
        %2531 = vadd.xlane.f32.xlu0 %v2530
        %v2532 = vpop.xlane.xlu0 %2531
        %v2533 = vsel %vm1301, %v2496, 0.0
        %2534 = vadd.xlane.f32.xlu0 %v2533
        %v2535 = vpop.xlane.xlu0 %2534
        %v2536 = vsel %vm1301, %v2498, 0.0
        %2537 = vadd.xlane.f32.xlu0 %v2536
        %v2538 = vpop.xlane.xlu0 %2537
        %v2539 = vsel %vm1301, %v2500, 0.0
        %2540 = vadd.xlane.f32.xlu0 %v2539
        %v2541 = vpop.xlane.xlu0 %2540
        %v2542 = vsel %vm1301, %v2502, 0.0
        %2543 = vadd.xlane.f32.xlu0 %v2542
        %v2544 = vpop.xlane.xlu0 %2543
        %v2545 = vsel %vm1301, %v2504, 0.0
        %2546 = vadd.xlane.f32.xlu0 %v2545
        %v2547 = vpop.xlane.xlu0 %2546
        %v2548 = vsel %vm1301, %v2506, 0.0
        %2549 = vadd.xlane.f32.xlu0 %v2548
        %v2550 = vpop.xlane.xlu0 %2549
        %v2551 = vsel %vm1301, %v2508, 0.0
        %2552 = vadd.xlane.f32.xlu0 %v2551
        %v2553 = vpop.xlane.xlu0 %2552
        %v2554 = vsel %vm1301, %v2510, 0.0
        %2555 = vadd.xlane.f32.xlu0 %v2554
        %v2556 = vpop.xlane.xlu0 %2555
        %v2557 = vsel %vm1301, %v2512, 0.0
        %2558 = vadd.xlane.f32.xlu0 %v2557
        %v2559 = vpop.xlane.xlu0 %2558
        %v2560 = vsel %vm1301, %v2514, 0.0
        %2561 = vadd.xlane.f32.xlu0 %v2560
        %v2562 = vpop.xlane.xlu0 %2561
        %v2563 = vpack.c.bf16 %v2486, %v2484
        %v2564 = vpack.c.bf16 %v2490, %v2488
        %v2565 = vpack.c.bf16 %v2494, %v2492
        %v2566 = vpack.c.bf16 %v2498, %v2496
        %v2567 = vpack.c.bf16 %v2502, %v2500
        %v2568 = vpack.c.bf16 %v2506, %v2504
        %v2569 = vpack.c.bf16 %v2510, %v2508
        %v2570 = vpack.c.bf16 %v2514, %v2512
        %2572 = vrot.lane.b32.xlu0 %v808, 96
        %v2573 = vpop.permute.xlu0 %2572
        %v2576 = vsel %vm1301, %v2563, 0
        %2578 = vmatprep.subr.bf16.mxu0 0
        %2579 = vmatpush1.bf16.msra.mxu0 %v2573
        %2580 = vmatprep.subr.bf16.mxu0 0
        %2581 = vmatpush1.bf16.msra.mxu0 0
        %2582 = vmatprep.subr.bf16.mxu0 0
        %2583 = vmatpush1.bf16.msra.mxu0 0
        %2584 = vmatprep.subr.bf16.mxu0 0
        %2585 = vmatpush1.bf16.msra.mxu0 0
        %2586 = vmatprep.subr.bf16.mxu0 0
        %2587 = vmatpush1.bf16.msra.mxu0 0
        %2588 = vmatprep.subr.bf16.mxu0 0
        %2589 = vmatpush1.bf16.msra.mxu0 0
        %2590 = vmatprep.subr.bf16.mxu0 0
        %2591 = vmatpush1.bf16.msra.mxu0 0
        %2592 = vmatprep.subr.bf16.mxu0 0
        %2593 = vmatpush1.bf16.msra.mxu0 0
        %2594 = vmatprep.subr.bf16.mxu0 0
        %2595 = vmatpush1.bf16.msra.mxu0 0
        %2596 = vmatprep.subr.bf16.mxu0 0
        %2597 = vmatpush1.bf16.msra.mxu0 0
        %2598 = vmatprep.subr.bf16.mxu0 0
        %2599 = vmatpush1.bf16.msra.mxu0 0
        %2600 = vmatprep.subr.bf16.mxu0 0
        %2601 = vmatpush1.bf16.msra.mxu0 0
        %2602 = vmatprep.subr.bf16.mxu0 0
        %2603 = vmatpush1.bf16.msra.mxu0 0
        %2604 = vmatprep.subr.bf16.mxu0 0
        %2605 = vmatpush1.bf16.msra.mxu0 0
        %2606 = vmatprep.subr.bf16.mxu0 0
        %2607 = vmatpush1.bf16.msra.mxu0 0
        %2608 = vmatprep.subr.bf16.mxu0 0
        %2609 = vmatpush1.bf16.msra.mxu0 0
        %2610 = vmatprep.mubr.bf16.mxu0 0
        %2611 = vmatmul.mubr.bf16.gmra.mrb[0].mxu0 %v2576
        %v2612 = vpop.f32.mrb[0].mxu0
        %v2613 = vadd.f32 0.0, %v2612
        %v2614 = vpop.f32.mrb[0].mxu0
        %v2615 = vpop.f32.mrb[0].mxu0
        %v2616 = vadd.f32 0.0, %v2615
        %v2617 = vpop.f32.mrb[0].mxu0
        %2618 = vdwg.mxu0
        %2620 = vrot.lane.b32.xlu0 %v809, 96
        %v2621 = vpop.permute.xlu0 %2620
        %v2624 = vsel %vm1301, %v2564, 0
        %2626 = vmatprep.subr.bf16.mxu0 0
        %2627 = vmatpush1.bf16.msra.mxu0 %v2621
        %2628 = vmatprep.subr.bf16.mxu0 0
        %2629 = vmatpush1.bf16.msra.mxu0 0
        %2630 = vmatprep.subr.bf16.mxu0 0
        %2631 = vmatpush1.bf16.msra.mxu0 0
        %2632 = vmatprep.subr.bf16.mxu0 0
        %2633 = vmatpush1.bf16.msra.mxu0 0
        %2634 = vmatprep.subr.bf16.mxu0 0
        %2635 = vmatpush1.bf16.msra.mxu0 0
        %2636 = vmatprep.subr.bf16.mxu0 0
        %2637 = vmatpush1.bf16.msra.mxu0 0
        %2638 = vmatprep.subr.bf16.mxu0 0
        %2639 = vmatpush1.bf16.msra.mxu0 0
        %2640 = vmatprep.subr.bf16.mxu0 0
        %2641 = vmatpush1.bf16.msra.mxu0 0
        %2642 = vmatprep.subr.bf16.mxu0 0
        %2643 = vmatpush1.bf16.msra.mxu0 0
        %2644 = vmatprep.subr.bf16.mxu0 0
        %2645 = vmatpush1.bf16.msra.mxu0 0
        %2646 = vmatprep.subr.bf16.mxu0 0
        %2647 = vmatpush1.bf16.msra.mxu0 0
        %2648 = vmatprep.subr.bf16.mxu0 0
        %2649 = vmatpush1.bf16.msra.mxu0 0
        %2650 = vmatprep.subr.bf16.mxu0 0
        %2651 = vmatpush1.bf16.msra.mxu0 0
        %2652 = vmatprep.subr.bf16.mxu0 0
        %2653 = vmatpush1.bf16.msra.mxu0 0
        %2654 = vmatprep.subr.bf16.mxu0 0
        %2655 = vmatpush1.bf16.msra.mxu0 0
        %2656 = vmatprep.subr.bf16.mxu0 0
        %2657 = vmatpush1.bf16.msra.mxu0 0
        %2658 = vmatprep.mubr.bf16.mxu0 0
        %2659 = vmatmul.mubr.bf16.gmra.mrb[0].mxu0 %v2624
        %v2660 = vpop.f32.mrb[0].mxu0
        %v2661 = vadd.f32 0.0, %v2660
        %v2662 = vpop.f32.mrb[0].mxu0
        %v2663 = vpop.f32.mrb[0].mxu0
        %v2664 = vadd.f32 0.0, %v2663
        %v2665 = vpop.f32.mrb[0].mxu0
        %2666 = vdwg.mxu0
        %2668 = vrot.lane.b32.xlu0 %v810, 96
        %v2669 = vpop.permute.xlu0 %2668
        %v2672 = vsel %vm1301, %v2565, 0
        %2674 = vmatprep.subr.bf16.mxu0 0
        %2675 = vmatpush1.bf16.msra.mxu0 %v2669
        %2676 = vmatprep.subr.bf16.mxu0 0
        %2677 = vmatpush1.bf16.msra.mxu0 0
        %2678 = vmatprep.subr.bf16.mxu0 0
        %2679 = vmatpush1.bf16.msra.mxu0 0
        %2680 = vmatprep.subr.bf16.mxu0 0
        %2681 = vmatpush1.bf16.msra.mxu0 0
        %2682 = vmatprep.subr.bf16.mxu0 0
        %2683 = vmatpush1.bf16.msra.mxu0 0
        %2684 = vmatprep.subr.bf16.mxu0 0
        %2685 = vmatpush1.bf16.msra.mxu0 0
        %2686 = vmatprep.subr.bf16.mxu0 0
        %2687 = vmatpush1.bf16.msra.mxu0 0
        %2688 = vmatprep.subr.bf16.mxu0 0
        %2689 = vmatpush1.bf16.msra.mxu0 0
        %2690 = vmatprep.subr.bf16.mxu0 0
        %2691 = vmatpush1.bf16.msra.mxu0 0
        %2692 = vmatprep.subr.bf16.mxu0 0
        %2693 = vmatpush1.bf16.msra.mxu0 0
        %2694 = vmatprep.subr.bf16.mxu0 0
        %2695 = vmatpush1.bf16.msra.mxu0 0
        %2696 = vmatprep.subr.bf16.mxu0 0
        %2697 = vmatpush1.bf16.msra.mxu0 0
        %2698 = vmatprep.subr.bf16.mxu0 0
        %2699 = vmatpush1.bf16.msra.mxu0 0
        %2700 = vmatprep.subr.bf16.mxu0 0
        %2701 = vmatpush1.bf16.msra.mxu0 0
        %2702 = vmatprep.subr.bf16.mxu0 0
        %2703 = vmatpush1.bf16.msra.mxu0 0
        %2704 = vmatprep.subr.bf16.mxu0 0
        %2705 = vmatpush1.bf16.msra.mxu0 0
        %2706 = vmatprep.mubr.bf16.mxu0 0
        %2707 = vmatmul.mubr.bf16.gmra.mrb[0].mxu0 %v2672
        %v2708 = vpop.f32.mrb[0].mxu0
        %v2709 = vadd.f32 0.0, %v2708
        %v2710 = vpop.f32.mrb[0].mxu0
        %v2711 = vpop.f32.mrb[0].mxu0
        %v2712 = vadd.f32 0.0, %v2711
        %v2713 = vpop.f32.mrb[0].mxu0
        %2714 = vdwg.mxu0
        %2716 = vrot.lane.b32.xlu0 %v811, 96
        %v2717 = vpop.permute.xlu0 %2716
        %v2720 = vsel %vm1301, %v2566, 0
        %2722 = vmatprep.subr.bf16.mxu0 0
        %2723 = vmatpush1.bf16.msra.mxu0 %v2717
        %2724 = vmatprep.subr.bf16.mxu0 0
        %2725 = vmatpush1.bf16.msra.mxu0 0
        %2726 = vmatprep.subr.bf16.mxu0 0
        %2727 = vmatpush1.bf16.msra.mxu0 0
        %2728 = vmatprep.subr.bf16.mxu0 0
        %2729 = vmatpush1.bf16.msra.mxu0 0
        %2730 = vmatprep.subr.bf16.mxu0 0
        %2731 = vmatpush1.bf16.msra.mxu0 0
        %2732 = vmatprep.subr.bf16.mxu0 0
        %2733 = vmatpush1.bf16.msra.mxu0 0
        %2734 = vmatprep.subr.bf16.mxu0 0
        %2735 = vmatpush1.bf16.msra.mxu0 0
        %2736 = vmatprep.subr.bf16.mxu0 0
        %2737 = vmatpush1.bf16.msra.mxu0 0
        %2738 = vmatprep.subr.bf16.mxu0 0
        %2739 = vmatpush1.bf16.msra.mxu0 0
        %2740 = vmatprep.subr.bf16.mxu0 0
        %2741 = vmatpush1.bf16.msra.mxu0 0
        %2742 = vmatprep.subr.bf16.mxu0 0
        %2743 = vmatpush1.bf16.msra.mxu0 0
        %2744 = vmatprep.subr.bf16.mxu0 0
        %2745 = vmatpush1.bf16.msra.mxu0 0
        %2746 = vmatprep.subr.bf16.mxu0 0
        %2747 = vmatpush1.bf16.msra.mxu0 0
        %2748 = vmatprep.subr.bf16.mxu0 0
        %2749 = vmatpush1.bf16.msra.mxu0 0
        %2750 = vmatprep.subr.bf16.mxu0 0
        %2751 = vmatpush1.bf16.msra.mxu0 0
        %2752 = vmatprep.subr.bf16.mxu0 0
        %2753 = vmatpush1.bf16.msra.mxu0 0
        %2754 = vmatprep.mubr.bf16.mxu0 0
        %2755 = vmatmul.mubr.bf16.gmra.mrb[0].mxu0 %v2720
        %v2756 = vpop.f32.mrb[0].mxu0
        %v2757 = vadd.f32 0.0, %v2756
        %v2758 = vpop.f32.mrb[0].mxu0
        %v2759 = vpop.f32.mrb[0].mxu0
        %v2760 = vadd.f32 0.0, %v2759
        %v2761 = vpop.f32.mrb[0].mxu0
        %2762 = vdwg.mxu0
        %2764 = vrot.lane.b32.xlu0 %v812, 96
        %v2765 = vpop.permute.xlu0 %2764
        %v2768 = vsel %vm1301, %v2567, 0
        %2770 = vmatprep.subr.bf16.mxu0 0
        %2771 = vmatpush1.bf16.msra.mxu0 %v2765
        %2772 = vmatprep.subr.bf16.mxu0 0
        %2773 = vmatpush1.bf16.msra.mxu0 0
        %2774 = vmatprep.subr.bf16.mxu0 0
        %2775 = vmatpush1.bf16.msra.mxu0 0
        %2776 = vmatprep.subr.bf16.mxu0 0
        %2777 = vmatpush1.bf16.msra.mxu0 0
        %2778 = vmatprep.subr.bf16.mxu0 0
        %2779 = vmatpush1.bf16.msra.mxu0 0
        %2780 = vmatprep.subr.bf16.mxu0 0
        %2781 = vmatpush1.bf16.msra.mxu0 0
        %2782 = vmatprep.subr.bf16.mxu0 0
        %2783 = vmatpush1.bf16.msra.mxu0 0
        %2784 = vmatprep.subr.bf16.mxu0 0
        %2785 = vmatpush1.bf16.msra.mxu0 0
        %2786 = vmatprep.subr.bf16.mxu0 0
        %2787 = vmatpush1.bf16.msra.mxu0 0
        %2788 = vmatprep.subr.bf16.mxu0 0
        %2789 = vmatpush1.bf16.msra.mxu0 0
        %2790 = vmatprep.subr.bf16.mxu0 0
        %2791 = vmatpush1.bf16.msra.mxu0 0
        %2792 = vmatprep.subr.bf16.mxu0 0
        %2793 = vmatpush1.bf16.msra.mxu0 0
        %2794 = vmatprep.subr.bf16.mxu0 0
        %2795 = vmatpush1.bf16.msra.mxu0 0
        %2796 = vmatprep.subr.bf16.mxu0 0
        %2797 = vmatpush1.bf16.msra.mxu0 0
        %2798 = vmatprep.subr.bf16.mxu0 0
        %2799 = vmatpush1.bf16.msra.mxu0 0
        %2800 = vmatprep.subr.bf16.mxu0 0
        %2801 = vmatpush1.bf16.msra.mxu0 0
        %2802 = vmatprep.mubr.bf16.mxu0 0
        %2803 = vmatmul.mubr.bf16.gmra.mrb[0].mxu0 %v2768
        %v2804 = vpop.f32.mrb[0].mxu0
        %v2805 = vadd.f32 0.0, %v2804
        %v2806 = vpop.f32.mrb[0].mxu0
        %v2807 = vpop.f32.mrb[0].mxu0
        %v2808 = vadd.f32 0.0, %v2807
        %v2809 = vpop.f32.mrb[0].mxu0
        %2810 = vdwg.mxu0
        %2812 = vrot.lane.b32.xlu0 %v813, 96
        %v2813 = vpop.permute.xlu0 %2812
        %v2816 = vsel %vm1301, %v2568, 0
        %2818 = vmatprep.subr.bf16.mxu0 0
        %2819 = vmatpush1.bf16.msra.mxu0 %v2813
        %2820 = vmatprep.subr.bf16.mxu0 0
        %2821 = vmatpush1.bf16.msra.mxu0 0
        %2822 = vmatprep.subr.bf16.mxu0 0
        %2823 = vmatpush1.bf16.msra.mxu0 0
        %2824 = vmatprep.subr.bf16.mxu0 0
        %2825 = vmatpush1.bf16.msra.mxu0 0
        %2826 = vmatprep.subr.bf16.mxu0 0
        %2827 = vmatpush1.bf16.msra.mxu0 0
        %2828 = vmatprep.subr.bf16.mxu0 0
        %2829 = vmatpush1.bf16.msra.mxu0 0
        %2830 = vmatprep.subr.bf16.mxu0 0
        %2831 = vmatpush1.bf16.msra.mxu0 0
        %2832 = vmatprep.subr.bf16.mxu0 0
        %2833 = vmatpush1.bf16.msra.mxu0 0
        %2834 = vmatprep.subr.bf16.mxu0 0
        %2835 = vmatpush1.bf16.msra.mxu0 0
        %2836 = vmatprep.subr.bf16.mxu0 0
        %2837 = vmatpush1.bf16.msra.mxu0 0
        %2838 = vmatprep.subr.bf16.mxu0 0
        %2839 = vmatpush1.bf16.msra.mxu0 0
        %2840 = vmatprep.subr.bf16.mxu0 0
        %2841 = vmatpush1.bf16.msra.mxu0 0
        %2842 = vmatprep.subr.bf16.mxu0 0
        %2843 = vmatpush1.bf16.msra.mxu0 0
        %2844 = vmatprep.subr.bf16.mxu0 0
        %2845 = vmatpush1.bf16.msra.mxu0 0
        %2846 = vmatprep.subr.bf16.mxu0 0
        %2847 = vmatpush1.bf16.msra.mxu0 0
        %2848 = vmatprep.subr.bf16.mxu0 0
        %2849 = vmatpush1.bf16.msra.mxu0 0
        %2850 = vmatprep.mubr.bf16.mxu0 0
        %2851 = vmatmul.mubr.bf16.gmra.mrb[0].mxu0 %v2816
        %v2852 = vpop.f32.mrb[0].mxu0
        %v2853 = vadd.f32 0.0, %v2852
        %v2854 = vpop.f32.mrb[0].mxu0
        %v2855 = vpop.f32.mrb[0].mxu0
        %v2856 = vadd.f32 0.0, %v2855
        %v2857 = vpop.f32.mrb[0].mxu0
        %2858 = vdwg.mxu0
        %2860 = vrot.lane.b32.xlu0 %v814, 96
        %v2861 = vpop.permute.xlu0 %2860
        %v2864 = vsel %vm1301, %v2569, 0
        %2866 = vmatprep.subr.bf16.mxu0 0
        %2867 = vmatpush1.bf16.msra.mxu0 %v2861
        %2868 = vmatprep.subr.bf16.mxu0 0
        %2869 = vmatpush1.bf16.msra.mxu0 0
        %2870 = vmatprep.subr.bf16.mxu0 0
        %2871 = vmatpush1.bf16.msra.mxu0 0
        %2872 = vmatprep.subr.bf16.mxu0 0
        %2873 = vmatpush1.bf16.msra.mxu0 0
        %2874 = vmatprep.subr.bf16.mxu0 0
        %2875 = vmatpush1.bf16.msra.mxu0 0
        %2876 = vmatprep.subr.bf16.mxu0 0
        %2877 = vmatpush1.bf16.msra.mxu0 0
        %2878 = vmatprep.subr.bf16.mxu0 0
        %2879 = vmatpush1.bf16.msra.mxu0 0
        %2880 = vmatprep.subr.bf16.mxu0 0
        %2881 = vmatpush1.bf16.msra.mxu0 0
        %2882 = vmatprep.subr.bf16.mxu0 0
        %2883 = vmatpush1.bf16.msra.mxu0 0
        %2884 = vmatprep.subr.bf16.mxu0 0
        %2885 = vmatpush1.bf16.msra.mxu0 0
        %2886 = vmatprep.subr.bf16.mxu0 0
        %2887 = vmatpush1.bf16.msra.mxu0 0
        %2888 = vmatprep.subr.bf16.mxu0 0
        %2889 = vmatpush1.bf16.msra.mxu0 0
        %2890 = vmatprep.subr.bf16.mxu0 0
        %2891 = vmatpush1.bf16.msra.mxu0 0
        %2892 = vmatprep.subr.bf16.mxu0 0
        %2893 = vmatpush1.bf16.msra.mxu0 0
        %2894 = vmatprep.subr.bf16.mxu0 0
        %2895 = vmatpush1.bf16.msra.mxu0 0
        %2896 = vmatprep.subr.bf16.mxu0 0
        %2897 = vmatpush1.bf16.msra.mxu0 0
        %2898 = vmatprep.mubr.bf16.mxu0 0
        %2899 = vmatmul.mubr.bf16.gmra.mrb[0].mxu0 %v2864
        %v2900 = vpop.f32.mrb[0].mxu0
        %v2901 = vadd.f32 0.0, %v2900
        %v2902 = vpop.f32.mrb[0].mxu0
        %v2903 = vpop.f32.mrb[0].mxu0
        %v2904 = vadd.f32 0.0, %v2903
        %v2905 = vpop.f32.mrb[0].mxu0
        %2906 = vdwg.mxu0
        %2908 = vrot.lane.b32.xlu0 %v815, 96
        %v2909 = vpop.permute.xlu0 %2908
        %v2912 = vsel %vm1301, %v2570, 0
        %2914 = vmatprep.subr.bf16.mxu0 0
        %2915 = vmatpush1.bf16.msra.mxu0 %v2909
        %2916 = vmatprep.subr.bf16.mxu0 0
        %2917 = vmatpush1.bf16.msra.mxu0 0
        %2918 = vmatprep.subr.bf16.mxu0 0
        %2919 = vmatpush1.bf16.msra.mxu0 0
        %2920 = vmatprep.subr.bf16.mxu0 0
        %2921 = vmatpush1.bf16.msra.mxu0 0
        %2922 = vmatprep.subr.bf16.mxu0 0
        %2923 = vmatpush1.bf16.msra.mxu0 0
        %2924 = vmatprep.subr.bf16.mxu0 0
        %2925 = vmatpush1.bf16.msra.mxu0 0
        %2926 = vmatprep.subr.bf16.mxu0 0
        %2927 = vmatpush1.bf16.msra.mxu0 0
        %2928 = vmatprep.subr.bf16.mxu0 0
        %2929 = vmatpush1.bf16.msra.mxu0 0
        %2930 = vmatprep.subr.bf16.mxu0 0
        %2931 = vmatpush1.bf16.msra.mxu0 0
        %2932 = vmatprep.subr.bf16.mxu0 0
        %2933 = vmatpush1.bf16.msra.mxu0 0
        %2934 = vmatprep.subr.bf16.mxu0 0
        %2935 = vmatpush1.bf16.msra.mxu0 0
        %2936 = vmatprep.subr.bf16.mxu0 0
        %2937 = vmatpush1.bf16.msra.mxu0 0
        %2938 = vmatprep.subr.bf16.mxu0 0
        %2939 = vmatpush1.bf16.msra.mxu0 0
        %2940 = vmatprep.subr.bf16.mxu0 0
        %2941 = vmatpush1.bf16.msra.mxu0 0
        %2942 = vmatprep.subr.bf16.mxu0 0
        %2943 = vmatpush1.bf16.msra.mxu0 0
        %2944 = vmatprep.subr.bf16.mxu0 0
        %2945 = vmatpush1.bf16.msra.mxu0 0
        %2946 = vmatprep.mubr.bf16.mxu0 0
        %2947 = vmatmul.mubr.bf16.gmra.mrb[0].mxu0 %v2912
        %v2948 = vpop.f32.mrb[0].mxu0
        %v2949 = vadd.f32 0.0, %v2948
        %v2950 = vpop.f32.mrb[0].mxu0
        %v2951 = vpop.f32.mrb[0].mxu0
        %v2952 = vadd.f32 0.0, %v2951
        %v2953 = vpop.f32.mrb[0].mxu0
        %2954 = vdwg.mxu0
        %v2955 = vrcp.pop %v2517
        %v2956 = vrcp.pop %v2520
        %v2957 = vrcp.pop %v2523
        %v2958 = vrcp.pop %v2526
        %v2959 = vrcp.pop %v2529
        %v2960 = vrcp.pop %v2532
        %v2961 = vrcp.pop %v2535
        %v2962 = vrcp.pop %v2538
        %v2963 = vrcp.pop %v2541
        %v2964 = vrcp.pop %v2544
        %v2965 = vrcp.pop %v2547
        %v2966 = vrcp.pop %v2550
        %v2967 = vrcp.pop %v2553
        %v2968 = vrcp.pop %v2556
        %v2969 = vrcp.pop %v2559
        %v2970 = vrcp.pop %v2562
        %v2971 = vmul.f32 %v2613, %v2955
        %v2972 = vmul.f32 %v2616, %v2956
        %v2973 = vmul.f32 %v2661, %v2957
        %v2974 = vmul.f32 %v2664, %v2958
        %v2975 = vmul.f32 %v2709, %v2959
        %v2976 = vmul.f32 %v2712, %v2960
        %v2977 = vmul.f32 %v2757, %v2961
        %v2978 = vmul.f32 %v2760, %v2962
        %v2979 = vmul.f32 %v2805, %v2963
        %v2980 = vmul.f32 %v2808, %v2964
        %v2981 = vmul.f32 %v2853, %v2965
        %v2982 = vmul.f32 %v2856, %v2966
        %v2983 = vmul.f32 %v2901, %v2967
        %v2984 = vmul.f32 %v2904, %v2968
        %v2985 = vmul.f32 %v2949, %v2969
        %v2986 = vmul.f32 %v2952, %v2970
        %3003 = vrot.lane.b32.xlu0 %v1903, 96
        %v3004 = vpop.permute.xlu0 %3003
        %3005 = vrot.lane.b32.xlu0 %v1905, 96
        %v3006 = vpop.permute.xlu0 %3005
        %3007 = vrot.lane.b32.xlu0 %v1907, 96
        %v3008 = vpop.permute.xlu0 %3007
        %3009 = vrot.lane.b32.xlu0 %v1909, 96
        %v3010 = vpop.permute.xlu0 %3009
        %3011 = vrot.lane.b32.xlu0 %v1911, 96
        %v3012 = vpop.permute.xlu0 %3011
        %3013 = vrot.lane.b32.xlu0 %v1913, 96
        %v3014 = vpop.permute.xlu0 %3013
        %3015 = vrot.lane.b32.xlu0 %v1915, 96
        %v3016 = vpop.permute.xlu0 %3015
        %3017 = vrot.lane.b32.xlu0 %v1917, 96
        %v3018 = vpop.permute.xlu0 %3017
        %3019 = vrot.lane.b32.xlu0 %v1919, 96
        %v3020 = vpop.permute.xlu0 %3019
        %3021 = vrot.lane.b32.xlu0 %v1921, 96
        %v3022 = vpop.permute.xlu0 %3021
        %3023 = vrot.lane.b32.xlu0 %v1923, 96
        %v3024 = vpop.permute.xlu0 %3023
        %3025 = vrot.lane.b32.xlu0 %v1925, 96
        %v3026 = vpop.permute.xlu0 %3025
        %3027 = vrot.lane.b32.xlu0 %v1927, 96
        %v3028 = vpop.permute.xlu0 %3027
        %3029 = vrot.lane.b32.xlu0 %v1929, 96
        %v3030 = vpop.permute.xlu0 %3029
        %3031 = vrot.lane.b32.xlu0 %v1931, 96
        %v3032 = vpop.permute.xlu0 %3031
        %3033 = vrot.lane.b32.xlu0 %v1933, 96
        %v3034 = vpop.permute.xlu0 %3033
        %v3051 = vmul.f32 %v2971, %v3004
        %v3052 = vmul.f32 %v2972, %v3006
        %v3053 = vmul.f32 %v2973, %v3008
        %v3054 = vmul.f32 %v2974, %v3010
        %v3055 = vmul.f32 %v2975, %v3012
        %v3056 = vmul.f32 %v2976, %v3014
        %v3057 = vmul.f32 %v2977, %v3016
        %v3058 = vmul.f32 %v2978, %v3018
        %v3059 = vmul.f32 %v2979, %v3020
        %v3060 = vmul.f32 %v2980, %v3022
        %v3061 = vmul.f32 %v2981, %v3024
        %v3062 = vmul.f32 %v2982, %v3026
        %v3063 = vmul.f32 %v2983, %v3028
        %v3064 = vmul.f32 %v2984, %v3030
        %v3065 = vmul.f32 %v2985, %v3032
        %v3066 = vmul.f32 %v2986, %v3034
        %v3067 = vpack.c.bf16 %v3052, %v3051
        %v3068 = vpack.c.bf16 %v3054, %v3053
        %v3069 = vpack.c.bf16 %v3056, %v3055
        %v3070 = vpack.c.bf16 %v3058, %v3057
        %v3071 = vpack.c.bf16 %v3060, %v3059
        %v3072 = vpack.c.bf16 %v3062, %v3061
        %v3073 = vpack.c.bf16 %v3064, %v3063
        %v3074 = vpack.c.bf16 %v3066, %v3065
        %v3079 = vunpack.c.l.b16 %v860
        %v3080 = vunpack.c.l.b16 %v861
        %v3081 = vunpack.c.l.b16 %v862
        %v3082 = vunpack.c.l.b16 %v863
        %v3083 = vpack.c.b16 %v3080, %v3079
        %v3084 = vpack.c.b16 %v3082, %v3081
        %v3088 = vsel %vm876, %v3067, 0
        %v3091 = vsel %vm876, %v3068, 0
        %v3094 = vsel %vm876, %v3069, 0
        %v3097 = vsel %vm876, %v3070, 0
        %v3100 = vsel %vm876, %v3071, 0
        %v3103 = vsel %vm876, %v3072, 0
        %v3106 = vsel %vm876, %v3073, 0
        %v3109 = vsel %vm876, %v3074, 0
        %3111 = vmatprep.subr.bf16.mxu0 0
        %3112 = vmatpush1.bf16.msra.mxu0 %v3083
        %3113 = vmatprep.subr.bf16.mxu0 0
        %3114 = vmatpush1.bf16.msra.mxu0 %v3084
        %3115 = vmatprep.subr.bf16.mxu0 0
        %3116 = vmatpush1.bf16.msra.mxu0 0
        %3117 = vmatprep.subr.bf16.mxu0 0
        %3118 = vmatpush1.bf16.msra.mxu0 0
        %3119 = vmatprep.subr.bf16.mxu0 0
        %3120 = vmatpush1.bf16.msra.mxu0 0
        %3121 = vmatprep.subr.bf16.mxu0 0
        %3122 = vmatpush1.bf16.msra.mxu0 0
        %3123 = vmatprep.subr.bf16.mxu0 0
        %3124 = vmatpush1.bf16.msra.mxu0 0
        %3125 = vmatprep.subr.bf16.mxu0 0
        %3126 = vmatpush1.bf16.msra.mxu0 0
        %3127 = vmatprep.subr.bf16.mxu0 0
        %3128 = vmatpush1.bf16.msra.mxu0 0
        %3129 = vmatprep.subr.bf16.mxu0 0
        %3130 = vmatpush1.bf16.msra.mxu0 0
        %3131 = vmatprep.subr.bf16.mxu0 0
        %3132 = vmatpush1.bf16.msra.mxu0 0
        %3133 = vmatprep.subr.bf16.mxu0 0
        %3134 = vmatpush1.bf16.msra.mxu0 0
        %3135 = vmatprep.subr.bf16.mxu0 0
        %3136 = vmatpush1.bf16.msra.mxu0 0
        %3137 = vmatprep.subr.bf16.mxu0 0
        %3138 = vmatpush1.bf16.msra.mxu0 0
        %3139 = vmatprep.subr.bf16.mxu0 0
        %3140 = vmatpush1.bf16.msra.mxu0 0
        %3141 = vmatprep.subr.bf16.mxu0 0
        %3142 = vmatpush1.bf16.msra.mxu0 0
        %3143 = vmatprep.mubr.bf16.mxu0 0
        %3144 = vmatmul.mubr.bf16.gmra.mrb[0].mxu0 %v3088
        %v3145 = vpop.f32.mrb[0].mxu0
        %v3146 = vadd.f32 0.0, %v3145
        %v3147 = vpop.f32.mrb[0].mxu0
        %v3148 = vpop.f32.mrb[0].mxu0
        %v3149 = vadd.f32 0.0, %v3148
        %v3150 = vpop.f32.mrb[0].mxu0
        %3151 = vmatprep.mubr.bf16.mxu0 0
        %3152 = vmatmul.mubr.bf16.gmra.mrb[0].mxu0 %v3091
        %v3153 = vpop.f32.mrb[0].mxu0
        %v3154 = vadd.f32 0.0, %v3153
        %v3155 = vpop.f32.mrb[0].mxu0
        %v3156 = vpop.f32.mrb[0].mxu0
        %v3157 = vadd.f32 0.0, %v3156
        %v3158 = vpop.f32.mrb[0].mxu0
        %3159 = vmatprep.mubr.bf16.mxu0 0
        %3160 = vmatmul.mubr.bf16.gmra.mrb[0].mxu0 %v3094
        %v3161 = vpop.f32.mrb[0].mxu0
        %v3162 = vadd.f32 0.0, %v3161
        %v3163 = vpop.f32.mrb[0].mxu0
        %v3164 = vpop.f32.mrb[0].mxu0
        %v3165 = vadd.f32 0.0, %v3164
        %v3166 = vpop.f32.mrb[0].mxu0
        %3167 = vmatprep.mubr.bf16.mxu0 0
        %3168 = vmatmul.mubr.bf16.gmra.mrb[0].mxu0 %v3097
        %v3169 = vpop.f32.mrb[0].mxu0
        %v3170 = vadd.f32 0.0, %v3169
        %v3171 = vpop.f32.mrb[0].mxu0
        %v3172 = vpop.f32.mrb[0].mxu0
        %v3173 = vadd.f32 0.0, %v3172
        %v3174 = vpop.f32.mrb[0].mxu0
        %3175 = vmatprep.mubr.bf16.mxu0 0
        %3176 = vmatmul.mubr.bf16.gmra.mrb[0].mxu0 %v3100
        %v3177 = vpop.f32.mrb[0].mxu0
        %v3178 = vadd.f32 0.0, %v3177
        %v3179 = vpop.f32.mrb[0].mxu0
        %v3180 = vpop.f32.mrb[0].mxu0
        %v3181 = vadd.f32 0.0, %v3180
        %v3182 = vpop.f32.mrb[0].mxu0
        %3183 = vmatprep.mubr.bf16.mxu0 0
        %3184 = vmatmul.mubr.bf16.gmra.mrb[0].mxu0 %v3103
        %v3185 = vpop.f32.mrb[0].mxu0
        %v3186 = vadd.f32 0.0, %v3185
        %v3187 = vpop.f32.mrb[0].mxu0
        %v3188 = vpop.f32.mrb[0].mxu0
        %v3189 = vadd.f32 0.0, %v3188
        %v3190 = vpop.f32.mrb[0].mxu0
        %3191 = vmatprep.mubr.bf16.mxu0 0
        %3192 = vmatmul.mubr.bf16.gmra.mrb[0].mxu0 %v3106
        %v3193 = vpop.f32.mrb[0].mxu0
        %v3194 = vadd.f32 0.0, %v3193
        %v3195 = vpop.f32.mrb[0].mxu0
        %v3196 = vpop.f32.mrb[0].mxu0
        %v3197 = vadd.f32 0.0, %v3196
        %v3198 = vpop.f32.mrb[0].mxu0
        %3199 = vmatprep.mubr.bf16.mxu0 0
        %3200 = vmatmul.mubr.bf16.gmra.mrb[0].mxu0 %v3109
        %v3201 = vpop.f32.mrb[0].mxu0
        %v3202 = vadd.f32 0.0, %v3201
        %v3203 = vpop.f32.mrb[0].mxu0
        %v3204 = vpop.f32.mrb[0].mxu0
        %v3205 = vadd.f32 0.0, %v3204
        %v3206 = vpop.f32.mrb[0].mxu0
        %3207 = vdwg.mxu0
        %v3212 = vunpack.c.l.b16 %v856
        %v3213 = vunpack.c.l.b16 %v857
        %v3214 = vunpack.c.l.b16 %v858
        %v3215 = vunpack.c.l.b16 %v859
        %v3216 = vpack.c.b16 %v3213, %v3212
        %v3217 = vpack.c.b16 %v3215, %v3214
        %v3221 = vsel %vm876, %v1966, 0
        %v3224 = vsel %vm876, %v1967, 0
        %v3227 = vsel %vm876, %v1968, 0
        %v3230 = vsel %vm876, %v1969, 0
        %v3233 = vsel %vm876, %v1970, 0
        %v3236 = vsel %vm876, %v1971, 0
        %v3239 = vsel %vm876, %v1972, 0
        %v3242 = vsel %vm876, %v1973, 0
        %3244 = vmatprep.subr.bf16.mxu0 0
        %3245 = vmatpush1.bf16.msra.mxu0 %v3216
        %3246 = vmatprep.subr.bf16.mxu0 0
        %3247 = vmatpush1.bf16.msra.mxu0 %v3217
        %3248 = vmatprep.subr.bf16.mxu0 0
        %3249 = vmatpush1.bf16.msra.mxu0 0
        %3250 = vmatprep.subr.bf16.mxu0 0
        %3251 = vmatpush1.bf16.msra.mxu0 0
        %3252 = vmatprep.subr.bf16.mxu0 0
        %3253 = vmatpush1.bf16.msra.mxu0 0
        %3254 = vmatprep.subr.bf16.mxu0 0
        %3255 = vmatpush1.bf16.msra.mxu0 0
        %3256 = vmatprep.subr.bf16.mxu0 0
        %3257 = vmatpush1.bf16.msra.mxu0 0
        %3258 = vmatprep.subr.bf16.mxu0 0
        %3259 = vmatpush1.bf16.msra.mxu0 0
        %3260 = vmatprep.subr.bf16.mxu0 0
        %3261 = vmatpush1.bf16.msra.mxu0 0
        %3262 = vmatprep.subr.bf16.mxu0 0
        %3263 = vmatpush1.bf16.msra.mxu0 0
        %3264 = vmatprep.subr.bf16.mxu0 0
        %3265 = vmatpush1.bf16.msra.mxu0 0
        %3266 = vmatprep.subr.bf16.mxu0 0
        %3267 = vmatpush1.bf16.msra.mxu0 0
        %3268 = vmatprep.subr.bf16.mxu0 0
        %3269 = vmatpush1.bf16.msra.mxu0 0
        %3270 = vmatprep.subr.bf16.mxu0 0
        %3271 = vmatpush1.bf16.msra.mxu0 0
        %3272 = vmatprep.subr.bf16.mxu0 0
        %3273 = vmatpush1.bf16.msra.mxu0 0
        %3274 = vmatprep.subr.bf16.mxu0 0
        %3275 = vmatpush1.bf16.msra.mxu0 0
        %3276 = vmatprep.mubr.bf16.mxu0 0
        %3277 = vmatmul.mubr.bf16.gmra.mrb[0].mxu0 %v3221
        %v3278 = vpop.f32.mrb[0].mxu0
        %v3279 = vadd.f32 %v3146, %v3278
        %v3280 = vpop.f32.mrb[0].mxu0
        %v3281 = vpop.f32.mrb[0].mxu0
        %v3282 = vadd.f32 %v3149, %v3281
        %v3283 = vpop.f32.mrb[0].mxu0
        %3284 = vmatprep.mubr.bf16.mxu0 0
        %3285 = vmatmul.mubr.bf16.gmra.mrb[0].mxu0 %v3224
        %v3286 = vpop.f32.mrb[0].mxu0
        %v3287 = vadd.f32 %v3154, %v3286
        %v3288 = vpop.f32.mrb[0].mxu0
        %v3289 = vpop.f32.mrb[0].mxu0
        %v3290 = vadd.f32 %v3157, %v3289
        %v3291 = vpop.f32.mrb[0].mxu0
        %3292 = vmatprep.mubr.bf16.mxu0 0
        %3293 = vmatmul.mubr.bf16.gmra.mrb[0].mxu0 %v3227
        %v3294 = vpop.f32.mrb[0].mxu0
        %v3295 = vadd.f32 %v3162, %v3294
        %v3296 = vpop.f32.mrb[0].mxu0
        %v3297 = vpop.f32.mrb[0].mxu0
        %v3298 = vadd.f32 %v3165, %v3297
        %v3299 = vpop.f32.mrb[0].mxu0
        %3300 = vmatprep.mubr.bf16.mxu0 0
        %3301 = vmatmul.mubr.bf16.gmra.mrb[0].mxu0 %v3230
        %v3302 = vpop.f32.mrb[0].mxu0
        %v3303 = vadd.f32 %v3170, %v3302
        %v3304 = vpop.f32.mrb[0].mxu0
        %v3305 = vpop.f32.mrb[0].mxu0
        %v3306 = vadd.f32 %v3173, %v3305
        %v3307 = vpop.f32.mrb[0].mxu0
        %3308 = vmatprep.mubr.bf16.mxu0 0
        %3309 = vmatmul.mubr.bf16.gmra.mrb[0].mxu0 %v3233
        %v3310 = vpop.f32.mrb[0].mxu0
        %v3311 = vadd.f32 %v3178, %v3310
        %v3312 = vpop.f32.mrb[0].mxu0
        %v3313 = vpop.f32.mrb[0].mxu0
        %v3314 = vadd.f32 %v3181, %v3313
        %v3315 = vpop.f32.mrb[0].mxu0
        %3316 = vmatprep.mubr.bf16.mxu0 0
        %3317 = vmatmul.mubr.bf16.gmra.mrb[0].mxu0 %v3236
        %v3318 = vpop.f32.mrb[0].mxu0
        %v3319 = vadd.f32 %v3186, %v3318
        %v3320 = vpop.f32.mrb[0].mxu0
        %v3321 = vpop.f32.mrb[0].mxu0
        %v3322 = vadd.f32 %v3189, %v3321
        %v3323 = vpop.f32.mrb[0].mxu0
        %3324 = vmatprep.mubr.bf16.mxu0 0
        %3325 = vmatmul.mubr.bf16.gmra.mrb[0].mxu0 %v3239
        %v3326 = vpop.f32.mrb[0].mxu0
        %v3327 = vadd.f32 %v3194, %v3326
        %v3328 = vpop.f32.mrb[0].mxu0
        %v3329 = vpop.f32.mrb[0].mxu0
        %v3330 = vadd.f32 %v3197, %v3329
        %v3331 = vpop.f32.mrb[0].mxu0
        %3332 = vmatprep.mubr.bf16.mxu0 0
        %3333 = vmatmul.mubr.bf16.gmra.mrb[0].mxu0 %v3242
        %v3334 = vpop.f32.mrb[0].mxu0
        %v3335 = vadd.f32 %v3202, %v3334
        %v3336 = vpop.f32.mrb[0].mxu0
        %v3337 = vpop.f32.mrb[0].mxu0
        %v3338 = vadd.f32 %v3205, %v3337
        %v3339 = vpop.f32.mrb[0].mxu0
        %3340 = vdwg.mxu0
        %s3341 = scalar_lea.vmem [#allocation7], 16
        %v3342 = vld [vmem:[%s3341] sm:$0xf]
        %v3343 = vld [vmem:[%s3341 + $0x4] sm:$0xf]
        %v3344 = vunpack.c.l.bf16 %v3342
        %v3345 = vunpack.c.l.bf16 %v3343
        %3346 = vrot.lane.b32.xlu0 %v792, 64
        %v3347 = vpop.permute.xlu0 %3346
        %3348 = vrot.lane.b32.xlu0 %v800, 64
        %v3349 = vpop.permute.xlu0 %3348
        %v3351 = vsel %vm876, %v3347, 0
        %v3354 = vsel %vm876, %v3349, 0
        %3356 = vmatprep.subr.bf16.mxu0 0
        %3357 = vmatpush1.bf16.xpose.msra.mxu0 %v3354
        %3358 = vmatprep.subr.bf16.mxu0 0
        %3359 = vmatpush1.bf16.xpose.msra.mxu0 0
        %3360 = vmatprep.subr.bf16.mxu0 0
        %3361 = vmatpush1.bf16.xpose.msra.mxu0 0
        %3362 = vmatprep.subr.bf16.mxu0 0
        %3363 = vmatpush1.bf16.xpose.msra.mxu0 0
        %3364 = vmatprep.subr.bf16.mxu0 0
        %3365 = vmatpush1.bf16.xpose.msra.mxu0 0
        %3366 = vmatprep.subr.bf16.mxu0 0
        %3367 = vmatpush1.bf16.xpose.msra.mxu0 0
        %3368 = vmatprep.subr.bf16.mxu0 0
        %3369 = vmatpush1.bf16.xpose.msra.mxu0 0
        %3370 = vmatprep.subr.bf16.mxu0 0
        %3371 = vmatpush1.bf16.xpose.msra.mxu0 0
        %3372 = vmatprep.subr.bf16.mxu0 0
        %3373 = vmatpush1.bf16.xpose.msra.mxu0 0
        %3374 = vmatprep.subr.bf16.mxu0 0
        %3375 = vmatpush1.bf16.xpose.msra.mxu0 0
        %3376 = vmatprep.subr.bf16.mxu0 0
        %3377 = vmatpush1.bf16.xpose.msra.mxu0 0
        %3378 = vmatprep.subr.bf16.mxu0 0
        %3379 = vmatpush1.bf16.xpose.msra.mxu0 0
        %3380 = vmatprep.subr.bf16.mxu0 0
        %3381 = vmatpush1.bf16.xpose.msra.mxu0 0
        %3382 = vmatprep.subr.bf16.mxu0 0
        %3383 = vmatpush1.bf16.xpose.msra.mxu0 0
        %3384 = vmatprep.subr.bf16.mxu0 0
        %3385 = vmatpush1.bf16.xpose.msra.mxu0 0
        %3386 = vmatprep.subr.bf16.mxu0 0
        %3387 = vmatpush1.bf16.xpose.msra.mxu0 0
        %3388 = vmatprep.mubr.bf16.mxu0 0
        %3389 = vmatmul.mubr.bf16.gmra.mrb[0].mxu0 %v3351
        %v3390 = vpop.f32.mrb[0].mxu0
        %v3391 = vadd.f32 %v3344, %v3390
        %v3392 = vpop.f32.mrb[0].mxu0
        %v3393 = vpop.f32.mrb[0].mxu0
        %v3394 = vadd.f32 %v3345, %v3393
        %v3395 = vpop.f32.mrb[0].mxu0
        %3396 = vdwg.mxu0
        %3397 = vrot.lane.b32.xlu0 %v793, 64
        %v3398 = vpop.permute.xlu0 %3397
        %3399 = vrot.lane.b32.xlu0 %v801, 64
        %v3400 = vpop.permute.xlu0 %3399
        %v3402 = vsel %vm876, %v3398, 0
        %v3405 = vsel %vm876, %v3400, 0
        %3407 = vmatprep.subr.bf16.mxu0 0
        %3408 = vmatpush1.bf16.xpose.msra.mxu0 %v3405
        %3409 = vmatprep.subr.bf16.mxu0 0
        %3410 = vmatpush1.bf16.xpose.msra.mxu0 0
        %3411 = vmatprep.subr.bf16.mxu0 0
        %3412 = vmatpush1.bf16.xpose.msra.mxu0 0
        %3413 = vmatprep.subr.bf16.mxu0 0
        %3414 = vmatpush1.bf16.xpose.msra.mxu0 0
        %3415 = vmatprep.subr.bf16.mxu0 0
        %3416 = vmatpush1.bf16.xpose.msra.mxu0 0
        %3417 = vmatprep.subr.bf16.mxu0 0
        %3418 = vmatpush1.bf16.xpose.msra.mxu0 0
        %3419 = vmatprep.subr.bf16.mxu0 0
        %3420 = vmatpush1.bf16.xpose.msra.mxu0 0
        %3421 = vmatprep.subr.bf16.mxu0 0
        %3422 = vmatpush1.bf16.xpose.msra.mxu0 0
        %3423 = vmatprep.subr.bf16.mxu0 0
        %3424 = vmatpush1.bf16.xpose.msra.mxu0 0
        %3425 = vmatprep.subr.bf16.mxu0 0
        %3426 = vmatpush1.bf16.xpose.msra.mxu0 0
        %3427 = vmatprep.subr.bf16.mxu0 0
        %3428 = vmatpush1.bf16.xpose.msra.mxu0 0
        %3429 = vmatprep.subr.bf16.mxu0 0
        %3430 = vmatpush1.bf16.xpose.msra.mxu0 0
        %3431 = vmatprep.subr.bf16.mxu0 0
        %3432 = vmatpush1.bf16.xpose.msra.mxu0 0
        %3433 = vmatprep.subr.bf16.mxu0 0
        %3434 = vmatpush1.bf16.xpose.msra.mxu0 0
        %3435 = vmatprep.subr.bf16.mxu0 0
        %3436 = vmatpush1.bf16.xpose.msra.mxu0 0
        %3437 = vmatprep.subr.bf16.mxu0 0
        %3438 = vmatpush1.bf16.xpose.msra.mxu0 0
        %3439 = vmatprep.mubr.bf16.mxu0 0
        %3440 = vmatmul.mubr.bf16.gmra.mrb[0].mxu0 %v3402
        %v3441 = vpop.f32.mrb[0].mxu0
        %v3442 = vadd.f32 %v3344, %v3441
        %v3443 = vpop.f32.mrb[0].mxu0
        %v3444 = vpop.f32.mrb[0].mxu0
        %v3445 = vadd.f32 %v3345, %v3444
        %v3446 = vpop.f32.mrb[0].mxu0
        %3447 = vdwg.mxu0
        %3448 = vrot.lane.b32.xlu0 %v794, 64
        %v3449 = vpop.permute.xlu0 %3448
        %3450 = vrot.lane.b32.xlu0 %v802, 64
        %v3451 = vpop.permute.xlu0 %3450
        %v3453 = vsel %vm876, %v3449, 0
        %v3456 = vsel %vm876, %v3451, 0
        %3458 = vmatprep.subr.bf16.mxu0 0
        %3459 = vmatpush1.bf16.xpose.msra.mxu0 %v3456
        %3460 = vmatprep.subr.bf16.mxu0 0
        %3461 = vmatpush1.bf16.xpose.msra.mxu0 0
        %3462 = vmatprep.subr.bf16.mxu0 0
        %3463 = vmatpush1.bf16.xpose.msra.mxu0 0
        %3464 = vmatprep.subr.bf16.mxu0 0
        %3465 = vmatpush1.bf16.xpose.msra.mxu0 0
        %3466 = vmatprep.subr.bf16.mxu0 0
        %3467 = vmatpush1.bf16.xpose.msra.mxu0 0
        %3468 = vmatprep.subr.bf16.mxu0 0
        %3469 = vmatpush1.bf16.xpose.msra.mxu0 0
        %3470 = vmatprep.subr.bf16.mxu0 0
        %3471 = vmatpush1.bf16.xpose.msra.mxu0 0
        %3472 = vmatprep.subr.bf16.mxu0 0
        %3473 = vmatpush1.bf16.xpose.msra.mxu0 0
        %3474 = vmatprep.subr.bf16.mxu0 0
        %3475 = vmatpush1.bf16.xpose.msra.mxu0 0
        %3476 = vmatprep.subr.bf16.mxu0 0
        %3477 = vmatpush1.bf16.xpose.msra.mxu0 0
        %3478 = vmatprep.subr.bf16.mxu0 0
        %3479 = vmatpush1.bf16.xpose.msra.mxu0 0
        %3480 = vmatprep.subr.bf16.mxu0 0
        %3481 = vmatpush1.bf16.xpose.msra.mxu0 0
        %3482 = vmatprep.subr.bf16.mxu0 0
        %3483 = vmatpush1.bf16.xpose.msra.mxu0 0
        %3484 = vmatprep.subr.bf16.mxu0 0
        %3485 = vmatpush1.bf16.xpose.msra.mxu0 0
        %3486 = vmatprep.subr.bf16.mxu0 0
        %3487 = vmatpush1.bf16.xpose.msra.mxu0 0
        %3488 = vmatprep.subr.bf16.mxu0 0
        %3489 = vmatpush1.bf16.xpose.msra.mxu0 0
        %3490 = vmatprep.mubr.bf16.mxu0 0
        %3491 = vmatmul.mubr.bf16.gmra.mrb[0].mxu0 %v3453
        %v3492 = vpop.f32.mrb[0].mxu0
        %v3493 = vadd.f32 %v3344, %v3492
        %v3494 = vpop.f32.mrb[0].mxu0
        %v3495 = vpop.f32.mrb[0].mxu0
        %v3496 = vadd.f32 %v3345, %v3495
        %v3497 = vpop.f32.mrb[0].mxu0
        %3498 = vdwg.mxu0
        %3499 = vrot.lane.b32.xlu0 %v795, 64
        %v3500 = vpop.permute.xlu0 %3499
        %3501 = vrot.lane.b32.xlu0 %v803, 64
        %v3502 = vpop.permute.xlu0 %3501
        %v3504 = vsel %vm876, %v3500, 0
        %v3507 = vsel %vm876, %v3502, 0
        %3509 = vmatprep.subr.bf16.mxu0 0
        %3510 = vmatpush1.bf16.xpose.msra.mxu0 %v3507
        %3511 = vmatprep.subr.bf16.mxu0 0
        %3512 = vmatpush1.bf16.xpose.msra.mxu0 0
        %3513 = vmatprep.subr.bf16.mxu0 0
        %3514 = vmatpush1.bf16.xpose.msra.mxu0 0
        %3515 = vmatprep.subr.bf16.mxu0 0
        %3516 = vmatpush1.bf16.xpose.msra.mxu0 0
        %3517 = vmatprep.subr.bf16.mxu0 0
        %3518 = vmatpush1.bf16.xpose.msra.mxu0 0
        %3519 = vmatprep.subr.bf16.mxu0 0
        %3520 = vmatpush1.bf16.xpose.msra.mxu0 0
        %3521 = vmatprep.subr.bf16.mxu0 0
        %3522 = vmatpush1.bf16.xpose.msra.mxu0 0
        %3523 = vmatprep.subr.bf16.mxu0 0
        %3524 = vmatpush1.bf16.xpose.msra.mxu0 0
        %3525 = vmatprep.subr.bf16.mxu0 0
        %3526 = vmatpush1.bf16.xpose.msra.mxu0 0
        %3527 = vmatprep.subr.bf16.mxu0 0
        %3528 = vmatpush1.bf16.xpose.msra.mxu0 0
        %3529 = vmatprep.subr.bf16.mxu0 0
        %3530 = vmatpush1.bf16.xpose.msra.mxu0 0
        %3531 = vmatprep.subr.bf16.mxu0 0
        %3532 = vmatpush1.bf16.xpose.msra.mxu0 0
        %3533 = vmatprep.subr.bf16.mxu0 0
        %3534 = vmatpush1.bf16.xpose.msra.mxu0 0
        %3535 = vmatprep.subr.bf16.mxu0 0
        %3536 = vmatpush1.bf16.xpose.msra.mxu0 0
        %3537 = vmatprep.subr.bf16.mxu0 0
        %3538 = vmatpush1.bf16.xpose.msra.mxu0 0
        %3539 = vmatprep.subr.bf16.mxu0 0
        %3540 = vmatpush1.bf16.xpose.msra.mxu0 0
        %3541 = vmatprep.mubr.bf16.mxu0 0
        %3542 = vmatmul.mubr.bf16.gmra.mrb[0].mxu0 %v3504
        %v3543 = vpop.f32.mrb[0].mxu0
        %v3544 = vadd.f32 %v3344, %v3543
        %v3545 = vpop.f32.mrb[0].mxu0
        %v3546 = vpop.f32.mrb[0].mxu0
        %v3547 = vadd.f32 %v3345, %v3546
        %v3548 = vpop.f32.mrb[0].mxu0
        %3549 = vdwg.mxu0
        %3550 = vrot.lane.b32.xlu0 %v796, 64
        %v3551 = vpop.permute.xlu0 %3550
        %3552 = vrot.lane.b32.xlu0 %v804, 64
        %v3553 = vpop.permute.xlu0 %3552
        %v3555 = vsel %vm876, %v3551, 0
        %v3558 = vsel %vm876, %v3553, 0
        %3560 = vmatprep.subr.bf16.mxu0 0
        %3561 = vmatpush1.bf16.xpose.msra.mxu0 %v3558
        %3562 = vmatprep.subr.bf16.mxu0 0
        %3563 = vmatpush1.bf16.xpose.msra.mxu0 0
        %3564 = vmatprep.subr.bf16.mxu0 0
        %3565 = vmatpush1.bf16.xpose.msra.mxu0 0
        %3566 = vmatprep.subr.bf16.mxu0 0
        %3567 = vmatpush1.bf16.xpose.msra.mxu0 0
        %3568 = vmatprep.subr.bf16.mxu0 0
        %3569 = vmatpush1.bf16.xpose.msra.mxu0 0
        %3570 = vmatprep.subr.bf16.mxu0 0
        %3571 = vmatpush1.bf16.xpose.msra.mxu0 0
        %3572 = vmatprep.subr.bf16.mxu0 0
        %3573 = vmatpush1.bf16.xpose.msra.mxu0 0
        %3574 = vmatprep.subr.bf16.mxu0 0
        %3575 = vmatpush1.bf16.xpose.msra.mxu0 0
        %3576 = vmatprep.subr.bf16.mxu0 0
        %3577 = vmatpush1.bf16.xpose.msra.mxu0 0
        %3578 = vmatprep.subr.bf16.mxu0 0
        %3579 = vmatpush1.bf16.xpose.msra.mxu0 0
        %3580 = vmatprep.subr.bf16.mxu0 0
        %3581 = vmatpush1.bf16.xpose.msra.mxu0 0
        %3582 = vmatprep.subr.bf16.mxu0 0
        %3583 = vmatpush1.bf16.xpose.msra.mxu0 0
        %3584 = vmatprep.subr.bf16.mxu0 0
        %3585 = vmatpush1.bf16.xpose.msra.mxu0 0
        %3586 = vmatprep.subr.bf16.mxu0 0
        %3587 = vmatpush1.bf16.xpose.msra.mxu0 0
        %3588 = vmatprep.subr.bf16.mxu0 0
        %3589 = vmatpush1.bf16.xpose.msra.mxu0 0
        %3590 = vmatprep.subr.bf16.mxu0 0
        %3591 = vmatpush1.bf16.xpose.msra.mxu0 0
        %3592 = vmatprep.mubr.bf16.mxu0 0
        %3593 = vmatmul.mubr.bf16.gmra.mrb[0].mxu0 %v3555
        %v3594 = vpop.f32.mrb[0].mxu0
        %v3595 = vadd.f32 %v3344, %v3594
        %v3596 = vpop.f32.mrb[0].mxu0
        %v3597 = vpop.f32.mrb[0].mxu0
        %v3598 = vadd.f32 %v3345, %v3597
        %v3599 = vpop.f32.mrb[0].mxu0
        %3600 = vdwg.mxu0
        %3601 = vrot.lane.b32.xlu0 %v797, 64
        %v3602 = vpop.permute.xlu0 %3601
        %3603 = vrot.lane.b32.xlu0 %v805, 64
        %v3604 = vpop.permute.xlu0 %3603
        %v3606 = vsel %vm876, %v3602, 0
        %v3609 = vsel %vm876, %v3604, 0
        %3611 = vmatprep.subr.bf16.mxu0 0
        %3612 = vmatpush1.bf16.xpose.msra.mxu0 %v3609
        %3613 = vmatprep.subr.bf16.mxu0 0
        %3614 = vmatpush1.bf16.xpose.msra.mxu0 0
        %3615 = vmatprep.subr.bf16.mxu0 0
        %3616 = vmatpush1.bf16.xpose.msra.mxu0 0
        %3617 = vmatprep.subr.bf16.mxu0 0
        %3618 = vmatpush1.bf16.xpose.msra.mxu0 0
        %3619 = vmatprep.subr.bf16.mxu0 0
        %3620 = vmatpush1.bf16.xpose.msra.mxu0 0
        %3621 = vmatprep.subr.bf16.mxu0 0
        %3622 = vmatpush1.bf16.xpose.msra.mxu0 0
        %3623 = vmatprep.subr.bf16.mxu0 0
        %3624 = vmatpush1.bf16.xpose.msra.mxu0 0
        %3625 = vmatprep.subr.bf16.mxu0 0
        %3626 = vmatpush1.bf16.xpose.msra.mxu0 0
        %3627 = vmatprep.subr.bf16.mxu0 0
        %3628 = vmatpush1.bf16.xpose.msra.mxu0 0
        %3629 = vmatprep.subr.bf16.mxu0 0
        %3630 = vmatpush1.bf16.xpose.msra.mxu0 0
        %3631 = vmatprep.subr.bf16.mxu0 0
        %3632 = vmatpush1.bf16.xpose.msra.mxu0 0
        %3633 = vmatprep.subr.bf16.mxu0 0
        %3634 = vmatpush1.bf16.xpose.msra.mxu0 0
        %3635 = vmatprep.subr.bf16.mxu0 0
        %3636 = vmatpush1.bf16.xpose.msra.mxu0 0
        %3637 = vmatprep.subr.bf16.mxu0 0
        %3638 = vmatpush1.bf16.xpose.msra.mxu0 0
        %3639 = vmatprep.subr.bf16.mxu0 0
        %3640 = vmatpush1.bf16.xpose.msra.mxu0 0
        %3641 = vmatprep.subr.bf16.mxu0 0
        %3642 = vmatpush1.bf16.xpose.msra.mxu0 0
        %3643 = vmatprep.mubr.bf16.mxu0 0
        %3644 = vmatmul.mubr.bf16.gmra.mrb[0].mxu0 %v3606
        %v3645 = vpop.f32.mrb[0].mxu0
        %v3646 = vadd.f32 %v3344, %v3645
        %v3647 = vpop.f32.mrb[0].mxu0
        %v3648 = vpop.f32.mrb[0].mxu0
        %v3649 = vadd.f32 %v3345, %v3648
        %v3650 = vpop.f32.mrb[0].mxu0
        %3651 = vdwg.mxu0
        %3652 = vrot.lane.b32.xlu0 %v798, 64
        %v3653 = vpop.permute.xlu0 %3652
        %3654 = vrot.lane.b32.xlu0 %v806, 64
        %v3655 = vpop.permute.xlu0 %3654
        %v3657 = vsel %vm876, %v3653, 0
        %v3660 = vsel %vm876, %v3655, 0
        %3662 = vmatprep.subr.bf16.mxu0 0
        %3663 = vmatpush1.bf16.xpose.msra.mxu0 %v3660
        %3664 = vmatprep.subr.bf16.mxu0 0
        %3665 = vmatpush1.bf16.xpose.msra.mxu0 0
        %3666 = vmatprep.subr.bf16.mxu0 0
        %3667 = vmatpush1.bf16.xpose.msra.mxu0 0
        %3668 = vmatprep.subr.bf16.mxu0 0
        %3669 = vmatpush1.bf16.xpose.msra.mxu0 0
        %3670 = vmatprep.subr.bf16.mxu0 0
        %3671 = vmatpush1.bf16.xpose.msra.mxu0 0
        %3672 = vmatprep.subr.bf16.mxu0 0
        %3673 = vmatpush1.bf16.xpose.msra.mxu0 0
        %3674 = vmatprep.subr.bf16.mxu0 0
        %3675 = vmatpush1.bf16.xpose.msra.mxu0 0
        %3676 = vmatprep.subr.bf16.mxu0 0
        %3677 = vmatpush1.bf16.xpose.msra.mxu0 0
        %3678 = vmatprep.subr.bf16.mxu0 0
        %3679 = vmatpush1.bf16.xpose.msra.mxu0 0
        %3680 = vmatprep.subr.bf16.mxu0 0
        %3681 = vmatpush1.bf16.xpose.msra.mxu0 0
        %3682 = vmatprep.subr.bf16.mxu0 0
        %3683 = vmatpush1.bf16.xpose.msra.mxu0 0
        %3684 = vmatprep.subr.bf16.mxu0 0
        %3685 = vmatpush1.bf16.xpose.msra.mxu0 0
        %3686 = vmatprep.subr.bf16.mxu0 0
        %3687 = vmatpush1.bf16.xpose.msra.mxu0 0
        %3688 = vmatprep.subr.bf16.mxu0 0
        %3689 = vmatpush1.bf16.xpose.msra.mxu0 0
        %3690 = vmatprep.subr.bf16.mxu0 0
        %3691 = vmatpush1.bf16.xpose.msra.mxu0 0
        %3692 = vmatprep.subr.bf16.mxu0 0
        %3693 = vmatpush1.bf16.xpose.msra.mxu0 0
        %3694 = vmatprep.mubr.bf16.mxu0 0
        %3695 = vmatmul.mubr.bf16.gmra.mrb[0].mxu0 %v3657
        %v3696 = vpop.f32.mrb[0].mxu0
        %v3697 = vadd.f32 %v3344, %v3696
        %v3698 = vpop.f32.mrb[0].mxu0
        %v3699 = vpop.f32.mrb[0].mxu0
        %v3700 = vadd.f32 %v3345, %v3699
        %v3701 = vpop.f32.mrb[0].mxu0
        %3702 = vdwg.mxu0
        %3703 = vrot.lane.b32.xlu0 %v799, 64
        %v3704 = vpop.permute.xlu0 %3703
        %3705 = vrot.lane.b32.xlu0 %v807, 64
        %v3706 = vpop.permute.xlu0 %3705
        %v3708 = vsel %vm876, %v3704, 0
        %v3711 = vsel %vm876, %v3706, 0
        %3713 = vmatprep.subr.bf16.mxu0 0
        %3714 = vmatpush1.bf16.xpose.msra.mxu0 %v3711
        %3715 = vmatprep.subr.bf16.mxu0 0
        %3716 = vmatpush1.bf16.xpose.msra.mxu0 0
        %3717 = vmatprep.subr.bf16.mxu0 0
        %3718 = vmatpush1.bf16.xpose.msra.mxu0 0
        %3719 = vmatprep.subr.bf16.mxu0 0
        %3720 = vmatpush1.bf16.xpose.msra.mxu0 0
        %3721 = vmatprep.subr.bf16.mxu0 0
        %3722 = vmatpush1.bf16.xpose.msra.mxu0 0
        %3723 = vmatprep.subr.bf16.mxu0 0
        %3724 = vmatpush1.bf16.xpose.msra.mxu0 0
        %3725 = vmatprep.subr.bf16.mxu0 0
        %3726 = vmatpush1.bf16.xpose.msra.mxu0 0
        %3727 = vmatprep.subr.bf16.mxu0 0
        %3728 = vmatpush1.bf16.xpose.msra.mxu0 0
        %3729 = vmatprep.subr.bf16.mxu0 0
        %3730 = vmatpush1.bf16.xpose.msra.mxu0 0
        %3731 = vmatprep.subr.bf16.mxu0 0
        %3732 = vmatpush1.bf16.xpose.msra.mxu0 0
        %3733 = vmatprep.subr.bf16.mxu0 0
        %3734 = vmatpush1.bf16.xpose.msra.mxu0 0
        %3735 = vmatprep.subr.bf16.mxu0 0
        %3736 = vmatpush1.bf16.xpose.msra.mxu0 0
        %3737 = vmatprep.subr.bf16.mxu0 0
        %3738 = vmatpush1.bf16.xpose.msra.mxu0 0
        %3739 = vmatprep.subr.bf16.mxu0 0
        %3740 = vmatpush1.bf16.xpose.msra.mxu0 0
        %3741 = vmatprep.subr.bf16.mxu0 0
        %3742 = vmatpush1.bf16.xpose.msra.mxu0 0
        %3743 = vmatprep.subr.bf16.mxu0 0
        %3744 = vmatpush1.bf16.xpose.msra.mxu0 0
        %3745 = vmatprep.mubr.bf16.mxu0 0
        %3746 = vmatmul.mubr.bf16.gmra.mrb[0].mxu0 %v3708
        %v3747 = vpop.f32.mrb[0].mxu0
        %v3748 = vadd.f32 %v3344, %v3747
        %v3749 = vpop.f32.mrb[0].mxu0
        %v3750 = vpop.f32.mrb[0].mxu0
        %v3751 = vadd.f32 %v3345, %v3750
        %v3752 = vpop.f32.mrb[0].mxu0
        %3753 = vdwg.mxu0
        %v3754 = vadd.f32 %v3391, %v1256
        %v3755 = vadd.f32 %v3394, %v1256
        %v3756 = vadd.f32 %v3442, %v1260
        %v3757 = vadd.f32 %v3445, %v1260
        %v3758 = vadd.f32 %v3493, %v1264
        %v3759 = vadd.f32 %v3496, %v1264
        %v3760 = vadd.f32 %v3544, %v1268
        %v3761 = vadd.f32 %v3547, %v1268
        %v3762 = vadd.f32 %v3595, %v1272
        %v3763 = vadd.f32 %v3598, %v1272
        %v3764 = vadd.f32 %v3646, %v1276
        %v3765 = vadd.f32 %v3649, %v1276
        %v3766 = vadd.f32 %v3697, %v1280
        %v3767 = vadd.f32 %v3700, %v1280
        %v3768 = vadd.f32 %v3748, %v1284
        %v3769 = vadd.f32 %v3751, %v1284
        %v3770 = vsel %vm1301, %v3754, -inf
        %3771 = vmax.xlane.f32.xlu0 %v3770
        %v3772 = vpop.xlane.xlu0 %3771
        %v3773 = vsel %vm1301, %v3755, -inf
        %3774 = vmax.xlane.f32.xlu0 %v3773
        %v3775 = vpop.xlane.xlu0 %3774
        %v3776 = vsel %vm1301, %v3756, -inf
        %3777 = vmax.xlane.f32.xlu0 %v3776
        %v3778 = vpop.xlane.xlu0 %3777
        %v3779 = vsel %vm1301, %v3757, -inf
        %3780 = vmax.xlane.f32.xlu0 %v3779
        %v3781 = vpop.xlane.xlu0 %3780
        %v3782 = vsel %vm1301, %v3758, -inf
        %3783 = vmax.xlane.f32.xlu0 %v3782
        %v3784 = vpop.xlane.xlu0 %3783
        %v3785 = vsel %vm1301, %v3759, -inf
        %3786 = vmax.xlane.f32.xlu0 %v3785
        %v3787 = vpop.xlane.xlu0 %3786
        %v3788 = vsel %vm1301, %v3760, -inf
        %3789 = vmax.xlane.f32.xlu0 %v3788
        %v3790 = vpop.xlane.xlu0 %3789
        %v3791 = vsel %vm1301, %v3761, -inf
        %3792 = vmax.xlane.f32.xlu0 %v3791
        %v3793 = vpop.xlane.xlu0 %3792
        %v3794 = vsel %vm1301, %v3762, -inf
        %3795 = vmax.xlane.f32.xlu0 %v3794
        %v3796 = vpop.xlane.xlu0 %3795
        %v3797 = vsel %vm1301, %v3763, -inf
        %3798 = vmax.xlane.f32.xlu0 %v3797
        %v3799 = vpop.xlane.xlu0 %3798
        %v3800 = vsel %vm1301, %v3764, -inf
        %3801 = vmax.xlane.f32.xlu0 %v3800
        %v3802 = vpop.xlane.xlu0 %3801
        %v3803 = vsel %vm1301, %v3765, -inf
        %3804 = vmax.xlane.f32.xlu0 %v3803
        %v3805 = vpop.xlane.xlu0 %3804
        %v3806 = vsel %vm1301, %v3766, -inf
        %3807 = vmax.xlane.f32.xlu0 %v3806
        %v3808 = vpop.xlane.xlu0 %3807
        %v3809 = vsel %vm1301, %v3767, -inf
        %3810 = vmax.xlane.f32.xlu0 %v3809
        %v3811 = vpop.xlane.xlu0 %3810
        %v3812 = vsel %vm1301, %v3768, -inf
        %3813 = vmax.xlane.f32.xlu0 %v3812
        %v3814 = vpop.xlane.xlu0 %3813
        %v3815 = vsel %vm1301, %v3769, -inf
        %3816 = vmax.xlane.f32.xlu0 %v3815
        %v3817 = vpop.xlane.xlu0 %3816
        %v3818 = vsub.f32 %v3754, %v3772
        %v3819 = vsub.f32 %v3755, %v3775
        %v3820 = vsub.f32 %v3756, %v3778
        %v3821 = vsub.f32 %v3757, %v3781
        %v3822 = vsub.f32 %v3758, %v3784
        %v3823 = vsub.f32 %v3759, %v3787
        %v3824 = vsub.f32 %v3760, %v3790
        %v3825 = vsub.f32 %v3761, %v3793
        %v3826 = vsub.f32 %v3762, %v3796
        %v3827 = vsub.f32 %v3763, %v3799
        %v3828 = vsub.f32 %v3764, %v3802
        %v3829 = vsub.f32 %v3765, %v3805
        %v3830 = vsub.f32 %v3766, %v3808
        %v3831 = vsub.f32 %v3767, %v3811
        %v3832 = vsub.f32 %v3768, %v3814
        %v3833 = vsub.f32 %v3769, %v3817
        %v3834 = vmul.f32 %v3818, 1.442695
        %v3835 = vpow.pop %v3834
        %v3836 = vmul.f32 %v3819, 1.442695
        %v3837 = vpow.pop %v3836
        %v3838 = vmul.f32 %v3820, 1.442695
        %v3839 = vpow.pop %v3838
        %v3840 = vmul.f32 %v3821, 1.442695
        %v3841 = vpow.pop %v3840
        %v3842 = vmul.f32 %v3822, 1.442695
        %v3843 = vpow.pop %v3842
        %v3844 = vmul.f32 %v3823, 1.442695
        %v3845 = vpow.pop %v3844
        %v3846 = vmul.f32 %v3824, 1.442695
        %v3847 = vpow.pop %v3846
        %v3848 = vmul.f32 %v3825, 1.442695
        %v3849 = vpow.pop %v3848
        %v3850 = vmul.f32 %v3826, 1.442695
        %v3851 = vpow.pop %v3850
        %v3852 = vmul.f32 %v3827, 1.442695
        %v3853 = vpow.pop %v3852
        %v3854 = vmul.f32 %v3828, 1.442695
        %v3855 = vpow.pop %v3854
        %v3856 = vmul.f32 %v3829, 1.442695
        %v3857 = vpow.pop %v3856
        %v3858 = vmul.f32 %v3830, 1.442695
        %v3859 = vpow.pop %v3858
        %v3860 = vmul.f32 %v3831, 1.442695
        %v3861 = vpow.pop %v3860
        %v3862 = vmul.f32 %v3832, 1.442695
        %v3863 = vpow.pop %v3862
        %v3864 = vmul.f32 %v3833, 1.442695
        %v3865 = vpow.pop %v3864
        %v3866 = vsel %vm1301, %v3835, 0.0
        %3867 = vadd.xlane.f32.xlu0 %v3866
        %v3868 = vpop.xlane.xlu0 %3867
        %v3869 = vsel %vm1301, %v3837, 0.0
        %3870 = vadd.xlane.f32.xlu0 %v3869
        %v3871 = vpop.xlane.xlu0 %3870
        %v3872 = vsel %vm1301, %v3839, 0.0
        %3873 = vadd.xlane.f32.xlu0 %v3872
        %v3874 = vpop.xlane.xlu0 %3873
        %v3875 = vsel %vm1301, %v3841, 0.0
        %3876 = vadd.xlane.f32.xlu0 %v3875
        %v3877 = vpop.xlane.xlu0 %3876
        %v3878 = vsel %vm1301, %v3843, 0.0
        %3879 = vadd.xlane.f32.xlu0 %v3878
        %v3880 = vpop.xlane.xlu0 %3879
        %v3881 = vsel %vm1301, %v3845, 0.0
        %3882 = vadd.xlane.f32.xlu0 %v3881
        %v3883 = vpop.xlane.xlu0 %3882
        %v3884 = vsel %vm1301, %v3847, 0.0
        %3885 = vadd.xlane.f32.xlu0 %v3884
        %v3886 = vpop.xlane.xlu0 %3885
        %v3887 = vsel %vm1301, %v3849, 0.0
        %3888 = vadd.xlane.f32.xlu0 %v3887
        %v3889 = vpop.xlane.xlu0 %3888
        %v3890 = vsel %vm1301, %v3851, 0.0
        %3891 = vadd.xlane.f32.xlu0 %v3890
        %v3892 = vpop.xlane.xlu0 %3891
        %v3893 = vsel %vm1301, %v3853, 0.0
        %3894 = vadd.xlane.f32.xlu0 %v3893
        %v3895 = vpop.xlane.xlu0 %3894
        %v3896 = vsel %vm1301, %v3855, 0.0
        %3897 = vadd.xlane.f32.xlu0 %v3896
        %v3898 = vpop.xlane.xlu0 %3897
        %v3899 = vsel %vm1301, %v3857, 0.0
        %3900 = vadd.xlane.f32.xlu0 %v3899
        %v3901 = vpop.xlane.xlu0 %3900
        %v3902 = vsel %vm1301, %v3859, 0.0
        %3903 = vadd.xlane.f32.xlu0 %v3902
        %v3904 = vpop.xlane.xlu0 %3903
        %v3905 = vsel %vm1301, %v3861, 0.0
        %3906 = vadd.xlane.f32.xlu0 %v3905
        %v3907 = vpop.xlane.xlu0 %3906
        %v3908 = vsel %vm1301, %v3863, 0.0
        %3909 = vadd.xlane.f32.xlu0 %v3908
        %v3910 = vpop.xlane.xlu0 %3909
        %v3911 = vsel %vm1301, %v3865, 0.0
        %3912 = vadd.xlane.f32.xlu0 %v3911
        %v3913 = vpop.xlane.xlu0 %3912
        %v3914 = vpack.c.bf16 %v3837, %v3835
        %v3915 = vpack.c.bf16 %v3841, %v3839
        %v3916 = vpack.c.bf16 %v3845, %v3843
        %v3917 = vpack.c.bf16 %v3849, %v3847
        %v3918 = vpack.c.bf16 %v3853, %v3851
        %v3919 = vpack.c.bf16 %v3857, %v3855
        %v3920 = vpack.c.bf16 %v3861, %v3859
        %v3921 = vpack.c.bf16 %v3865, %v3863
        %3922 = vrot.lane.b32.xlu0 %v808, 64
        %v3923 = vpop.permute.xlu0 %3922
        %v3926 = vsel %vm1301, %v3914, 0
        %3928 = vmatprep.subr.bf16.mxu0 0
        %3929 = vmatpush1.bf16.msra.mxu0 %v3923
        %3930 = vmatprep.subr.bf16.mxu0 0
        %3931 = vmatpush1.bf16.msra.mxu0 0
        %3932 = vmatprep.subr.bf16.mxu0 0
        %3933 = vmatpush1.bf16.msra.mxu0 0
        %3934 = vmatprep.subr.bf16.mxu0 0
        %3935 = vmatpush1.bf16.msra.mxu0 0
        %3936 = vmatprep.subr.bf16.mxu0 0
        %3937 = vmatpush1.bf16.msra.mxu0 0
        %3938 = vmatprep.subr.bf16.mxu0 0
        %3939 = vmatpush1.bf16.msra.mxu0 0
        %3940 = vmatprep.subr.bf16.mxu0 0
        %3941 = vmatpush1.bf16.msra.mxu0 0
        %3942 = vmatprep.subr.bf16.mxu0 0
        %3943 = vmatpush1.bf16.msra.mxu0 0
        %3944 = vmatprep.subr.bf16.mxu0 0
        %3945 = vmatpush1.bf16.msra.mxu0 0
        %3946 = vmatprep.subr.bf16.mxu0 0
        %3947 = vmatpush1.bf16.msra.mxu0 0
        %3948 = vmatprep.subr.bf16.mxu0 0
        %3949 = vmatpush1.bf16.msra.mxu0 0
        %3950 = vmatprep.subr.bf16.mxu0 0
        %3951 = vmatpush1.bf16.msra.mxu0 0
        %3952 = vmatprep.subr.bf16.mxu0 0
        %3953 = vmatpush1.bf16.msra.mxu0 0
        %3954 = vmatprep.subr.bf16.mxu0 0
        %3955 = vmatpush1.bf16.msra.mxu0 0
        %3956 = vmatprep.subr.bf16.mxu0 0
        %3957 = vmatpush1.bf16.msra.mxu0 0
        %3958 = vmatprep.subr.bf16.mxu0 0
        %3959 = vmatpush1.bf16.msra.mxu0 0
        %3960 = vmatprep.mubr.bf16.mxu0 0
        %3961 = vmatmul.mubr.bf16.gmra.mrb[0].mxu0 %v3926
        %v3962 = vpop.f32.mrb[0].mxu0
        %v3963 = vadd.f32 0.0, %v3962
        %v3964 = vpop.f32.mrb[0].mxu0
        %v3965 = vpop.f32.mrb[0].mxu0
        %v3966 = vadd.f32 0.0, %v3965
        %v3967 = vpop.f32.mrb[0].mxu0
        %3968 = vdwg.mxu0
        %3969 = vrot.lane.b32.xlu0 %v809, 64
        %v3970 = vpop.permute.xlu0 %3969
        %v3973 = vsel %vm1301, %v3915, 0
        %3975 = vmatprep.subr.bf16.mxu0 0
        %3976 = vmatpush1.bf16.msra.mxu0 %v3970
        %3977 = vmatprep.subr.bf16.mxu0 0
        %3978 = vmatpush1.bf16.msra.mxu0 0
        %3979 = vmatprep.subr.bf16.mxu0 0
        %3980 = vmatpush1.bf16.msra.mxu0 0
        %3981 = vmatprep.subr.bf16.mxu0 0
        %3982 = vmatpush1.bf16.msra.mxu0 0
        %3983 = vmatprep.subr.bf16.mxu0 0
        %3984 = vmatpush1.bf16.msra.mxu0 0
        %3985 = vmatprep.subr.bf16.mxu0 0
        %3986 = vmatpush1.bf16.msra.mxu0 0
        %3987 = vmatprep.subr.bf16.mxu0 0
        %3988 = vmatpush1.bf16.msra.mxu0 0
        %3989 = vmatprep.subr.bf16.mxu0 0
        %3990 = vmatpush1.bf16.msra.mxu0 0
        %3991 = vmatprep.subr.bf16.mxu0 0
        %3992 = vmatpush1.bf16.msra.mxu0 0
        %3993 = vmatprep.subr.bf16.mxu0 0
        %3994 = vmatpush1.bf16.msra.mxu0 0
        %3995 = vmatprep.subr.bf16.mxu0 0
        %3996 = vmatpush1.bf16.msra.mxu0 0
        %3997 = vmatprep.subr.bf16.mxu0 0
        %3998 = vmatpush1.bf16.msra.mxu0 0
        %3999 = vmatprep.subr.bf16.mxu0 0
        %4000 = vmatpush1.bf16.msra.mxu0 0
        %4001 = vmatprep.subr.bf16.mxu0 0
        %4002 = vmatpush1.bf16.msra.mxu0 0
        %4003 = vmatprep.subr.bf16.mxu0 0
        %4004 = vmatpush1.bf16.msra.mxu0 0
        %4005 = vmatprep.subr.bf16.mxu0 0
        %4006 = vmatpush1.bf16.msra.mxu0 0
        %4007 = vmatprep.mubr.bf16.mxu0 0
        %4008 = vmatmul.mubr.bf16.gmra.mrb[0].mxu0 %v3973
        %v4009 = vpop.f32.mrb[0].mxu0
        %v4010 = vadd.f32 0.0, %v4009
        %v4011 = vpop.f32.mrb[0].mxu0
        %v4012 = vpop.f32.mrb[0].mxu0
        %v4013 = vadd.f32 0.0, %v4012
        %v4014 = vpop.f32.mrb[0].mxu0
        %4015 = vdwg.mxu0
        %4016 = vrot.lane.b32.xlu0 %v810, 64
        %v4017 = vpop.permute.xlu0 %4016
        %v4020 = vsel %vm1301, %v3916, 0
        %4022 = vmatprep.subr.bf16.mxu0 0
        %4023 = vmatpush1.bf16.msra.mxu0 %v4017
        %4024 = vmatprep.subr.bf16.mxu0 0
        %4025 = vmatpush1.bf16.msra.mxu0 0
        %4026 = vmatprep.subr.bf16.mxu0 0
        %4027 = vmatpush1.bf16.msra.mxu0 0
        %4028 = vmatprep.subr.bf16.mxu0 0
        %4029 = vmatpush1.bf16.msra.mxu0 0
        %4030 = vmatprep.subr.bf16.mxu0 0
        %4031 = vmatpush1.bf16.msra.mxu0 0
        %4032 = vmatprep.subr.bf16.mxu0 0
        %4033 = vmatpush1.bf16.msra.mxu0 0
        %4034 = vmatprep.subr.bf16.mxu0 0
        %4035 = vmatpush1.bf16.msra.mxu0 0
        %4036 = vmatprep.subr.bf16.mxu0 0
        %4037 = vmatpush1.bf16.msra.mxu0 0
        %4038 = vmatprep.subr.bf16.mxu0 0
        %4039 = vmatpush1.bf16.msra.mxu0 0
        %4040 = vmatprep.subr.bf16.mxu0 0
        %4041 = vmatpush1.bf16.msra.mxu0 0
        %4042 = vmatprep.subr.bf16.mxu0 0
        %4043 = vmatpush1.bf16.msra.mxu0 0
        %4044 = vmatprep.subr.bf16.mxu0 0
        %4045 = vmatpush1.bf16.msra.mxu0 0
        %4046 = vmatprep.subr.bf16.mxu0 0
        %4047 = vmatpush1.bf16.msra.mxu0 0
        %4048 = vmatprep.subr.bf16.mxu0 0
        %4049 = vmatpush1.bf16.msra.mxu0 0
        %4050 = vmatprep.subr.bf16.mxu0 0
        %4051 = vmatpush1.bf16.msra.mxu0 0
        %4052 = vmatprep.subr.bf16.mxu0 0
        %4053 = vmatpush1.bf16.msra.mxu0 0
        %4054 = vmatprep.mubr.bf16.mxu0 0
        %4055 = vmatmul.mubr.bf16.gmra.mrb[0].mxu0 %v4020
        %v4056 = vpop.f32.mrb[0].mxu0
        %v4057 = vadd.f32 0.0, %v4056
        %v4058 = vpop.f32.mrb[0].mxu0
        %v4059 = vpop.f32.mrb[0].mxu0
        %v4060 = vadd.f32 0.0, %v4059
        %v4061 = vpop.f32.mrb[0].mxu0
        %4062 = vdwg.mxu0
        %4063 = vrot.lane.b32.xlu0 %v811, 64
        %v4064 = vpop.permute.xlu0 %4063
        %v4067 = vsel %vm1301, %v3917, 0
        %4069 = vmatprep.subr.bf16.mxu0 0
        %4070 = vmatpush1.bf16.msra.mxu0 %v4064
        %4071 = vmatprep.subr.bf16.mxu0 0
        %4072 = vmatpush1.bf16.msra.mxu0 0
        %4073 = vmatprep.subr.bf16.mxu0 0
        %4074 = vmatpush1.bf16.msra.mxu0 0
        %4075 = vmatprep.subr.bf16.mxu0 0
        %4076 = vmatpush1.bf16.msra.mxu0 0
        %4077 = vmatprep.subr.bf16.mxu0 0
        %4078 = vmatpush1.bf16.msra.mxu0 0
        %4079 = vmatprep.subr.bf16.mxu0 0
        %4080 = vmatpush1.bf16.msra.mxu0 0
        %4081 = vmatprep.subr.bf16.mxu0 0
        %4082 = vmatpush1.bf16.msra.mxu0 0
        %4083 = vmatprep.subr.bf16.mxu0 0
        %4084 = vmatpush1.bf16.msra.mxu0 0
        %4085 = vmatprep.subr.bf16.mxu0 0
        %4086 = vmatpush1.bf16.msra.mxu0 0
        %4087 = vmatprep.subr.bf16.mxu0 0
        %4088 = vmatpush1.bf16.msra.mxu0 0
        %4089 = vmatprep.subr.bf16.mxu0 0
        %4090 = vmatpush1.bf16.msra.mxu0 0
        %4091 = vmatprep.subr.bf16.mxu0 0
        %4092 = vmatpush1.bf16.msra.mxu0 0
        %4093 = vmatprep.subr.bf16.mxu0 0
        %4094 = vmatpush1.bf16.msra.mxu0 0
        %4095 = vmatprep.subr.bf16.mxu0 0
        %4096 = vmatpush1.bf16.msra.mxu0 0
        %4097 = vmatprep.subr.bf16.mxu0 0
        %4098 = vmatpush1.bf16.msra.mxu0 0
        %4099 = vmatprep.subr.bf16.mxu0 0
        %4100 = vmatpush1.bf16.msra.mxu0 0
        %4101 = vmatprep.mubr.bf16.mxu0 0
        %4102 = vmatmul.mubr.bf16.gmra.mrb[0].mxu0 %v4067
        %v4103 = vpop.f32.mrb[0].mxu0
        %v4104 = vadd.f32 0.0, %v4103
        %v4105 = vpop.f32.mrb[0].mxu0
        %v4106 = vpop.f32.mrb[0].mxu0
        %v4107 = vadd.f32 0.0, %v4106
        %v4108 = vpop.f32.mrb[0].mxu0
        %4109 = vdwg.mxu0
        %4110 = vrot.lane.b32.xlu0 %v812, 64
        %v4111 = vpop.permute.xlu0 %4110
        %v4114 = vsel %vm1301, %v3918, 0
        %4116 = vmatprep.subr.bf16.mxu0 0
        %4117 = vmatpush1.bf16.msra.mxu0 %v4111
        %4118 = vmatprep.subr.bf16.mxu0 0
        %4119 = vmatpush1.bf16.msra.mxu0 0
        %4120 = vmatprep.subr.bf16.mxu0 0
        %4121 = vmatpush1.bf16.msra.mxu0 0
        %4122 = vmatprep.subr.bf16.mxu0 0
        %4123 = vmatpush1.bf16.msra.mxu0 0
        %4124 = vmatprep.subr.bf16.mxu0 0
        %4125 = vmatpush1.bf16.msra.mxu0 0
        %4126 = vmatprep.subr.bf16.mxu0 0
        %4127 = vmatpush1.bf16.msra.mxu0 0
        %4128 = vmatprep.subr.bf16.mxu0 0
        %4129 = vmatpush1.bf16.msra.mxu0 0
        %4130 = vmatprep.subr.bf16.mxu0 0
        %4131 = vmatpush1.bf16.msra.mxu0 0
        %4132 = vmatprep.subr.bf16.mxu0 0
        %4133 = vmatpush1.bf16.msra.mxu0 0
        %4134 = vmatprep.subr.bf16.mxu0 0
        %4135 = vmatpush1.bf16.msra.mxu0 0
        %4136 = vmatprep.subr.bf16.mxu0 0
        %4137 = vmatpush1.bf16.msra.mxu0 0
        %4138 = vmatprep.subr.bf16.mxu0 0
        %4139 = vmatpush1.bf16.msra.mxu0 0
        %4140 = vmatprep.subr.bf16.mxu0 0
        %4141 = vmatpush1.bf16.msra.mxu0 0
        %4142 = vmatprep.subr.bf16.mxu0 0
        %4143 = vmatpush1.bf16.msra.mxu0 0
        %4144 = vmatprep.subr.bf16.mxu0 0
        %4145 = vmatpush1.bf16.msra.mxu0 0
        %4146 = vmatprep.subr.bf16.mxu0 0
        %4147 = vmatpush1.bf16.msra.mxu0 0
        %4148 = vmatprep.mubr.bf16.mxu0 0
        %4149 = vmatmul.mubr.bf16.gmra.mrb[0].mxu0 %v4114
        %v4150 = vpop.f32.mrb[0].mxu0
        %v4151 = vadd.f32 0.0, %v4150
        %v4152 = vpop.f32.mrb[0].mxu0
        %v4153 = vpop.f32.mrb[0].mxu0
        %v4154 = vadd.f32 0.0, %v4153
        %v4155 = vpop.f32.mrb[0].mxu0
        %4156 = vdwg.mxu0
        %4157 = vrot.lane.b32.xlu0 %v813, 64
        %v4158 = vpop.permute.xlu0 %4157
        %v4161 = vsel %vm1301, %v3919, 0
        %4163 = vmatprep.subr.bf16.mxu0 0
        %4164 = vmatpush1.bf16.msra.mxu0 %v4158
        %4165 = vmatprep.subr.bf16.mxu0 0
        %4166 = vmatpush1.bf16.msra.mxu0 0
        %4167 = vmatprep.subr.bf16.mxu0 0
        %4168 = vmatpush1.bf16.msra.mxu0 0
        %4169 = vmatprep.subr.bf16.mxu0 0
        %4170 = vmatpush1.bf16.msra.mxu0 0
        %4171 = vmatprep.subr.bf16.mxu0 0
        %4172 = vmatpush1.bf16.msra.mxu0 0
        %4173 = vmatprep.subr.bf16.mxu0 0
        %4174 = vmatpush1.bf16.msra.mxu0 0
        %4175 = vmatprep.subr.bf16.mxu0 0
        %4176 = vmatpush1.bf16.msra.mxu0 0
        %4177 = vmatprep.subr.bf16.mxu0 0
        %4178 = vmatpush1.bf16.msra.mxu0 0
        %4179 = vmatprep.subr.bf16.mxu0 0
        %4180 = vmatpush1.bf16.msra.mxu0 0
        %4181 = vmatprep.subr.bf16.mxu0 0
        %4182 = vmatpush1.bf16.msra.mxu0 0
        %4183 = vmatprep.subr.bf16.mxu0 0
        %4184 = vmatpush1.bf16.msra.mxu0 0
        %4185 = vmatprep.subr.bf16.mxu0 0
        %4186 = vmatpush1.bf16.msra.mxu0 0
        %4187 = vmatprep.subr.bf16.mxu0 0
        %4188 = vmatpush1.bf16.msra.mxu0 0
        %4189 = vmatprep.subr.bf16.mxu0 0
        %4190 = vmatpush1.bf16.msra.mxu0 0
        %4191 = vmatprep.subr.bf16.mxu0 0
        %4192 = vmatpush1.bf16.msra.mxu0 0
        %4193 = vmatprep.subr.bf16.mxu0 0
        %4194 = vmatpush1.bf16.msra.mxu0 0
        %4195 = vmatprep.mubr.bf16.mxu0 0
        %4196 = vmatmul.mubr.bf16.gmra.mrb[0].mxu0 %v4161
        %v4197 = vpop.f32.mrb[0].mxu0
        %v4198 = vadd.f32 0.0, %v4197
        %v4199 = vpop.f32.mrb[0].mxu0
        %v4200 = vpop.f32.mrb[0].mxu0
        %v4201 = vadd.f32 0.0, %v4200
        %v4202 = vpop.f32.mrb[0].mxu0
        %4203 = vdwg.mxu0
        %4204 = vrot.lane.b32.xlu0 %v814, 64
        %v4205 = vpop.permute.xlu0 %4204
        %v4208 = vsel %vm1301, %v3920, 0
        %4210 = vmatprep.subr.bf16.mxu0 0
        %4211 = vmatpush1.bf16.msra.mxu0 %v4205
        %4212 = vmatprep.subr.bf16.mxu0 0
        %4213 = vmatpush1.bf16.msra.mxu0 0
        %4214 = vmatprep.subr.bf16.mxu0 0
        %4215 = vmatpush1.bf16.msra.mxu0 0
        %4216 = vmatprep.subr.bf16.mxu0 0
        %4217 = vmatpush1.bf16.msra.mxu0 0
        %4218 = vmatprep.subr.bf16.mxu0 0
        %4219 = vmatpush1.bf16.msra.mxu0 0
        %4220 = vmatprep.subr.bf16.mxu0 0
        %4221 = vmatpush1.bf16.msra.mxu0 0
        %4222 = vmatprep.subr.bf16.mxu0 0
        %4223 = vmatpush1.bf16.msra.mxu0 0
        %4224 = vmatprep.subr.bf16.mxu0 0
        %4225 = vmatpush1.bf16.msra.mxu0 0
        %4226 = vmatprep.subr.bf16.mxu0 0
        %4227 = vmatpush1.bf16.msra.mxu0 0
        %4228 = vmatprep.subr.bf16.mxu0 0
        %4229 = vmatpush1.bf16.msra.mxu0 0
        %4230 = vmatprep.subr.bf16.mxu0 0
        %4231 = vmatpush1.bf16.msra.mxu0 0
        %4232 = vmatprep.subr.bf16.mxu0 0
        %4233 = vmatpush1.bf16.msra.mxu0 0
        %4234 = vmatprep.subr.bf16.mxu0 0
        %4235 = vmatpush1.bf16.msra.mxu0 0
        %4236 = vmatprep.subr.bf16.mxu0 0
        %4237 = vmatpush1.bf16.msra.mxu0 0
        %4238 = vmatprep.subr.bf16.mxu0 0
        %4239 = vmatpush1.bf16.msra.mxu0 0
        %4240 = vmatprep.subr.bf16.mxu0 0
        %4241 = vmatpush1.bf16.msra.mxu0 0
        %4242 = vmatprep.mubr.bf16.mxu0 0
        %4243 = vmatmul.mubr.bf16.gmra.mrb[0].mxu0 %v4208
        %v4244 = vpop.f32.mrb[0].mxu0
        %v4245 = vadd.f32 0.0, %v4244
        %v4246 = vpop.f32.mrb[0].mxu0
        %v4247 = vpop.f32.mrb[0].mxu0
        %v4248 = vadd.f32 0.0, %v4247
        %v4249 = vpop.f32.mrb[0].mxu0
        %4250 = vdwg.mxu0
        %4251 = vrot.lane.b32.xlu0 %v815, 64
        %v4252 = vpop.permute.xlu0 %4251
        %v4255 = vsel %vm1301, %v3921, 0
        %4257 = vmatprep.subr.bf16.mxu0 0
        %4258 = vmatpush1.bf16.msra.mxu0 %v4252
        %4259 = vmatprep.subr.bf16.mxu0 0
        %4260 = vmatpush1.bf16.msra.mxu0 0
        %4261 = vmatprep.subr.bf16.mxu0 0
        %4262 = vmatpush1.bf16.msra.mxu0 0
        %4263 = vmatprep.subr.bf16.mxu0 0
        %4264 = vmatpush1.bf16.msra.mxu0 0
        %4265 = vmatprep.subr.bf16.mxu0 0
        %4266 = vmatpush1.bf16.msra.mxu0 0
        %4267 = vmatprep.subr.bf16.mxu0 0
        %4268 = vmatpush1.bf16.msra.mxu0 0
        %4269 = vmatprep.subr.bf16.mxu0 0
        %4270 = vmatpush1.bf16.msra.mxu0 0
        %4271 = vmatprep.subr.bf16.mxu0 0
        %4272 = vmatpush1.bf16.msra.mxu0 0
        %4273 = vmatprep.subr.bf16.mxu0 0
        %4274 = vmatpush1.bf16.msra.mxu0 0
        %4275 = vmatprep.subr.bf16.mxu0 0
        %4276 = vmatpush1.bf16.msra.mxu0 0
        %4277 = vmatprep.subr.bf16.mxu0 0
        %4278 = vmatpush1.bf16.msra.mxu0 0
        %4279 = vmatprep.subr.bf16.mxu0 0
        %4280 = vmatpush1.bf16.msra.mxu0 0
        %4281 = vmatprep.subr.bf16.mxu0 0
        %4282 = vmatpush1.bf16.msra.mxu0 0
        %4283 = vmatprep.subr.bf16.mxu0 0
        %4284 = vmatpush1.bf16.msra.mxu0 0
        %4285 = vmatprep.subr.bf16.mxu0 0
        %4286 = vmatpush1.bf16.msra.mxu0 0
        %4287 = vmatprep.subr.bf16.mxu0 0
        %4288 = vmatpush1.bf16.msra.mxu0 0
        %4289 = vmatprep.mubr.bf16.mxu0 0
        %4290 = vmatmul.mubr.bf16.gmra.mrb[0].mxu0 %v4255
        %v4291 = vpop.f32.mrb[0].mxu0
        %v4292 = vadd.f32 0.0, %v4291
        %v4293 = vpop.f32.mrb[0].mxu0
        %v4294 = vpop.f32.mrb[0].mxu0
        %v4295 = vadd.f32 0.0, %v4294
        %v4296 = vpop.f32.mrb[0].mxu0
        %4297 = vdwg.mxu0
        %v4298 = vrcp.pop %v3868
        %v4299 = vrcp.pop %v3871
        %v4300 = vrcp.pop %v3874
        %v4301 = vrcp.pop %v3877
        %v4302 = vrcp.pop %v3880
        %v4303 = vrcp.pop %v3883
        %v4304 = vrcp.pop %v3886
        %v4305 = vrcp.pop %v3889
        %v4306 = vrcp.pop %v3892
        %v4307 = vrcp.pop %v3895
        %v4308 = vrcp.pop %v3898
        %v4309 = vrcp.pop %v3901
        %v4310 = vrcp.pop %v3904
        %v4311 = vrcp.pop %v3907
        %v4312 = vrcp.pop %v3910
        %v4313 = vrcp.pop %v3913
        %v4314 = vmul.f32 %v3963, %v4298
        %v4315 = vmul.f32 %v3966, %v4299
        %v4316 = vmul.f32 %v4010, %v4300
        %v4317 = vmul.f32 %v4013, %v4301
        %v4318 = vmul.f32 %v4057, %v4302
        %v4319 = vmul.f32 %v4060, %v4303
        %v4320 = vmul.f32 %v4104, %v4304
        %v4321 = vmul.f32 %v4107, %v4305
        %v4322 = vmul.f32 %v4151, %v4306
        %v4323 = vmul.f32 %v4154, %v4307
        %v4324 = vmul.f32 %v4198, %v4308
        %v4325 = vmul.f32 %v4201, %v4309
        %v4326 = vmul.f32 %v4245, %v4310
        %v4327 = vmul.f32 %v4248, %v4311
        %v4328 = vmul.f32 %v4292, %v4312
        %v4329 = vmul.f32 %v4295, %v4313
        %4330 = vrot.lane.b32.xlu0 %v1903, 64
        %v4331 = vpop.permute.xlu0 %4330
        %4332 = vrot.lane.b32.xlu0 %v1905, 64
        %v4333 = vpop.permute.xlu0 %4332
        %4334 = vrot.lane.b32.xlu0 %v1907, 64
        %v4335 = vpop.permute.xlu0 %4334
        %4336 = vrot.lane.b32.xlu0 %v1909, 64
        %v4337 = vpop.permute.xlu0 %4336
        %4338 = vrot.lane.b32.xlu0 %v1911, 64
        %v4339 = vpop.permute.xlu0 %4338
        %4340 = vrot.lane.b32.xlu0 %v1913, 64
        %v4341 = vpop.permute.xlu0 %4340
        %4342 = vrot.lane.b32.xlu0 %v1915, 64
        %v4343 = vpop.permute.xlu0 %4342
        %4344 = vrot.lane.b32.xlu0 %v1917, 64
        %v4345 = vpop.permute.xlu0 %4344
        %4346 = vrot.lane.b32.xlu0 %v1919, 64
        %v4347 = vpop.permute.xlu0 %4346
        %4348 = vrot.lane.b32.xlu0 %v1921, 64
        %v4349 = vpop.permute.xlu0 %4348
        %4350 = vrot.lane.b32.xlu0 %v1923, 64
        %v4351 = vpop.permute.xlu0 %4350
        %4352 = vrot.lane.b32.xlu0 %v1925, 64
        %v4353 = vpop.permute.xlu0 %4352
        %4354 = vrot.lane.b32.xlu0 %v1927, 64
        %v4355 = vpop.permute.xlu0 %4354
        %4356 = vrot.lane.b32.xlu0 %v1929, 64
        %v4357 = vpop.permute.xlu0 %4356
        %4358 = vrot.lane.b32.xlu0 %v1931, 64
        %v4359 = vpop.permute.xlu0 %4358
        %4360 = vrot.lane.b32.xlu0 %v1933, 64
        %v4361 = vpop.permute.xlu0 %4360
        %v4378 = vmul.f32 %v4314, %v4331
        %v4379 = vmul.f32 %v4315, %v4333
        %v4380 = vmul.f32 %v4316, %v4335
        %v4381 = vmul.f32 %v4317, %v4337
        %v4382 = vmul.f32 %v4318, %v4339
        %v4383 = vmul.f32 %v4319, %v4341
        %v4384 = vmul.f32 %v4320, %v4343
        %v4385 = vmul.f32 %v4321, %v4345
        %v4386 = vmul.f32 %v4322, %v4347
        %v4387 = vmul.f32 %v4323, %v4349
        %v4388 = vmul.f32 %v4324, %v4351
        %v4389 = vmul.f32 %v4325, %v4353
        %v4390 = vmul.f32 %v4326, %v4355
        %v4391 = vmul.f32 %v4327, %v4357
        %v4392 = vmul.f32 %v4328, %v4359
        %v4393 = vmul.f32 %v4329, %v4361
        %v4394 = vpack.c.bf16 %v4379, %v4378
        %v4395 = vpack.c.bf16 %v4381, %v4380
        %v4396 = vpack.c.bf16 %v4383, %v4382
        %v4397 = vpack.c.bf16 %v4385, %v4384
        %v4398 = vpack.c.bf16 %v4387, %v4386
        %v4399 = vpack.c.bf16 %v4389, %v4388
        %v4400 = vpack.c.bf16 %v4391, %v4390
        %v4401 = vpack.c.bf16 %v4393, %v4392
        %v4406 = vunpack.c.l.b16 %v864
        %v4407 = vunpack.c.l.b16 %v865
        %v4408 = vunpack.c.l.b16 %v866
        %v4409 = vunpack.c.l.b16 %v867
        %v4410 = vpack.c.b16 %v4407, %v4406
        %v4411 = vpack.c.b16 %v4409, %v4408
        %v4415 = vsel %vm876, %v4394, 0
        %v4418 = vsel %vm876, %v4395, 0
        %v4421 = vsel %vm876, %v4396, 0
        %v4424 = vsel %vm876, %v4397, 0
        %v4427 = vsel %vm876, %v4398, 0
        %v4430 = vsel %vm876, %v4399, 0
        %v4433 = vsel %vm876, %v4400, 0
        %v4436 = vsel %vm876, %v4401, 0
        %4438 = vmatprep.subr.bf16.mxu0 0
        %4439 = vmatpush1.bf16.msra.mxu0 %v4410
        %4440 = vmatprep.subr.bf16.mxu0 0
        %4441 = vmatpush1.bf16.msra.mxu0 %v4411
        %4442 = vmatprep.subr.bf16.mxu0 0
        %4443 = vmatpush1.bf16.msra.mxu0 0
        %4444 = vmatprep.subr.bf16.mxu0 0
        %4445 = vmatpush1.bf16.msra.mxu0 0
        %4446 = vmatprep.subr.bf16.mxu0 0
        %4447 = vmatpush1.bf16.msra.mxu0 0
        %4448 = vmatprep.subr.bf16.mxu0 0
        %4449 = vmatpush1.bf16.msra.mxu0 0
        %4450 = vmatprep.subr.bf16.mxu0 0
        %4451 = vmatpush1.bf16.msra.mxu0 0
        %4452 = vmatprep.subr.bf16.mxu0 0
        %4453 = vmatpush1.bf16.msra.mxu0 0
        %4454 = vmatprep.subr.bf16.mxu0 0
        %4455 = vmatpush1.bf16.msra.mxu0 0
        %4456 = vmatprep.subr.bf16.mxu0 0
        %4457 = vmatpush1.bf16.msra.mxu0 0
        %4458 = vmatprep.subr.bf16.mxu0 0
        %4459 = vmatpush1.bf16.msra.mxu0 0
        %4460 = vmatprep.subr.bf16.mxu0 0
        %4461 = vmatpush1.bf16.msra.mxu0 0
        %4462 = vmatprep.subr.bf16.mxu0 0
        %4463 = vmatpush1.bf16.msra.mxu0 0
        %4464 = vmatprep.subr.bf16.mxu0 0
        %4465 = vmatpush1.bf16.msra.mxu0 0
        %4466 = vmatprep.subr.bf16.mxu0 0
        %4467 = vmatpush1.bf16.msra.mxu0 0
        %4468 = vmatprep.subr.bf16.mxu0 0
        %4469 = vmatpush1.bf16.msra.mxu0 0
        %4470 = vmatprep.mubr.bf16.mxu0 0
        %4471 = vmatmul.mubr.bf16.gmra.mrb[0].mxu0 %v4415
        %v4472 = vpop.f32.mrb[0].mxu0
        %v4473 = vadd.f32 0.0, %v4472
        %v4474 = vpop.f32.mrb[0].mxu0
        %v4475 = vpop.f32.mrb[0].mxu0
        %v4476 = vadd.f32 0.0, %v4475
        %v4477 = vpop.f32.mrb[0].mxu0
        %4478 = vmatprep.mubr.bf16.mxu0 0
        %4479 = vmatmul.mubr.bf16.gmra.mrb[0].mxu0 %v4418
        %v4480 = vpop.f32.mrb[0].mxu0
        %v4481 = vadd.f32 0.0, %v4480
        %v4482 = vpop.f32.mrb[0].mxu0
        %v4483 = vpop.f32.mrb[0].mxu0
        %v4484 = vadd.f32 0.0, %v4483
        %v4485 = vpop.f32.mrb[0].mxu0
        %4486 = vmatprep.mubr.bf16.mxu0 0
        %4487 = vmatmul.mubr.bf16.gmra.mrb[0].mxu0 %v4421
        %v4488 = vpop.f32.mrb[0].mxu0
        %v4489 = vadd.f32 0.0, %v4488
        %v4490 = vpop.f32.mrb[0].mxu0
        %v4491 = vpop.f32.mrb[0].mxu0
        %v4492 = vadd.f32 0.0, %v4491
        %v4493 = vpop.f32.mrb[0].mxu0
        %4494 = vmatprep.mubr.bf16.mxu0 0
        %4495 = vmatmul.mubr.bf16.gmra.mrb[0].mxu0 %v4424
        %v4496 = vpop.f32.mrb[0].mxu0
        %v4497 = vadd.f32 0.0, %v4496
        %v4498 = vpop.f32.mrb[0].mxu0
        %v4499 = vpop.f32.mrb[0].mxu0
        %v4500 = vadd.f32 0.0, %v4499
        %v4501 = vpop.f32.mrb[0].mxu0
        %4502 = vmatprep.mubr.bf16.mxu0 0
        %4503 = vmatmul.mubr.bf16.gmra.mrb[0].mxu0 %v4427
        %v4504 = vpop.f32.mrb[0].mxu0
        %v4505 = vadd.f32 0.0, %v4504
        %v4506 = vpop.f32.mrb[0].mxu0
        %v4507 = vpop.f32.mrb[0].mxu0
        %v4508 = vadd.f32 0.0, %v4507
        %v4509 = vpop.f32.mrb[0].mxu0
        %4510 = vmatprep.mubr.bf16.mxu0 0
        %4511 = vmatmul.mubr.bf16.gmra.mrb[0].mxu0 %v4430
        %v4512 = vpop.f32.mrb[0].mxu0
        %v4513 = vadd.f32 0.0, %v4512
        %v4514 = vpop.f32.mrb[0].mxu0
        %v4515 = vpop.f32.mrb[0].mxu0
        %v4516 = vadd.f32 0.0, %v4515
        %v4517 = vpop.f32.mrb[0].mxu0
        %4518 = vmatprep.mubr.bf16.mxu0 0
        %4519 = vmatmul.mubr.bf16.gmra.mrb[0].mxu0 %v4433
        %v4520 = vpop.f32.mrb[0].mxu0
        %v4521 = vadd.f32 0.0, %v4520
        %v4522 = vpop.f32.mrb[0].mxu0
        %v4523 = vpop.f32.mrb[0].mxu0
        %v4524 = vadd.f32 0.0, %v4523
        %v4525 = vpop.f32.mrb[0].mxu0
        %4526 = vmatprep.mubr.bf16.mxu0 0
        %4527 = vmatmul.mubr.bf16.gmra.mrb[0].mxu0 %v4436
        %v4528 = vpop.f32.mrb[0].mxu0
        %v4529 = vadd.f32 0.0, %v4528
        %v4530 = vpop.f32.mrb[0].mxu0
        %v4531 = vpop.f32.mrb[0].mxu0
        %v4532 = vadd.f32 0.0, %v4531
        %v4533 = vpop.f32.mrb[0].mxu0
        %4534 = vdwg.mxu0
        %v4535 = vadd.f32 %v3279, %v4473
        %v4536 = vadd.f32 %v3282, %v4476
        %v4537 = vadd.f32 %v3287, %v4481
        %v4538 = vadd.f32 %v3290, %v4484
        %v4539 = vadd.f32 %v3295, %v4489
        %v4540 = vadd.f32 %v3298, %v4492
        %v4541 = vadd.f32 %v3303, %v4497
        %v4542 = vadd.f32 %v3306, %v4500
        %v4543 = vadd.f32 %v3311, %v4505
        %v4544 = vadd.f32 %v3314, %v4508
        %v4545 = vadd.f32 %v3319, %v4513
        %v4546 = vadd.f32 %v3322, %v4516
        %v4547 = vadd.f32 %v3327, %v4521
        %v4548 = vadd.f32 %v3330, %v4524
        %v4549 = vadd.f32 %v3335, %v4529
        %v4550 = vadd.f32 %v3338, %v4532
        %s4551 = scalar_lea.vmem [#allocation7], 24
        %v4552 = vld [vmem:[%s4551] sm:$0xf]
        %v4553 = vld [vmem:[%s4551 + $0x4] sm:$0xf]
        %v4554 = vunpack.c.l.bf16 %v4552
        %v4555 = vunpack.c.l.bf16 %v4553
        %4556 = vrot.lane.b32.xlu0 %v792, 32
        %v4557 = vpop.permute.xlu0 %4556
        %4558 = vrot.lane.b32.xlu0 %v800, 32
        %v4559 = vpop.permute.xlu0 %4558
        %v4561 = vsel %vm876, %v4557, 0
        %v4564 = vsel %vm876, %v4559, 0
        %4566 = vmatprep.subr.bf16.mxu0 0
        %4567 = vmatpush1.bf16.xpose.msra.mxu0 %v4564
        %4568 = vmatprep.subr.bf16.mxu0 0
        %4569 = vmatpush1.bf16.xpose.msra.mxu0 0
        %4570 = vmatprep.subr.bf16.mxu0 0
        %4571 = vmatpush1.bf16.xpose.msra.mxu0 0
        %4572 = vmatprep.subr.bf16.mxu0 0
        %4573 = vmatpush1.bf16.xpose.msra.mxu0 0
        %4574 = vmatprep.subr.bf16.mxu0 0
        %4575 = vmatpush1.bf16.xpose.msra.mxu0 0
        %4576 = vmatprep.subr.bf16.mxu0 0
        %4577 = vmatpush1.bf16.xpose.msra.mxu0 0
        %4578 = vmatprep.subr.bf16.mxu0 0
        %4579 = vmatpush1.bf16.xpose.msra.mxu0 0
        %4580 = vmatprep.subr.bf16.mxu0 0
        %4581 = vmatpush1.bf16.xpose.msra.mxu0 0
        %4582 = vmatprep.subr.bf16.mxu0 0
        %4583 = vmatpush1.bf16.xpose.msra.mxu0 0
        %4584 = vmatprep.subr.bf16.mxu0 0
        %4585 = vmatpush1.bf16.xpose.msra.mxu0 0
        %4586 = vmatprep.subr.bf16.mxu0 0
        %4587 = vmatpush1.bf16.xpose.msra.mxu0 0
        %4588 = vmatprep.subr.bf16.mxu0 0
        %4589 = vmatpush1.bf16.xpose.msra.mxu0 0
        %4590 = vmatprep.subr.bf16.mxu0 0
        %4591 = vmatpush1.bf16.xpose.msra.mxu0 0
        %4592 = vmatprep.subr.bf16.mxu0 0
        %4593 = vmatpush1.bf16.xpose.msra.mxu0 0
        %4594 = vmatprep.subr.bf16.mxu0 0
        %4595 = vmatpush1.bf16.xpose.msra.mxu0 0
        %4596 = vmatprep.subr.bf16.mxu0 0
        %4597 = vmatpush1.bf16.xpose.msra.mxu0 0
        %4598 = vmatprep.mubr.bf16.mxu0 0
        %4599 = vmatmul.mubr.bf16.gmra.mrb[0].mxu0 %v4561
        %v4600 = vpop.f32.mrb[0].mxu0
        %v4601 = vadd.f32 %v4554, %v4600
        %v4602 = vpop.f32.mrb[0].mxu0
        %v4603 = vpop.f32.mrb[0].mxu0
        %v4604 = vadd.f32 %v4555, %v4603
        %v4605 = vpop.f32.mrb[0].mxu0
        %4606 = vdwg.mxu0
        %4607 = vrot.lane.b32.xlu0 %v793, 32
        %v4608 = vpop.permute.xlu0 %4607
        %4609 = vrot.lane.b32.xlu0 %v801, 32
        %v4610 = vpop.permute.xlu0 %4609
        %v4612 = vsel %vm876, %v4608, 0
        %v4615 = vsel %vm876, %v4610, 0
        %4617 = vmatprep.subr.bf16.mxu0 0
        %4618 = vmatpush1.bf16.xpose.msra.mxu0 %v4615
        %4619 = vmatprep.subr.bf16.mxu0 0
        %4620 = vmatpush1.bf16.xpose.msra.mxu0 0
        %4621 = vmatprep.subr.bf16.mxu0 0
        %4622 = vmatpush1.bf16.xpose.msra.mxu0 0
        %4623 = vmatprep.subr.bf16.mxu0 0
        %4624 = vmatpush1.bf16.xpose.msra.mxu0 0
        %4625 = vmatprep.subr.bf16.mxu0 0
        %4626 = vmatpush1.bf16.xpose.msra.mxu0 0
        %4627 = vmatprep.subr.bf16.mxu0 0
        %4628 = vmatpush1.bf16.xpose.msra.mxu0 0
        %4629 = vmatprep.subr.bf16.mxu0 0
        %4630 = vmatpush1.bf16.xpose.msra.mxu0 0
        %4631 = vmatprep.subr.bf16.mxu0 0
        %4632 = vmatpush1.bf16.xpose.msra.mxu0 0
        %4633 = vmatprep.subr.bf16.mxu0 0
        %4634 = vmatpush1.bf16.xpose.msra.mxu0 0
        %4635 = vmatprep.subr.bf16.mxu0 0
        %4636 = vmatpush1.bf16.xpose.msra.mxu0 0
        %4637 = vmatprep.subr.bf16.mxu0 0
        %4638 = vmatpush1.bf16.xpose.msra.mxu0 0
        %4639 = vmatprep.subr.bf16.mxu0 0
        %4640 = vmatpush1.bf16.xpose.msra.mxu0 0
        %4641 = vmatprep.subr.bf16.mxu0 0
        %4642 = vmatpush1.bf16.xpose.msra.mxu0 0
        %4643 = vmatprep.subr.bf16.mxu0 0
        %4644 = vmatpush1.bf16.xpose.msra.mxu0 0
        %4645 = vmatprep.subr.bf16.mxu0 0
        %4646 = vmatpush1.bf16.xpose.msra.mxu0 0
        %4647 = vmatprep.subr.bf16.mxu0 0
        %4648 = vmatpush1.bf16.xpose.msra.mxu0 0
        %4649 = vmatprep.mubr.bf16.mxu0 0
        %4650 = vmatmul.mubr.bf16.gmra.mrb[0].mxu0 %v4612
        %v4651 = vpop.f32.mrb[0].mxu0
        %v4652 = vadd.f32 %v4554, %v4651
        %v4653 = vpop.f32.mrb[0].mxu0
        %v4654 = vpop.f32.mrb[0].mxu0
        %v4655 = vadd.f32 %v4555, %v4654
        %v4656 = vpop.f32.mrb[0].mxu0
        %4657 = vdwg.mxu0
        %4658 = vrot.lane.b32.xlu0 %v794, 32
        %v4659 = vpop.permute.xlu0 %4658
        %4660 = vrot.lane.b32.xlu0 %v802, 32
        %v4661 = vpop.permute.xlu0 %4660
        %v4663 = vsel %vm876, %v4659, 0
        %v4666 = vsel %vm876, %v4661, 0
        %4668 = vmatprep.subr.bf16.mxu0 0
        %4669 = vmatpush1.bf16.xpose.msra.mxu0 %v4666
        %4670 = vmatprep.subr.bf16.mxu0 0
        %4671 = vmatpush1.bf16.xpose.msra.mxu0 0
        %4672 = vmatprep.subr.bf16.mxu0 0
        %4673 = vmatpush1.bf16.xpose.msra.mxu0 0
        %4674 = vmatprep.subr.bf16.mxu0 0
        %4675 = vmatpush1.bf16.xpose.msra.mxu0 0
        %4676 = vmatprep.subr.bf16.mxu0 0
        %4677 = vmatpush1.bf16.xpose.msra.mxu0 0
        %4678 = vmatprep.subr.bf16.mxu0 0
        %4679 = vmatpush1.bf16.xpose.msra.mxu0 0
        %4680 = vmatprep.subr.bf16.mxu0 0
        %4681 = vmatpush1.bf16.xpose.msra.mxu0 0
        %4682 = vmatprep.subr.bf16.mxu0 0
        %4683 = vmatpush1.bf16.xpose.msra.mxu0 0
        %4684 = vmatprep.subr.bf16.mxu0 0
        %4685 = vmatpush1.bf16.xpose.msra.mxu0 0
        %4686 = vmatprep.subr.bf16.mxu0 0
        %4687 = vmatpush1.bf16.xpose.msra.mxu0 0
        %4688 = vmatprep.subr.bf16.mxu0 0
        %4689 = vmatpush1.bf16.xpose.msra.mxu0 0
        %4690 = vmatprep.subr.bf16.mxu0 0
        %4691 = vmatpush1.bf16.xpose.msra.mxu0 0
        %4692 = vmatprep.subr.bf16.mxu0 0
        %4693 = vmatpush1.bf16.xpose.msra.mxu0 0
        %4694 = vmatprep.subr.bf16.mxu0 0
        %4695 = vmatpush1.bf16.xpose.msra.mxu0 0
        %4696 = vmatprep.subr.bf16.mxu0 0
        %4697 = vmatpush1.bf16.xpose.msra.mxu0 0
        %4698 = vmatprep.subr.bf16.mxu0 0
        %4699 = vmatpush1.bf16.xpose.msra.mxu0 0
        %4700 = vmatprep.mubr.bf16.mxu0 0
        %4701 = vmatmul.mubr.bf16.gmra.mrb[0].mxu0 %v4663
        %v4702 = vpop.f32.mrb[0].mxu0
        %v4703 = vadd.f32 %v4554, %v4702
        %v4704 = vpop.f32.mrb[0].mxu0
        %v4705 = vpop.f32.mrb[0].mxu0
        %v4706 = vadd.f32 %v4555, %v4705
        %v4707 = vpop.f32.mrb[0].mxu0
        %4708 = vdwg.mxu0
        %4709 = vrot.lane.b32.xlu0 %v795, 32
        %v4710 = vpop.permute.xlu0 %4709
        %4711 = vrot.lane.b32.xlu0 %v803, 32
        %v4712 = vpop.permute.xlu0 %4711
        %v4714 = vsel %vm876, %v4710, 0
        %v4717 = vsel %vm876, %v4712, 0
        %4719 = vmatprep.subr.bf16.mxu0 0
        %4720 = vmatpush1.bf16.xpose.msra.mxu0 %v4717
        %4721 = vmatprep.subr.bf16.mxu0 0
        %4722 = vmatpush1.bf16.xpose.msra.mxu0 0
        %4723 = vmatprep.subr.bf16.mxu0 0
        %4724 = vmatpush1.bf16.xpose.msra.mxu0 0
        %4725 = vmatprep.subr.bf16.mxu0 0
        %4726 = vmatpush1.bf16.xpose.msra.mxu0 0
        %4727 = vmatprep.subr.bf16.mxu0 0
        %4728 = vmatpush1.bf16.xpose.msra.mxu0 0
        %4729 = vmatprep.subr.bf16.mxu0 0
        %4730 = vmatpush1.bf16.xpose.msra.mxu0 0
        %4731 = vmatprep.subr.bf16.mxu0 0
        %4732 = vmatpush1.bf16.xpose.msra.mxu0 0
        %4733 = vmatprep.subr.bf16.mxu0 0
        %4734 = vmatpush1.bf16.xpose.msra.mxu0 0
        %4735 = vmatprep.subr.bf16.mxu0 0
        %4736 = vmatpush1.bf16.xpose.msra.mxu0 0
        %4737 = vmatprep.subr.bf16.mxu0 0
        %4738 = vmatpush1.bf16.xpose.msra.mxu0 0
        %4739 = vmatprep.subr.bf16.mxu0 0
        %4740 = vmatpush1.bf16.xpose.msra.mxu0 0
        %4741 = vmatprep.subr.bf16.mxu0 0
        %4742 = vmatpush1.bf16.xpose.msra.mxu0 0
        %4743 = vmatprep.subr.bf16.mxu0 0
        %4744 = vmatpush1.bf16.xpose.msra.mxu0 0
        %4745 = vmatprep.subr.bf16.mxu0 0
        %4746 = vmatpush1.bf16.xpose.msra.mxu0 0
        %4747 = vmatprep.subr.bf16.mxu0 0
        %4748 = vmatpush1.bf16.xpose.msra.mxu0 0
        %4749 = vmatprep.subr.bf16.mxu0 0
        %4750 = vmatpush1.bf16.xpose.msra.mxu0 0
        %4751 = vmatprep.mubr.bf16.mxu0 0
        %4752 = vmatmul.mubr.bf16.gmra.mrb[0].mxu0 %v4714
        %v4753 = vpop.f32.mrb[0].mxu0
        %v4754 = vadd.f32 %v4554, %v4753
        %v4755 = vpop.f32.mrb[0].mxu0
        %v4756 = vpop.f32.mrb[0].mxu0
        %v4757 = vadd.f32 %v4555, %v4756
        %v4758 = vpop.f32.mrb[0].mxu0
        %4759 = vdwg.mxu0
        %4760 = vrot.lane.b32.xlu0 %v796, 32
        %v4761 = vpop.permute.xlu0 %4760
        %4762 = vrot.lane.b32.xlu0 %v804, 32
        %v4763 = vpop.permute.xlu0 %4762
        %v4765 = vsel %vm876, %v4761, 0
        %v4768 = vsel %vm876, %v4763, 0
        %4770 = vmatprep.subr.bf16.mxu0 0
        %4771 = vmatpush1.bf16.xpose.msra.mxu0 %v4768
        %4772 = vmatprep.subr.bf16.mxu0 0
        %4773 = vmatpush1.bf16.xpose.msra.mxu0 0
        %4774 = vmatprep.subr.bf16.mxu0 0
        %4775 = vmatpush1.bf16.xpose.msra.mxu0 0
        %4776 = vmatprep.subr.bf16.mxu0 0
        %4777 = vmatpush1.bf16.xpose.msra.mxu0 0
        %4778 = vmatprep.subr.bf16.mxu0 0
        %4779 = vmatpush1.bf16.xpose.msra.mxu0 0
        %4780 = vmatprep.subr.bf16.mxu0 0
        %4781 = vmatpush1.bf16.xpose.msra.mxu0 0
        %4782 = vmatprep.subr.bf16.mxu0 0
        %4783 = vmatpush1.bf16.xpose.msra.mxu0 0
        %4784 = vmatprep.subr.bf16.mxu0 0
        %4785 = vmatpush1.bf16.xpose.msra.mxu0 0
        %4786 = vmatprep.subr.bf16.mxu0 0
        %4787 = vmatpush1.bf16.xpose.msra.mxu0 0
        %4788 = vmatprep.subr.bf16.mxu0 0
        %4789 = vmatpush1.bf16.xpose.msra.mxu0 0
        %4790 = vmatprep.subr.bf16.mxu0 0
        %4791 = vmatpush1.bf16.xpose.msra.mxu0 0
        %4792 = vmatprep.subr.bf16.mxu0 0
        %4793 = vmatpush1.bf16.xpose.msra.mxu0 0
        %4794 = vmatprep.subr.bf16.mxu0 0
        %4795 = vmatpush1.bf16.xpose.msra.mxu0 0
        %4796 = vmatprep.subr.bf16.mxu0 0
        %4797 = vmatpush1.bf16.xpose.msra.mxu0 0
        %4798 = vmatprep.subr.bf16.mxu0 0
        %4799 = vmatpush1.bf16.xpose.msra.mxu0 0
        %4800 = vmatprep.subr.bf16.mxu0 0
        %4801 = vmatpush1.bf16.xpose.msra.mxu0 0
        %4802 = vmatprep.mubr.bf16.mxu0 0
        %4803 = vmatmul.mubr.bf16.gmra.mrb[0].mxu0 %v4765
        %v4804 = vpop.f32.mrb[0].mxu0
        %v4805 = vadd.f32 %v4554, %v4804
        %v4806 = vpop.f32.mrb[0].mxu0
        %v4807 = vpop.f32.mrb[0].mxu0
        %v4808 = vadd.f32 %v4555, %v4807
        %v4809 = vpop.f32.mrb[0].mxu0
        %4810 = vdwg.mxu0
        %4811 = vrot.lane.b32.xlu0 %v797, 32
        %v4812 = vpop.permute.xlu0 %4811
        %4813 = vrot.lane.b32.xlu0 %v805, 32
        %v4814 = vpop.permute.xlu0 %4813
        %v4816 = vsel %vm876, %v4812, 0
        %v4819 = vsel %vm876, %v4814, 0
        %4821 = vmatprep.subr.bf16.mxu0 0
        %4822 = vmatpush1.bf16.xpose.msra.mxu0 %v4819
        %4823 = vmatprep.subr.bf16.mxu0 0
        %4824 = vmatpush1.bf16.xpose.msra.mxu0 0
        %4825 = vmatprep.subr.bf16.mxu0 0
        %4826 = vmatpush1.bf16.xpose.msra.mxu0 0
        %4827 = vmatprep.subr.bf16.mxu0 0
        %4828 = vmatpush1.bf16.xpose.msra.mxu0 0
        %4829 = vmatprep.subr.bf16.mxu0 0
        %4830 = vmatpush1.bf16.xpose.msra.mxu0 0
        %4831 = vmatprep.subr.bf16.mxu0 0
        %4832 = vmatpush1.bf16.xpose.msra.mxu0 0
        %4833 = vmatprep.subr.bf16.mxu0 0
        %4834 = vmatpush1.bf16.xpose.msra.mxu0 0
        %4835 = vmatprep.subr.bf16.mxu0 0
        %4836 = vmatpush1.bf16.xpose.msra.mxu0 0
        %4837 = vmatprep.subr.bf16.mxu0 0
        %4838 = vmatpush1.bf16.xpose.msra.mxu0 0
        %4839 = vmatprep.subr.bf16.mxu0 0
        %4840 = vmatpush1.bf16.xpose.msra.mxu0 0
        %4841 = vmatprep.subr.bf16.mxu0 0
        %4842 = vmatpush1.bf16.xpose.msra.mxu0 0
        %4843 = vmatprep.subr.bf16.mxu0 0
        %4844 = vmatpush1.bf16.xpose.msra.mxu0 0
        %4845 = vmatprep.subr.bf16.mxu0 0
        %4846 = vmatpush1.bf16.xpose.msra.mxu0 0
        %4847 = vmatprep.subr.bf16.mxu0 0
        %4848 = vmatpush1.bf16.xpose.msra.mxu0 0
        %4849 = vmatprep.subr.bf16.mxu0 0
        %4850 = vmatpush1.bf16.xpose.msra.mxu0 0
        %4851 = vmatprep.subr.bf16.mxu0 0
        %4852 = vmatpush1.bf16.xpose.msra.mxu0 0
        %4853 = vmatprep.mubr.bf16.mxu0 0
        %4854 = vmatmul.mubr.bf16.gmra.mrb[0].mxu0 %v4816
        %v4855 = vpop.f32.mrb[0].mxu0
        %v4856 = vadd.f32 %v4554, %v4855
        %v4857 = vpop.f32.mrb[0].mxu0
        %v4858 = vpop.f32.mrb[0].mxu0
        %v4859 = vadd.f32 %v4555, %v4858
        %v4860 = vpop.f32.mrb[0].mxu0
        %4861 = vdwg.mxu0
        %4862 = vrot.lane.b32.xlu0 %v798, 32
        %v4863 = vpop.permute.xlu0 %4862
        %4864 = vrot.lane.b32.xlu0 %v806, 32
        %v4865 = vpop.permute.xlu0 %4864
        %v4867 = vsel %vm876, %v4863, 0
        %v4870 = vsel %vm876, %v4865, 0
        %4872 = vmatprep.subr.bf16.mxu0 0
        %4873 = vmatpush1.bf16.xpose.msra.mxu0 %v4870
        %4874 = vmatprep.subr.bf16.mxu0 0
        %4875 = vmatpush1.bf16.xpose.msra.mxu0 0
        %4876 = vmatprep.subr.bf16.mxu0 0
        %4877 = vmatpush1.bf16.xpose.msra.mxu0 0
        %4878 = vmatprep.subr.bf16.mxu0 0
        %4879 = vmatpush1.bf16.xpose.msra.mxu0 0
        %4880 = vmatprep.subr.bf16.mxu0 0
        %4881 = vmatpush1.bf16.xpose.msra.mxu0 0
        %4882 = vmatprep.subr.bf16.mxu0 0
        %4883 = vmatpush1.bf16.xpose.msra.mxu0 0
        %4884 = vmatprep.subr.bf16.mxu0 0
        %4885 = vmatpush1.bf16.xpose.msra.mxu0 0
        %4886 = vmatprep.subr.bf16.mxu0 0
        %4887 = vmatpush1.bf16.xpose.msra.mxu0 0
        %4888 = vmatprep.subr.bf16.mxu0 0
        %4889 = vmatpush1.bf16.xpose.msra.mxu0 0
        %4890 = vmatprep.subr.bf16.mxu0 0
        %4891 = vmatpush1.bf16.xpose.msra.mxu0 0
        %4892 = vmatprep.subr.bf16.mxu0 0
        %4893 = vmatpush1.bf16.xpose.msra.mxu0 0
        %4894 = vmatprep.subr.bf16.mxu0 0
        %4895 = vmatpush1.bf16.xpose.msra.mxu0 0
        %4896 = vmatprep.subr.bf16.mxu0 0
        %4897 = vmatpush1.bf16.xpose.msra.mxu0 0
        %4898 = vmatprep.subr.bf16.mxu0 0
        %4899 = vmatpush1.bf16.xpose.msra.mxu0 0
        %4900 = vmatprep.subr.bf16.mxu0 0
        %4901 = vmatpush1.bf16.xpose.msra.mxu0 0
        %4902 = vmatprep.subr.bf16.mxu0 0
        %4903 = vmatpush1.bf16.xpose.msra.mxu0 0
        %4904 = vmatprep.mubr.bf16.mxu0 0
        %4905 = vmatmul.mubr.bf16.gmra.mrb[0].mxu0 %v4867
        %v4906 = vpop.f32.mrb[0].mxu0
        %v4907 = vadd.f32 %v4554, %v4906
        %v4908 = vpop.f32.mrb[0].mxu0
        %v4909 = vpop.f32.mrb[0].mxu0
        %v4910 = vadd.f32 %v4555, %v4909
        %v4911 = vpop.f32.mrb[0].mxu0
        %4912 = vdwg.mxu0
        %4913 = vrot.lane.b32.xlu0 %v799, 32
        %v4914 = vpop.permute.xlu0 %4913
        %4915 = vrot.lane.b32.xlu0 %v807, 32
        %v4916 = vpop.permute.xlu0 %4915
        %v4918 = vsel %vm876, %v4914, 0
        %v4921 = vsel %vm876, %v4916, 0
        %4923 = vmatprep.subr.bf16.mxu0 0
        %4924 = vmatpush1.bf16.xpose.msra.mxu0 %v4921
        %4925 = vmatprep.subr.bf16.mxu0 0
        %4926 = vmatpush1.bf16.xpose.msra.mxu0 0
        %4927 = vmatprep.subr.bf16.mxu0 0
        %4928 = vmatpush1.bf16.xpose.msra.mxu0 0
        %4929 = vmatprep.subr.bf16.mxu0 0
        %4930 = vmatpush1.bf16.xpose.msra.mxu0 0
        %4931 = vmatprep.subr.bf16.mxu0 0
        %4932 = vmatpush1.bf16.xpose.msra.mxu0 0
        %4933 = vmatprep.subr.bf16.mxu0 0
        %4934 = vmatpush1.bf16.xpose.msra.mxu0 0
        %4935 = vmatprep.subr.bf16.mxu0 0
        %4936 = vmatpush1.bf16.xpose.msra.mxu0 0
        %4937 = vmatprep.subr.bf16.mxu0 0
        %4938 = vmatpush1.bf16.xpose.msra.mxu0 0
        %4939 = vmatprep.subr.bf16.mxu0 0
        %4940 = vmatpush1.bf16.xpose.msra.mxu0 0
        %4941 = vmatprep.subr.bf16.mxu0 0
        %4942 = vmatpush1.bf16.xpose.msra.mxu0 0
        %4943 = vmatprep.subr.bf16.mxu0 0
        %4944 = vmatpush1.bf16.xpose.msra.mxu0 0
        %4945 = vmatprep.subr.bf16.mxu0 0
        %4946 = vmatpush1.bf16.xpose.msra.mxu0 0
        %4947 = vmatprep.subr.bf16.mxu0 0
        %4948 = vmatpush1.bf16.xpose.msra.mxu0 0
        %4949 = vmatprep.subr.bf16.mxu0 0
        %4950 = vmatpush1.bf16.xpose.msra.mxu0 0
        %4951 = vmatprep.subr.bf16.mxu0 0
        %4952 = vmatpush1.bf16.xpose.msra.mxu0 0
        %4953 = vmatprep.subr.bf16.mxu0 0
        %4954 = vmatpush1.bf16.xpose.msra.mxu0 0
        %4955 = vmatprep.mubr.bf16.mxu0 0
        %4956 = vmatmul.mubr.bf16.gmra.mrb[0].mxu0 %v4918
        %v4957 = vpop.f32.mrb[0].mxu0
        %v4958 = vadd.f32 %v4554, %v4957
        %v4959 = vpop.f32.mrb[0].mxu0
        %v4960 = vpop.f32.mrb[0].mxu0
        %v4961 = vadd.f32 %v4555, %v4960
        %v4962 = vpop.f32.mrb[0].mxu0
        %4963 = vdwg.mxu0
        %v4964 = vadd.f32 %v4601, %v1256
        %v4965 = vadd.f32 %v4604, %v1256
        %v4966 = vadd.f32 %v4652, %v1260
        %v4967 = vadd.f32 %v4655, %v1260
        %v4968 = vadd.f32 %v4703, %v1264
        %v4969 = vadd.f32 %v4706, %v1264
        %v4970 = vadd.f32 %v4754, %v1268
        %v4971 = vadd.f32 %v4757, %v1268
        %v4972 = vadd.f32 %v4805, %v1272
        %v4973 = vadd.f32 %v4808, %v1272
        %v4974 = vadd.f32 %v4856, %v1276
        %v4975 = vadd.f32 %v4859, %v1276
        %v4976 = vadd.f32 %v4907, %v1280
        %v4977 = vadd.f32 %v4910, %v1280
        %v4978 = vadd.f32 %v4958, %v1284
        %v4979 = vadd.f32 %v4961, %v1284
        %v4980 = vsel %vm1301, %v4964, -inf
        %4981 = vmax.xlane.f32.xlu0 %v4980
        %v4982 = vpop.xlane.xlu0 %4981
        %v4983 = vsel %vm1301, %v4965, -inf
        %4984 = vmax.xlane.f32.xlu0 %v4983
        %v4985 = vpop.xlane.xlu0 %4984
        %v4986 = vsel %vm1301, %v4966, -inf
        %4987 = vmax.xlane.f32.xlu0 %v4986
        %v4988 = vpop.xlane.xlu0 %4987
        %v4989 = vsel %vm1301, %v4967, -inf
        %4990 = vmax.xlane.f32.xlu0 %v4989
        %v4991 = vpop.xlane.xlu0 %4990
        %v4992 = vsel %vm1301, %v4968, -inf
        %4993 = vmax.xlane.f32.xlu0 %v4992
        %v4994 = vpop.xlane.xlu0 %4993
        %v4995 = vsel %vm1301, %v4969, -inf
        %4996 = vmax.xlane.f32.xlu0 %v4995
        %v4997 = vpop.xlane.xlu0 %4996
        %v4998 = vsel %vm1301, %v4970, -inf
        %4999 = vmax.xlane.f32.xlu0 %v4998
        %v5000 = vpop.xlane.xlu0 %4999
        %v5001 = vsel %vm1301, %v4971, -inf
        %5002 = vmax.xlane.f32.xlu0 %v5001
        %v5003 = vpop.xlane.xlu0 %5002
        %v5004 = vsel %vm1301, %v4972, -inf
        %5005 = vmax.xlane.f32.xlu0 %v5004
        %v5006 = vpop.xlane.xlu0 %5005
        %v5007 = vsel %vm1301, %v4973, -inf
        %5008 = vmax.xlane.f32.xlu0 %v5007
        %v5009 = vpop.xlane.xlu0 %5008
        %v5010 = vsel %vm1301, %v4974, -inf
        %5011 = vmax.xlane.f32.xlu0 %v5010
        %v5012 = vpop.xlane.xlu0 %5011
        %v5013 = vsel %vm1301, %v4975, -inf
        %5014 = vmax.xlane.f32.xlu0 %v5013
        %v5015 = vpop.xlane.xlu0 %5014
        %v5016 = vsel %vm1301, %v4976, -inf
        %5017 = vmax.xlane.f32.xlu0 %v5016
        %v5018 = vpop.xlane.xlu0 %5017
        %v5019 = vsel %vm1301, %v4977, -inf
        %5020 = vmax.xlane.f32.xlu0 %v5019
        %v5021 = vpop.xlane.xlu0 %5020
        %v5022 = vsel %vm1301, %v4978, -inf
        %5023 = vmax.xlane.f32.xlu0 %v5022
        %v5024 = vpop.xlane.xlu0 %5023
        %v5025 = vsel %vm1301, %v4979, -inf
        %5026 = vmax.xlane.f32.xlu0 %v5025
        %v5027 = vpop.xlane.xlu0 %5026
        %v5028 = vsub.f32 %v4964, %v4982
        %v5029 = vsub.f32 %v4965, %v4985
        %v5030 = vsub.f32 %v4966, %v4988
        %v5031 = vsub.f32 %v4967, %v4991
        %v5032 = vsub.f32 %v4968, %v4994
        %v5033 = vsub.f32 %v4969, %v4997
        %v5034 = vsub.f32 %v4970, %v5000
        %v5035 = vsub.f32 %v4971, %v5003
        %v5036 = vsub.f32 %v4972, %v5006
        %v5037 = vsub.f32 %v4973, %v5009
        %v5038 = vsub.f32 %v4974, %v5012
        %v5039 = vsub.f32 %v4975, %v5015
        %v5040 = vsub.f32 %v4976, %v5018
        %v5041 = vsub.f32 %v4977, %v5021
        %v5042 = vsub.f32 %v4978, %v5024
        %v5043 = vsub.f32 %v4979, %v5027
        %v5044 = vmul.f32 %v5028, 1.442695
        %v5045 = vpow.pop %v5044
        %v5046 = vmul.f32 %v5029, 1.442695
        %v5047 = vpow.pop %v5046
        %v5048 = vmul.f32 %v5030, 1.442695
        %v5049 = vpow.pop %v5048
        %v5050 = vmul.f32 %v5031, 1.442695
        %v5051 = vpow.pop %v5050
        %v5052 = vmul.f32 %v5032, 1.442695
        %v5053 = vpow.pop %v5052
        %v5054 = vmul.f32 %v5033, 1.442695
        %v5055 = vpow.pop %v5054
        %v5056 = vmul.f32 %v5034, 1.442695
        %v5057 = vpow.pop %v5056
        %v5058 = vmul.f32 %v5035, 1.442695
        %v5059 = vpow.pop %v5058
        %v5060 = vmul.f32 %v5036, 1.442695
        %v5061 = vpow.pop %v5060
        %v5062 = vmul.f32 %v5037, 1.442695
        %v5063 = vpow.pop %v5062
        %v5064 = vmul.f32 %v5038, 1.442695
        %v5065 = vpow.pop %v5064
        %v5066 = vmul.f32 %v5039, 1.442695
        %v5067 = vpow.pop %v5066
        %v5068 = vmul.f32 %v5040, 1.442695
        %v5069 = vpow.pop %v5068
        %v5070 = vmul.f32 %v5041, 1.442695
        %v5071 = vpow.pop %v5070
        %v5072 = vmul.f32 %v5042, 1.442695
        %v5073 = vpow.pop %v5072
        %v5074 = vmul.f32 %v5043, 1.442695
        %v5075 = vpow.pop %v5074
        %v5076 = vsel %vm1301, %v5045, 0.0
        %5077 = vadd.xlane.f32.xlu0 %v5076
        %v5078 = vpop.xlane.xlu0 %5077
        %v5079 = vsel %vm1301, %v5047, 0.0
        %5080 = vadd.xlane.f32.xlu0 %v5079
        %v5081 = vpop.xlane.xlu0 %5080
        %v5082 = vsel %vm1301, %v5049, 0.0
        %5083 = vadd.xlane.f32.xlu0 %v5082
        %v5084 = vpop.xlane.xlu0 %5083
        %v5085 = vsel %vm1301, %v5051, 0.0
        %5086 = vadd.xlane.f32.xlu0 %v5085
        %v5087 = vpop.xlane.xlu0 %5086
        %v5088 = vsel %vm1301, %v5053, 0.0
        %5089 = vadd.xlane.f32.xlu0 %v5088
        %v5090 = vpop.xlane.xlu0 %5089
        %v5091 = vsel %vm1301, %v5055, 0.0
        %5092 = vadd.xlane.f32.xlu0 %v5091
        %v5093 = vpop.xlane.xlu0 %5092
        %v5094 = vsel %vm1301, %v5057, 0.0
        %5095 = vadd.xlane.f32.xlu0 %v5094
        %v5096 = vpop.xlane.xlu0 %5095
        %v5097 = vsel %vm1301, %v5059, 0.0
        %5098 = vadd.xlane.f32.xlu0 %v5097
        %v5099 = vpop.xlane.xlu0 %5098
        %v5100 = vsel %vm1301, %v5061, 0.0
        %5101 = vadd.xlane.f32.xlu0 %v5100
        %v5102 = vpop.xlane.xlu0 %5101
        %v5103 = vsel %vm1301, %v5063, 0.0
        %5104 = vadd.xlane.f32.xlu0 %v5103
        %v5105 = vpop.xlane.xlu0 %5104
        %v5106 = vsel %vm1301, %v5065, 0.0
        %5107 = vadd.xlane.f32.xlu0 %v5106
        %v5108 = vpop.xlane.xlu0 %5107
        %v5109 = vsel %vm1301, %v5067, 0.0
        %5110 = vadd.xlane.f32.xlu0 %v5109
        %v5111 = vpop.xlane.xlu0 %5110
        %v5112 = vsel %vm1301, %v5069, 0.0
        %5113 = vadd.xlane.f32.xlu0 %v5112
        %v5114 = vpop.xlane.xlu0 %5113
        %v5115 = vsel %vm1301, %v5071, 0.0
        %5116 = vadd.xlane.f32.xlu0 %v5115
        %v5117 = vpop.xlane.xlu0 %5116
        %v5118 = vsel %vm1301, %v5073, 0.0
        %5119 = vadd.xlane.f32.xlu0 %v5118
        %v5120 = vpop.xlane.xlu0 %5119
        %v5121 = vsel %vm1301, %v5075, 0.0
        %5122 = vadd.xlane.f32.xlu0 %v5121
        %v5123 = vpop.xlane.xlu0 %5122
        %v5124 = vpack.c.bf16 %v5047, %v5045
        %v5125 = vpack.c.bf16 %v5051, %v5049
        %v5126 = vpack.c.bf16 %v5055, %v5053
        %v5127 = vpack.c.bf16 %v5059, %v5057
        %v5128 = vpack.c.bf16 %v5063, %v5061
        %v5129 = vpack.c.bf16 %v5067, %v5065
        %v5130 = vpack.c.bf16 %v5071, %v5069
        %v5131 = vpack.c.bf16 %v5075, %v5073
        %5132 = vrot.lane.b32.xlu0 %v808, 32
        %v5133 = vpop.permute.xlu0 %5132
        %v5136 = vsel %vm1301, %v5124, 0
        %5138 = vmatprep.subr.bf16.mxu0 0
        %5139 = vmatpush1.bf16.msra.mxu0 %v5133
        %5140 = vmatprep.subr.bf16.mxu0 0
        %5141 = vmatpush1.bf16.msra.mxu0 0
        %5142 = vmatprep.subr.bf16.mxu0 0
        %5143 = vmatpush1.bf16.msra.mxu0 0
        %5144 = vmatprep.subr.bf16.mxu0 0
        %5145 = vmatpush1.bf16.msra.mxu0 0
        %5146 = vmatprep.subr.bf16.mxu0 0
        %5147 = vmatpush1.bf16.msra.mxu0 0
        %5148 = vmatprep.subr.bf16.mxu0 0
        %5149 = vmatpush1.bf16.msra.mxu0 0
        %5150 = vmatprep.subr.bf16.mxu0 0
        %5151 = vmatpush1.bf16.msra.mxu0 0
        %5152 = vmatprep.subr.bf16.mxu0 0
        %5153 = vmatpush1.bf16.msra.mxu0 0
        %5154 = vmatprep.subr.bf16.mxu0 0
        %5155 = vmatpush1.bf16.msra.mxu0 0
        %5156 = vmatprep.subr.bf16.mxu0 0
        %5157 = vmatpush1.bf16.msra.mxu0 0
        %5158 = vmatprep.subr.bf16.mxu0 0
        %5159 = vmatpush1.bf16.msra.mxu0 0
        %5160 = vmatprep.subr.bf16.mxu0 0
        %5161 = vmatpush1.bf16.msra.mxu0 0
        %5162 = vmatprep.subr.bf16.mxu0 0
        %5163 = vmatpush1.bf16.msra.mxu0 0
        %5164 = vmatprep.subr.bf16.mxu0 0
        %5165 = vmatpush1.bf16.msra.mxu0 0
        %5166 = vmatprep.subr.bf16.mxu0 0
        %5167 = vmatpush1.bf16.msra.mxu0 0
        %5168 = vmatprep.subr.bf16.mxu0 0
        %5169 = vmatpush1.bf16.msra.mxu0 0
        %5170 = vmatprep.mubr.bf16.mxu0 0
        %5171 = vmatmul.mubr.bf16.gmra.mrb[0].mxu0 %v5136
        %v5172 = vpop.f32.mrb[0].mxu0
        %v5173 = vadd.f32 0.0, %v5172
        %v5174 = vpop.f32.mrb[0].mxu0
        %v5175 = vpop.f32.mrb[0].mxu0
        %v5176 = vadd.f32 0.0, %v5175
        %v5177 = vpop.f32.mrb[0].mxu0
        %5178 = vdwg.mxu0
        %5179 = vrot.lane.b32.xlu0 %v809, 32
        %v5180 = vpop.permute.xlu0 %5179
        %v5183 = vsel %vm1301, %v5125, 0
        %5185 = vmatprep.subr.bf16.mxu0 0
        %5186 = vmatpush1.bf16.msra.mxu0 %v5180
        %5187 = vmatprep.subr.bf16.mxu0 0
        %5188 = vmatpush1.bf16.msra.mxu0 0
        %5189 = vmatprep.subr.bf16.mxu0 0
        %5190 = vmatpush1.bf16.msra.mxu0 0
        %5191 = vmatprep.subr.bf16.mxu0 0
        %5192 = vmatpush1.bf16.msra.mxu0 0
        %5193 = vmatprep.subr.bf16.mxu0 0
        %5194 = vmatpush1.bf16.msra.mxu0 0
        %5195 = vmatprep.subr.bf16.mxu0 0
        %5196 = vmatpush1.bf16.msra.mxu0 0
        %5197 = vmatprep.subr.bf16.mxu0 0
        %5198 = vmatpush1.bf16.msra.mxu0 0
        %5199 = vmatprep.subr.bf16.mxu0 0
        %5200 = vmatpush1.bf16.msra.mxu0 0
        %5201 = vmatprep.subr.bf16.mxu0 0
        %5202 = vmatpush1.bf16.msra.mxu0 0
        %5203 = vmatprep.subr.bf16.mxu0 0
        %5204 = vmatpush1.bf16.msra.mxu0 0
        %5205 = vmatprep.subr.bf16.mxu0 0
        %5206 = vmatpush1.bf16.msra.mxu0 0
        %5207 = vmatprep.subr.bf16.mxu0 0
        %5208 = vmatpush1.bf16.msra.mxu0 0
        %5209 = vmatprep.subr.bf16.mxu0 0
        %5210 = vmatpush1.bf16.msra.mxu0 0
        %5211 = vmatprep.subr.bf16.mxu0 0
        %5212 = vmatpush1.bf16.msra.mxu0 0
        %5213 = vmatprep.subr.bf16.mxu0 0
        %5214 = vmatpush1.bf16.msra.mxu0 0
        %5215 = vmatprep.subr.bf16.mxu0 0
        %5216 = vmatpush1.bf16.msra.mxu0 0
        %5217 = vmatprep.mubr.bf16.mxu0 0
        %5218 = vmatmul.mubr.bf16.gmra.mrb[0].mxu0 %v5183
        %v5219 = vpop.f32.mrb[0].mxu0
        %v5220 = vadd.f32 0.0, %v5219
        %v5221 = vpop.f32.mrb[0].mxu0
        %v5222 = vpop.f32.mrb[0].mxu0
        %v5223 = vadd.f32 0.0, %v5222
        %v5224 = vpop.f32.mrb[0].mxu0
        %5225 = vdwg.mxu0
        %5226 = vrot.lane.b32.xlu0 %v810, 32
        %v5227 = vpop.permute.xlu0 %5226
        %v5230 = vsel %vm1301, %v5126, 0
        %5232 = vmatprep.subr.bf16.mxu0 0
        %5233 = vmatpush1.bf16.msra.mxu0 %v5227
        %5234 = vmatprep.subr.bf16.mxu0 0
        %5235 = vmatpush1.bf16.msra.mxu0 0
        %5236 = vmatprep.subr.bf16.mxu0 0
        %5237 = vmatpush1.bf16.msra.mxu0 0
        %5238 = vmatprep.subr.bf16.mxu0 0
        %5239 = vmatpush1.bf16.msra.mxu0 0
        %5240 = vmatprep.subr.bf16.mxu0 0
        %5241 = vmatpush1.bf16.msra.mxu0 0
        %5242 = vmatprep.subr.bf16.mxu0 0
        %5243 = vmatpush1.bf16.msra.mxu0 0
        %5244 = vmatprep.subr.bf16.mxu0 0
        %5245 = vmatpush1.bf16.msra.mxu0 0
        %5246 = vmatprep.subr.bf16.mxu0 0
        %5247 = vmatpush1.bf16.msra.mxu0 0
        %5248 = vmatprep.subr.bf16.mxu0 0
        %5249 = vmatpush1.bf16.msra.mxu0 0
        %5250 = vmatprep.subr.bf16.mxu0 0
        %5251 = vmatpush1.bf16.msra.mxu0 0
        %5252 = vmatprep.subr.bf16.mxu0 0
        %5253 = vmatpush1.bf16.msra.mxu0 0
        %5254 = vmatprep.subr.bf16.mxu0 0
        %5255 = vmatpush1.bf16.msra.mxu0 0
        %5256 = vmatprep.subr.bf16.mxu0 0
        %5257 = vmatpush1.bf16.msra.mxu0 0
        %5258 = vmatprep.subr.bf16.mxu0 0
        %5259 = vmatpush1.bf16.msra.mxu0 0
        %5260 = vmatprep.subr.bf16.mxu0 0
        %5261 = vmatpush1.bf16.msra.mxu0 0
        %5262 = vmatprep.subr.bf16.mxu0 0
        %5263 = vmatpush1.bf16.msra.mxu0 0
        %5264 = vmatprep.mubr.bf16.mxu0 0
        %5265 = vmatmul.mubr.bf16.gmra.mrb[0].mxu0 %v5230
        %v5266 = vpop.f32.mrb[0].mxu0
        %v5267 = vadd.f32 0.0, %v5266
        %v5268 = vpop.f32.mrb[0].mxu0
        %v5269 = vpop.f32.mrb[0].mxu0
        %v5270 = vadd.f32 0.0, %v5269
        %v5271 = vpop.f32.mrb[0].mxu0
        %5272 = vdwg.mxu0
        %5273 = vrot.lane.b32.xlu0 %v811, 32
        %v5274 = vpop.permute.xlu0 %5273
        %v5277 = vsel %vm1301, %v5127, 0
        %5279 = vmatprep.subr.bf16.mxu0 0
        %5280 = vmatpush1.bf16.msra.mxu0 %v5274
        %5281 = vmatprep.subr.bf16.mxu0 0
        %5282 = vmatpush1.bf16.msra.mxu0 0
        %5283 = vmatprep.subr.bf16.mxu0 0
        %5284 = vmatpush1.bf16.msra.mxu0 0
        %5285 = vmatprep.subr.bf16.mxu0 0
        %5286 = vmatpush1.bf16.msra.mxu0 0
        %5287 = vmatprep.subr.bf16.mxu0 0
        %5288 = vmatpush1.bf16.msra.mxu0 0
        %5289 = vmatprep.subr.bf16.mxu0 0
        %5290 = vmatpush1.bf16.msra.mxu0 0
        %5291 = vmatprep.subr.bf16.mxu0 0
        %5292 = vmatpush1.bf16.msra.mxu0 0
        %5293 = vmatprep.subr.bf16.mxu0 0
        %5294 = vmatpush1.bf16.msra.mxu0 0
        %5295 = vmatprep.subr.bf16.mxu0 0
        %5296 = vmatpush1.bf16.msra.mxu0 0
        %5297 = vmatprep.subr.bf16.mxu0 0
        %5298 = vmatpush1.bf16.msra.mxu0 0
        %5299 = vmatprep.subr.bf16.mxu0 0
        %5300 = vmatpush1.bf16.msra.mxu0 0
        %5301 = vmatprep.subr.bf16.mxu0 0
        %5302 = vmatpush1.bf16.msra.mxu0 0
        %5303 = vmatprep.subr.bf16.mxu0 0
        %5304 = vmatpush1.bf16.msra.mxu0 0
        %5305 = vmatprep.subr.bf16.mxu0 0
        %5306 = vmatpush1.bf16.msra.mxu0 0
        %5307 = vmatprep.subr.bf16.mxu0 0
        %5308 = vmatpush1.bf16.msra.mxu0 0
        %5309 = vmatprep.subr.bf16.mxu0 0
        %5310 = vmatpush1.bf16.msra.mxu0 0
        %5311 = vmatprep.mubr.bf16.mxu0 0
        %5312 = vmatmul.mubr.bf16.gmra.mrb[0].mxu0 %v5277
        %v5313 = vpop.f32.mrb[0].mxu0
        %v5314 = vadd.f32 0.0, %v5313
        %v5315 = vpop.f32.mrb[0].mxu0
        %v5316 = vpop.f32.mrb[0].mxu0
        %v5317 = vadd.f32 0.0, %v5316
        %v5318 = vpop.f32.mrb[0].mxu0
        %5319 = vdwg.mxu0
        %5320 = vrot.lane.b32.xlu0 %v812, 32
        %v5321 = vpop.permute.xlu0 %5320
        %v5324 = vsel %vm1301, %v5128, 0
        %5326 = vmatprep.subr.bf16.mxu0 0
        %5327 = vmatpush1.bf16.msra.mxu0 %v5321
        %5328 = vmatprep.subr.bf16.mxu0 0
        %5329 = vmatpush1.bf16.msra.mxu0 0
        %5330 = vmatprep.subr.bf16.mxu0 0
        %5331 = vmatpush1.bf16.msra.mxu0 0
        %5332 = vmatprep.subr.bf16.mxu0 0
        %5333 = vmatpush1.bf16.msra.mxu0 0
        %5334 = vmatprep.subr.bf16.mxu0 0
        %5335 = vmatpush1.bf16.msra.mxu0 0
        %5336 = vmatprep.subr.bf16.mxu0 0
        %5337 = vmatpush1.bf16.msra.mxu0 0
        %5338 = vmatprep.subr.bf16.mxu0 0
        %5339 = vmatpush1.bf16.msra.mxu0 0
        %5340 = vmatprep.subr.bf16.mxu0 0
        %5341 = vmatpush1.bf16.msra.mxu0 0
        %5342 = vmatprep.subr.bf16.mxu0 0
        %5343 = vmatpush1.bf16.msra.mxu0 0
        %5344 = vmatprep.subr.bf16.mxu0 0
        %5345 = vmatpush1.bf16.msra.mxu0 0
        %5346 = vmatprep.subr.bf16.mxu0 0
        %5347 = vmatpush1.bf16.msra.mxu0 0
        %5348 = vmatprep.subr.bf16.mxu0 0
        %5349 = vmatpush1.bf16.msra.mxu0 0
        %5350 = vmatprep.subr.bf16.mxu0 0
        %5351 = vmatpush1.bf16.msra.mxu0 0
        %5352 = vmatprep.subr.bf16.mxu0 0
        %5353 = vmatpush1.bf16.msra.mxu0 0
        %5354 = vmatprep.subr.bf16.mxu0 0
        %5355 = vmatpush1.bf16.msra.mxu0 0
        %5356 = vmatprep.subr.bf16.mxu0 0
        %5357 = vmatpush1.bf16.msra.mxu0 0
        %5358 = vmatprep.mubr.bf16.mxu0 0
        %5359 = vmatmul.mubr.bf16.gmra.mrb[0].mxu0 %v5324
        %v5360 = vpop.f32.mrb[0].mxu0
        %v5361 = vadd.f32 0.0, %v5360
        %v5362 = vpop.f32.mrb[0].mxu0
        %v5363 = vpop.f32.mrb[0].mxu0
        %v5364 = vadd.f32 0.0, %v5363
        %v5365 = vpop.f32.mrb[0].mxu0
        %5366 = vdwg.mxu0
        %5367 = vrot.lane.b32.xlu0 %v813, 32
        %v5368 = vpop.permute.xlu0 %5367
        %v5371 = vsel %vm1301, %v5129, 0
        %5373 = vmatprep.subr.bf16.mxu0 0
        %5374 = vmatpush1.bf16.msra.mxu0 %v5368
        %5375 = vmatprep.subr.bf16.mxu0 0
        %5376 = vmatpush1.bf16.msra.mxu0 0
        %5377 = vmatprep.subr.bf16.mxu0 0
        %5378 = vmatpush1.bf16.msra.mxu0 0
        %5379 = vmatprep.subr.bf16.mxu0 0
        %5380 = vmatpush1.bf16.msra.mxu0 0
        %5381 = vmatprep.subr.bf16.mxu0 0
        %5382 = vmatpush1.bf16.msra.mxu0 0
        %5383 = vmatprep.subr.bf16.mxu0 0
        %5384 = vmatpush1.bf16.msra.mxu0 0
        %5385 = vmatprep.subr.bf16.mxu0 0
        %5386 = vmatpush1.bf16.msra.mxu0 0
        %5387 = vmatprep.subr.bf16.mxu0 0
        %5388 = vmatpush1.bf16.msra.mxu0 0
        %5389 = vmatprep.subr.bf16.mxu0 0
        %5390 = vmatpush1.bf16.msra.mxu0 0
        %5391 = vmatprep.subr.bf16.mxu0 0
        %5392 = vmatpush1.bf16.msra.mxu0 0
        %5393 = vmatprep.subr.bf16.mxu0 0
        %5394 = vmatpush1.bf16.msra.mxu0 0
        %5395 = vmatprep.subr.bf16.mxu0 0
        %5396 = vmatpush1.bf16.msra.mxu0 0
        %5397 = vmatprep.subr.bf16.mxu0 0
        %5398 = vmatpush1.bf16.msra.mxu0 0
        %5399 = vmatprep.subr.bf16.mxu0 0
        %5400 = vmatpush1.bf16.msra.mxu0 0
        %5401 = vmatprep.subr.bf16.mxu0 0
        %5402 = vmatpush1.bf16.msra.mxu0 0
        %5403 = vmatprep.subr.bf16.mxu0 0
        %5404 = vmatpush1.bf16.msra.mxu0 0
        %5405 = vmatprep.mubr.bf16.mxu0 0
        %5406 = vmatmul.mubr.bf16.gmra.mrb[0].mxu0 %v5371
        %v5407 = vpop.f32.mrb[0].mxu0
        %v5408 = vadd.f32 0.0, %v5407
        %v5409 = vpop.f32.mrb[0].mxu0
        %v5410 = vpop.f32.mrb[0].mxu0
        %v5411 = vadd.f32 0.0, %v5410
        %v5412 = vpop.f32.mrb[0].mxu0
        %5413 = vdwg.mxu0
        %5414 = vrot.lane.b32.xlu0 %v814, 32
        %v5415 = vpop.permute.xlu0 %5414
        %v5418 = vsel %vm1301, %v5130, 0
        %5420 = vmatprep.subr.bf16.mxu0 0
        %5421 = vmatpush1.bf16.msra.mxu0 %v5415
        %5422 = vmatprep.subr.bf16.mxu0 0
        %5423 = vmatpush1.bf16.msra.mxu0 0
        %5424 = vmatprep.subr.bf16.mxu0 0
        %5425 = vmatpush1.bf16.msra.mxu0 0
        %5426 = vmatprep.subr.bf16.mxu0 0
        %5427 = vmatpush1.bf16.msra.mxu0 0
        %5428 = vmatprep.subr.bf16.mxu0 0
        %5429 = vmatpush1.bf16.msra.mxu0 0
        %5430 = vmatprep.subr.bf16.mxu0 0
        %5431 = vmatpush1.bf16.msra.mxu0 0
        %5432 = vmatprep.subr.bf16.mxu0 0
        %5433 = vmatpush1.bf16.msra.mxu0 0
        %5434 = vmatprep.subr.bf16.mxu0 0
        %5435 = vmatpush1.bf16.msra.mxu0 0
        %5436 = vmatprep.subr.bf16.mxu0 0
        %5437 = vmatpush1.bf16.msra.mxu0 0
        %5438 = vmatprep.subr.bf16.mxu0 0
        %5439 = vmatpush1.bf16.msra.mxu0 0
        %5440 = vmatprep.subr.bf16.mxu0 0
        %5441 = vmatpush1.bf16.msra.mxu0 0
        %5442 = vmatprep.subr.bf16.mxu0 0
        %5443 = vmatpush1.bf16.msra.mxu0 0
        %5444 = vmatprep.subr.bf16.mxu0 0
        %5445 = vmatpush1.bf16.msra.mxu0 0
        %5446 = vmatprep.subr.bf16.mxu0 0
        %5447 = vmatpush1.bf16.msra.mxu0 0
        %5448 = vmatprep.subr.bf16.mxu0 0
        %5449 = vmatpush1.bf16.msra.mxu0 0
        %5450 = vmatprep.subr.bf16.mxu0 0
        %5451 = vmatpush1.bf16.msra.mxu0 0
        %5452 = vmatprep.mubr.bf16.mxu0 0
        %5453 = vmatmul.mubr.bf16.gmra.mrb[0].mxu0 %v5418
        %v5454 = vpop.f32.mrb[0].mxu0
        %v5455 = vadd.f32 0.0, %v5454
        %v5456 = vpop.f32.mrb[0].mxu0
        %v5457 = vpop.f32.mrb[0].mxu0
        %v5458 = vadd.f32 0.0, %v5457
        %v5459 = vpop.f32.mrb[0].mxu0
        %5460 = vdwg.mxu0
        %5461 = vrot.lane.b32.xlu0 %v815, 32
        %v5462 = vpop.permute.xlu0 %5461
        %v5465 = vsel %vm1301, %v5131, 0
        %5467 = vmatprep.subr.bf16.mxu0 0
        %5468 = vmatpush1.bf16.msra.mxu0 %v5462
        %5469 = vmatprep.subr.bf16.mxu0 0
        %5470 = vmatpush1.bf16.msra.mxu0 0
        %5471 = vmatprep.subr.bf16.mxu0 0
        %5472 = vmatpush1.bf16.msra.mxu0 0
        %5473 = vmatprep.subr.bf16.mxu0 0
        %5474 = vmatpush1.bf16.msra.mxu0 0
        %5475 = vmatprep.subr.bf16.mxu0 0
        %5476 = vmatpush1.bf16.msra.mxu0 0
        %5477 = vmatprep.subr.bf16.mxu0 0
        %5478 = vmatpush1.bf16.msra.mxu0 0
        %5479 = vmatprep.subr.bf16.mxu0 0
        %5480 = vmatpush1.bf16.msra.mxu0 0
        %5481 = vmatprep.subr.bf16.mxu0 0
        %5482 = vmatpush1.bf16.msra.mxu0 0
        %5483 = vmatprep.subr.bf16.mxu0 0
        %5484 = vmatpush1.bf16.msra.mxu0 0
        %5485 = vmatprep.subr.bf16.mxu0 0
        %5486 = vmatpush1.bf16.msra.mxu0 0
        %5487 = vmatprep.subr.bf16.mxu0 0
        %5488 = vmatpush1.bf16.msra.mxu0 0
        %5489 = vmatprep.subr.bf16.mxu0 0
        %5490 = vmatpush1.bf16.msra.mxu0 0
        %5491 = vmatprep.subr.bf16.mxu0 0
        %5492 = vmatpush1.bf16.msra.mxu0 0
        %5493 = vmatprep.subr.bf16.mxu0 0
        %5494 = vmatpush1.bf16.msra.mxu0 0
        %5495 = vmatprep.subr.bf16.mxu0 0
        %5496 = vmatpush1.bf16.msra.mxu0 0
        %5497 = vmatprep.subr.bf16.mxu0 0
        %5498 = vmatpush1.bf16.msra.mxu0 0
        %5499 = vmatprep.mubr.bf16.mxu0 0
        %5500 = vmatmul.mubr.bf16.gmra.mrb[0].mxu0 %v5465
        %v5501 = vpop.f32.mrb[0].mxu0
        %v5502 = vadd.f32 0.0, %v5501
        %v5503 = vpop.f32.mrb[0].mxu0
        %v5504 = vpop.f32.mrb[0].mxu0
        %v5505 = vadd.f32 0.0, %v5504
        %v5506 = vpop.f32.mrb[0].mxu0
        %5507 = vdwg.mxu0
        %v5508 = vrcp.pop %v5078
        %v5509 = vrcp.pop %v5081
        %v5510 = vrcp.pop %v5084
        %v5511 = vrcp.pop %v5087
        %v5512 = vrcp.pop %v5090
        %v5513 = vrcp.pop %v5093
        %v5514 = vrcp.pop %v5096
        %v5515 = vrcp.pop %v5099
        %v5516 = vrcp.pop %v5102
        %v5517 = vrcp.pop %v5105
        %v5518 = vrcp.pop %v5108
        %v5519 = vrcp.pop %v5111
        %v5520 = vrcp.pop %v5114
        %v5521 = vrcp.pop %v5117
        %v5522 = vrcp.pop %v5120
        %v5523 = vrcp.pop %v5123
        %v5524 = vmul.f32 %v5173, %v5508
        %v5525 = vmul.f32 %v5176, %v5509
        %v5526 = vmul.f32 %v5220, %v5510
        %v5527 = vmul.f32 %v5223, %v5511
        %v5528 = vmul.f32 %v5267, %v5512
        %v5529 = vmul.f32 %v5270, %v5513
        %v5530 = vmul.f32 %v5314, %v5514
        %v5531 = vmul.f32 %v5317, %v5515
        %v5532 = vmul.f32 %v5361, %v5516
        %v5533 = vmul.f32 %v5364, %v5517
        %v5534 = vmul.f32 %v5408, %v5518
        %v5535 = vmul.f32 %v5411, %v5519
        %v5536 = vmul.f32 %v5455, %v5520
        %v5537 = vmul.f32 %v5458, %v5521
        %v5538 = vmul.f32 %v5502, %v5522
        %v5539 = vmul.f32 %v5505, %v5523
        %5540 = vrot.lane.b32.xlu0 %v1903, 32
        %v5541 = vpop.permute.xlu0 %5540
        %5542 = vrot.lane.b32.xlu0 %v1905, 32
        %v5543 = vpop.permute.xlu0 %5542
        %5544 = vrot.lane.b32.xlu0 %v1907, 32
        %v5545 = vpop.permute.xlu0 %5544
        %5546 = vrot.lane.b32.xlu0 %v1909, 32
        %v5547 = vpop.permute.xlu0 %5546
        %5548 = vrot.lane.b32.xlu0 %v1911, 32
        %v5549 = vpop.permute.xlu0 %5548
        %5550 = vrot.lane.b32.xlu0 %v1913, 32
        %v5551 = vpop.permute.xlu0 %5550
        %5552 = vrot.lane.b32.xlu0 %v1915, 32
        %v5553 = vpop.permute.xlu0 %5552
        %5554 = vrot.lane.b32.xlu0 %v1917, 32
        %v5555 = vpop.permute.xlu0 %5554
        %5556 = vrot.lane.b32.xlu0 %v1919, 32
        %v5557 = vpop.permute.xlu0 %5556
        %5558 = vrot.lane.b32.xlu0 %v1921, 32
        %v5559 = vpop.permute.xlu0 %5558
        %5560 = vrot.lane.b32.xlu0 %v1923, 32
        %v5561 = vpop.permute.xlu0 %5560
        %5562 = vrot.lane.b32.xlu0 %v1925, 32
        %v5563 = vpop.permute.xlu0 %5562
        %5564 = vrot.lane.b32.xlu0 %v1927, 32
        %v5565 = vpop.permute.xlu0 %5564
        %5566 = vrot.lane.b32.xlu0 %v1929, 32
        %v5567 = vpop.permute.xlu0 %5566
        %5568 = vrot.lane.b32.xlu0 %v1931, 32
        %v5569 = vpop.permute.xlu0 %5568
        %5570 = vrot.lane.b32.xlu0 %v1933, 32
        %v5571 = vpop.permute.xlu0 %5570
        %v5588 = vmul.f32 %v5524, %v5541
        %v5589 = vmul.f32 %v5525, %v5543
        %v5590 = vmul.f32 %v5526, %v5545
        %v5591 = vmul.f32 %v5527, %v5547
        %v5592 = vmul.f32 %v5528, %v5549
        %v5593 = vmul.f32 %v5529, %v5551
        %v5594 = vmul.f32 %v5530, %v5553
        %v5595 = vmul.f32 %v5531, %v5555
        %v5596 = vmul.f32 %v5532, %v5557
        %v5597 = vmul.f32 %v5533, %v5559
        %v5598 = vmul.f32 %v5534, %v5561
        %v5599 = vmul.f32 %v5535, %v5563
        %v5600 = vmul.f32 %v5536, %v5565
        %v5601 = vmul.f32 %v5537, %v5567
        %v5602 = vmul.f32 %v5538, %v5569
        %v5603 = vmul.f32 %v5539, %v5571
        %v5604 = vpack.c.bf16 %v5589, %v5588
        %v5605 = vpack.c.bf16 %v5591, %v5590
        %v5606 = vpack.c.bf16 %v5593, %v5592
        %v5607 = vpack.c.bf16 %v5595, %v5594
        %v5608 = vpack.c.bf16 %v5597, %v5596
        %v5609 = vpack.c.bf16 %v5599, %v5598
        %v5610 = vpack.c.bf16 %v5601, %v5600
        %v5611 = vpack.c.bf16 %v5603, %v5602
        %v5616 = vunpack.c.l.b16 %v868
        %v5617 = vunpack.c.l.b16 %v869
        %v5618 = vunpack.c.l.b16 %v870
        %v5619 = vunpack.c.l.b16 %v871
        %v5620 = vpack.c.b16 %v5617, %v5616
        %v5621 = vpack.c.b16 %v5619, %v5618
        %v5625 = vsel %vm876, %v5604, 0
        %v5628 = vsel %vm876, %v5605, 0
        %v5631 = vsel %vm876, %v5606, 0
        %v5634 = vsel %vm876, %v5607, 0
        %v5637 = vsel %vm876, %v5608, 0
        %v5640 = vsel %vm876, %v5609, 0
        %v5643 = vsel %vm876, %v5610, 0
        %v5646 = vsel %vm876, %v5611, 0
        %5648 = vmatprep.subr.bf16.mxu0 0
        %5649 = vmatpush1.bf16.msra.mxu0 %v5620
        %5650 = vmatprep.subr.bf16.mxu0 0
        %5651 = vmatpush1.bf16.msra.mxu0 %v5621
        %5652 = vmatprep.subr.bf16.mxu0 0
        %5653 = vmatpush1.bf16.msra.mxu0 0
        %5654 = vmatprep.subr.bf16.mxu0 0
        %5655 = vmatpush1.bf16.msra.mxu0 0
        %5656 = vmatprep.subr.bf16.mxu0 0
        %5657 = vmatpush1.bf16.msra.mxu0 0
        %5658 = vmatprep.subr.bf16.mxu0 0
        %5659 = vmatpush1.bf16.msra.mxu0 0
        %5660 = vmatprep.subr.bf16.mxu0 0
        %5661 = vmatpush1.bf16.msra.mxu0 0
        %5662 = vmatprep.subr.bf16.mxu0 0
        %5663 = vmatpush1.bf16.msra.mxu0 0
        %5664 = vmatprep.subr.bf16.mxu0 0
        %5665 = vmatpush1.bf16.msra.mxu0 0
        %5666 = vmatprep.subr.bf16.mxu0 0
        %5667 = vmatpush1.bf16.msra.mxu0 0
        %5668 = vmatprep.subr.bf16.mxu0 0
        %5669 = vmatpush1.bf16.msra.mxu0 0
        %5670 = vmatprep.subr.bf16.mxu0 0
        %5671 = vmatpush1.bf16.msra.mxu0 0
        %5672 = vmatprep.subr.bf16.mxu0 0
        %5673 = vmatpush1.bf16.msra.mxu0 0
        %5674 = vmatprep.subr.bf16.mxu0 0
        %5675 = vmatpush1.bf16.msra.mxu0 0
        %5676 = vmatprep.subr.bf16.mxu0 0
        %5677 = vmatpush1.bf16.msra.mxu0 0
        %5678 = vmatprep.subr.bf16.mxu0 0
        %5679 = vmatpush1.bf16.msra.mxu0 0
        %5680 = vmatprep.mubr.bf16.mxu0 0
        %5681 = vmatmul.mubr.bf16.gmra.mrb[0].mxu0 %v5625
        %v5682 = vpop.f32.mrb[0].mxu0
        %v5683 = vadd.f32 0.0, %v5682
        %v5684 = vpop.f32.mrb[0].mxu0
        %v5685 = vpop.f32.mrb[0].mxu0
        %v5686 = vadd.f32 0.0, %v5685
        %v5687 = vpop.f32.mrb[0].mxu0
        %5688 = vmatprep.mubr.bf16.mxu0 0
        %5689 = vmatmul.mubr.bf16.gmra.mrb[0].mxu0 %v5628
        %v5690 = vpop.f32.mrb[0].mxu0
        %v5691 = vadd.f32 0.0, %v5690
        %v5692 = vpop.f32.mrb[0].mxu0
        %v5693 = vpop.f32.mrb[0].mxu0
        %v5694 = vadd.f32 0.0, %v5693
        %v5695 = vpop.f32.mrb[0].mxu0
        %5696 = vmatprep.mubr.bf16.mxu0 0
        %5697 = vmatmul.mubr.bf16.gmra.mrb[0].mxu0 %v5631
        %v5698 = vpop.f32.mrb[0].mxu0
        %v5699 = vadd.f32 0.0, %v5698
        %v5700 = vpop.f32.mrb[0].mxu0
        %v5701 = vpop.f32.mrb[0].mxu0
        %v5702 = vadd.f32 0.0, %v5701
        %v5703 = vpop.f32.mrb[0].mxu0
        %5704 = vmatprep.mubr.bf16.mxu0 0
        %5705 = vmatmul.mubr.bf16.gmra.mrb[0].mxu0 %v5634
        %v5706 = vpop.f32.mrb[0].mxu0
        %v5707 = vadd.f32 0.0, %v5706
        %v5708 = vpop.f32.mrb[0].mxu0
        %v5709 = vpop.f32.mrb[0].mxu0
        %v5710 = vadd.f32 0.0, %v5709
        %v5711 = vpop.f32.mrb[0].mxu0
        %5712 = vmatprep.mubr.bf16.mxu0 0
        %5713 = vmatmul.mubr.bf16.gmra.mrb[0].mxu0 %v5637
        %v5714 = vpop.f32.mrb[0].mxu0
        %v5715 = vadd.f32 0.0, %v5714
        %v5716 = vpop.f32.mrb[0].mxu0
        %v5717 = vpop.f32.mrb[0].mxu0
        %v5718 = vadd.f32 0.0, %v5717
        %v5719 = vpop.f32.mrb[0].mxu0
        %5720 = vmatprep.mubr.bf16.mxu0 0
        %5721 = vmatmul.mubr.bf16.gmra.mrb[0].mxu0 %v5640
        %v5722 = vpop.f32.mrb[0].mxu0
        %v5723 = vadd.f32 0.0, %v5722
        %v5724 = vpop.f32.mrb[0].mxu0
        %v5725 = vpop.f32.mrb[0].mxu0
        %v5726 = vadd.f32 0.0, %v5725
        %v5727 = vpop.f32.mrb[0].mxu0
        %5728 = vmatprep.mubr.bf16.mxu0 0
        %5729 = vmatmul.mubr.bf16.gmra.mrb[0].mxu0 %v5643
        %v5730 = vpop.f32.mrb[0].mxu0
        %v5731 = vadd.f32 0.0, %v5730
        %v5732 = vpop.f32.mrb[0].mxu0
        %v5733 = vpop.f32.mrb[0].mxu0
        %v5734 = vadd.f32 0.0, %v5733
        %v5735 = vpop.f32.mrb[0].mxu0
        %5736 = vmatprep.mubr.bf16.mxu0 0
        %5737 = vmatmul.mubr.bf16.gmra.mrb[0].mxu0 %v5646
        %v5738 = vpop.f32.mrb[0].mxu0
        %v5739 = vadd.f32 0.0, %v5738
        %v5740 = vpop.f32.mrb[0].mxu0
        %v5741 = vpop.f32.mrb[0].mxu0
        %v5742 = vadd.f32 0.0, %v5741
        %v5743 = vpop.f32.mrb[0].mxu0
        %5744 = vdwg.mxu0
        %v5745 = vadd.f32 %v4535, %v5683
        %v5746 = vadd.f32 %v4536, %v5686
        %v5747 = vadd.f32 %v4537, %v5691
        %v5748 = vadd.f32 %v4538, %v5694
        %v5749 = vadd.f32 %v4539, %v5699
        %v5750 = vadd.f32 %v4540, %v5702
        %v5751 = vadd.f32 %v4541, %v5707
        %v5752 = vadd.f32 %v4542, %v5710
        %v5753 = vadd.f32 %v4543, %v5715
        %v5754 = vadd.f32 %v4544, %v5718
        %v5755 = vadd.f32 %v4545, %v5723
        %v5756 = vadd.f32 %v4546, %v5726
        %v5757 = vadd.f32 %v4547, %v5731
        %v5758 = vadd.f32 %v4548, %v5734
        %v5759 = vadd.f32 %v4549, %v5739
        %v5760 = vadd.f32 %v4550, %v5742
        %v5761 = vpack.c.bf16 %v5746, %v5745
        %v5762 = vpack.c.bf16 %v5748, %v5747
        %v5763 = vpack.c.bf16 %v5750, %v5749
        %v5764 = vpack.c.bf16 %v5752, %v5751
        %v5765 = vpack.c.bf16 %v5754, %v5753
        %v5766 = vpack.c.bf16 %v5756, %v5755
        %v5767 = vpack.c.bf16 %v5758, %v5757
        %v5768 = vpack.c.bf16 %v5760, %v5759
        %v5777 = vunpack.c.l.b16 %v5761
        %v5778 = vunpack.c.h.b16 %v5761
        %v5779 = vunpack.c.l.b16 %v5762
        %v5780 = vunpack.c.h.b16 %v5762
        %v5781 = vunpack.c.l.b16 %v5763
        %v5782 = vunpack.c.h.b16 %v5763
        %v5783 = vunpack.c.l.b16 %v5764
        %v5784 = vunpack.c.h.b16 %v5764
        %v5785 = vunpack.c.l.b16 %v5765
        %v5786 = vunpack.c.h.b16 %v5765
        %v5787 = vunpack.c.l.b16 %v5766
        %v5788 = vunpack.c.h.b16 %v5766
        %v5789 = vunpack.c.l.b16 %v5767
        %v5790 = vunpack.c.h.b16 %v5767
        %v5791 = vunpack.c.l.b16 %v5768
        %v5792 = vunpack.c.h.b16 %v5768
        %v5793 = vpack.c.b16 %v5777, %v5777
        %v5794 = vpack.c.b16 %v5778, %v5778
        %v5795 = vpack.c.b16 %v5779, %v5779
        %v5796 = vpack.c.b16 %v5780, %v5780
        %v5797 = vpack.c.b16 %v5781, %v5781
        %v5798 = vpack.c.b16 %v5782, %v5782
        %v5799 = vpack.c.b16 %v5783, %v5783
        %v5800 = vpack.c.b16 %v5784, %v5784
        %v5801 = vpack.c.b16 %v5785, %v5785
        %v5802 = vpack.c.b16 %v5786, %v5786
        %v5803 = vpack.c.b16 %v5787, %v5787
        %v5804 = vpack.c.b16 %v5788, %v5788
        %v5805 = vpack.c.b16 %v5789, %v5789
        %v5806 = vpack.c.b16 %v5790, %v5790
        %v5807 = vpack.c.b16 %v5791, %v5791
        %v5808 = vpack.c.b16 %v5792, %v5792
        %5825 = vst [vmem:[%s301] sm:$0xf] %v5793
        %5826 = vst [vmem:[%s301 + $0x4] sm:$0xf] %v5794
        %5827 = vst [vmem:[%s301 + $0x8] sm:$0xf] %v5795
        %5828 = vst [vmem:[%s301 + $0xc] sm:$0xf] %v5796
        %5829 = vst [vmem:[%s301 + $0x10] sm:$0xf] %v5797
        %5830 = vst [vmem:[%s301 + $0x14] sm:$0xf] %v5798
        %5831 = vst [vmem:[%s301 + $0x18] sm:$0xf] %v5799
        %5832 = vst [vmem:[%s301 + $0x1c] sm:$0xf] %v5800
        %5833 = vst [vmem:[%s301 + $0x20] sm:$0xf] %v5801
        %5834 = vst [vmem:[%s301 + $0x24] sm:$0xf] %v5802
        %5835 = vst [vmem:[%s301 + $0x28] sm:$0xf] %v5803
        %5836 = vst [vmem:[%s301 + $0x2c] sm:$0xf] %v5804
        %5837 = vst [vmem:[%s301 + $0x30] sm:$0xf] %v5805
        %5838 = vst [vmem:[%s301 + $0x34] sm:$0xf] %v5806
        %5839 = vst [vmem:[%s301 + $0x38] sm:$0xf] %v5807
        %5840 = vst [vmem:[%s301 + $0x3c] sm:$0xf] %v5808
        %s5841 = sand.u32 %s147, 1
        %s5842 = scalar_lea.sflag [#allocation4], %s5841
        %s5843 = sand.u32 %s147, 1
        %s5844 = smul.addr %s5843, 64
        %s5845 = scalar_lea.vmem [#allocation10], %s5844
        // Predicated region
        $region57: #{tpu_custom_call.1} parent=39 // pred_check
          %p5846 = pneg %p157
        $region58: #{tpu_custom_call.1} parent=39 // pred_check_branch
          %5848 = sbr.rel (%p5846) target = $region60
        $region59: #{tpu_custom_call.1} parent=39 // pred_region
          %s5849 = smul.u32 8, %s24
          %s5851 = ssub.s32 1024, 1024
          %5852 = vsyncadd %s5842, %s5851
          %s5853 = smul.addr %s5849, 2
          %s5854 = smul.addr %s5853, 64
          %s5855 = scalar_lea.hbm %s5, %s5854
          %s5856 = sshll.u32 %s5845, 4
          %s5857 = int_to_ptr.vmem [resolvable:$true] %s5856
          %5862 = dma.vmem_to_hbm [thread:$0]  %s5857, 1024, %s5855, %s5842, 64, 64, 4
        $region60: #{tpu_custom_call.1} parent=39 // pred_fallthru
          _
      $region40: #{tpu_custom_call.1} parent=5 // pred_fallthru
        _
      %p5863 = scmp.le.s32.totalorder 2, %s19
      // Predicated region
      $region61: #{tpu_custom_call.1} parent=5 // pred_check
        %p5864 = pneg %p5863
      $region62: #{tpu_custom_call.1} parent=5 // pred_check_branch
        %5866 = sbr.rel (%p5864) target = $region64
      $region63: #{tpu_custom_call.1} parent=5 // pred_region
        %s5867 = ssub.s32 %s19, 2
        // Predicated region
        $region65: #{tpu_custom_call.1} parent=63 // pred_check
          %p5868 = pneg %p163
        $region66: #{tpu_custom_call.1} parent=63 // pred_check_branch
          %5870 = sbr.rel (%p5868) target = $region68
        $region67: #{tpu_custom_call.1} parent=63 // pred_region
          %s5871 = sand.u32 %s148, 1
          %s5872 = scalar_lea.sflag [#allocation4], %s5871
          %s5873 = sand.u32 %s148, 1
          %s5874 = smul.addr %s5873, 64
          %s5875 = scalar_lea.vmem [#allocation10], %s5874
          %5876 = dma.done %s5872, 1024
        $region68: #{tpu_custom_call.1} parent=63 // pred_fallthru
          _
      $region64: #{tpu_custom_call.1} parent=5 // pred_fallthru
        _
    $region6: #{tpu_custom_call.1} parent=1 // loop_footer
      %s23 = sadd.s32 1, %s19
    $region7: #{tpu_custom_call.1} parent=1 // loop_footer_branch
      %18 = sbr.rel target = $region3
    $region8: #{tpu_custom_call.1} parent=1 // loop_exit
      _
    %5877 = vsyncpa [#allocation3], 1
    %s5878 = scalar_lea.sflag [#allocation3], 1
    %5879 = vsyncpa %s5878, 1
    %5880 = vsyncpa [#allocation6], 1
    %5881 = vsyncpa [#allocation9], 1
    %5882 = vsyncpa [#allocation4], 1
    %s5883 = scalar_lea.sflag [#allocation4], 1
    %5884 = vsyncpa %s5883, 1

</llo_original>
